<compile_context>
chip_gen: v6e
topology: v6e:2x2x1
jax: 0.10.0
libtpu: 0.0.40
codegen_flags: <defaults>
</compile_context>

<pallas_src>
import functools

import jax
import jax.numpy as jnp
import numpy as np
from jax.experimental import pallas as pl
from jax.experimental.pallas import tpu as pltpu

LANES = 128  # lane width of every slab / weight matrix (zero padded)


def _fused_stack_kernel(x_ref,
                        w1_ref, g1_ref, t1_ref, gb1_ref,
                        w2_ref, g2_ref, t2_ref, gb2_ref,
                        w3_ref, g3_ref, t3_ref, gb3_ref,
                        o_ref, act1_ref, act2_ref,
                        *, n_batch, hp, dims, eps):
    """Three fused Conv2d(valid, stride 1) + BN(train fwd) + ReLU layers.

    Activation layout: one (N*HP, 128) slab, rows = batch*height (each sample
    padded to HP rows), lanes = width*channels zero-padded to 128.
    Conv = sum over kh of  slab[kh : kh+N*HP] @ Toeplitz(128, 128).
    """
    m = n_batch * hp  # rows of conv output computed per layer (batch folded)

    def conv_bn_relu(src_ref, w_ref, g_ref, t_ref, gb_ref, dst_ref, ldims):
        kh_taps, oh, ow, cout = ldims
        inv_cnt = 1.0 / float(n_batch * oh * ow)

        # --- Conv: one lane-dense MXU matmul per kernel-row tap, batch folded
        # into M.  z stays in vregs (never stored pre-BN).
        z = jnp.zeros((m, LANES), jnp.float32)
        for kh in range(kh_taps):
            z = z + jnp.dot(src_ref[kh:kh + m, :], w_ref[kh],
                            preferred_element_type=jnp.float32)

        # --- BN batch stats.  Rows with (row mod HP) >= OH are per-sample
        # padding and may contain arbitrary garbage (stale scratch / cross-
        # sample reads); jnp.where keeps them out of the sums.  Pad lanes of z
        # are exactly zero (zero Toeplitz columns), so real OW/OH counts give
        # exact means.
        row = jax.lax.broadcasted_iota(jnp.int32, (m, LANES), 0)
        valid = (row % hp) < oh
        zv = jnp.where(valid, z, 0.0)
        rsum = jnp.sum(zv, axis=0, keepdims=True)        # (1, 128)
        qsum = jnp.sum(zv * zv, axis=0, keepdims=True)   # (1, 128)

        # Per-channel reduce of the interleaved (w, c) lane groups and the
        # broadcast back are tiny 0/1 matmuls on the otherwise-idle MXU.
        s_ch = jnp.dot(rsum, g_ref[...], preferred_element_type=jnp.float32)
        q_ch = jnp.dot(qsum, g_ref[...], preferred_element_type=jnp.float32)
        mean = s_ch * inv_cnt
        var = q_ch * inv_cnt - mean * mean               # biased, train-mode BN
        scale = gb_ref[0:1, :] * jax.lax.rsqrt(var + eps)   # gamma * inv_std
        shift = gb_ref[1:2, :] - mean * scale               # beta - mean*scale
        scale_b = jnp.dot(scale, t_ref[...], preferred_element_type=jnp.float32)
        shift_b = jnp.dot(shift, t_ref[...], preferred_element_type=jnp.float32)

        # --- Fused affine + ReLU, written to the destination slab exactly once
        # (128-lane dense store, no masked vst).
        dst_ref[0:m, :] = jnp.maximum(z * scale_b + shift_b, 0.0)

    conv_bn_relu(x_ref, w1_ref, g1_ref, t1_ref, gb1_ref, act1_ref, dims[0])
    conv_bn_relu(act1_ref, w2_ref, g2_ref, t2_ref, gb2_ref, act2_ref, dims[1])
    conv_bn_relu(act2_ref, w3_ref, g3_ref, t3_ref, gb3_ref, o_ref, dims[2])


def _build_layer_prep(w_oihw, gamma, beta, h_in, w_in):
    """One-time (hoisted) per-layer parameter preparation (128-lane padded)."""
    w = np.asarray(w_oihw, dtype=np.float32)          # (Cout, Cin, KH, KW)
    cout, cin, kh_taps, kw_taps = w.shape
    oh, ow = h_in - kh_taps + 1, w_in - kw_taps + 1
    assert w_in * cin <= LANES and ow * cout <= LANES, "needs lane tiling"

    # Toeplitz-structured weight per kh: (128, 128).  Rows = input lanes
    # (wi*Cin + ci, zero rows for pad lanes), cols = output lanes
    # (owi*Cout + co, zero cols for pad lanes) so that
    #   slab[kh : kh+M] @ wb[kh]  ==  conv contribution of kernel row kh.
    wb = np.zeros((kh_taps, LANES, LANES), np.float32)
    for kh in range(kh_taps):
        for owi in range(ow):
            for kw in range(kw_taps):
                r0 = (owi + kw) * cin
                wb[kh, r0:r0 + cin, owi * cout:(owi + 1) * cout] = w[:, :, kh, kw].T

    # Channel-reduce matrix (128, 128): lane (owi*Cout + c) -> channel c,
    # zero rows/cols for pad lanes / pad channels.  Transpose = broadcast.
    g = np.zeros((LANES, LANES), np.float32)
    for owi in range(ow):
        for c in range(cout):
            g[owi * cout + c, c] = 1.0

    gb = np.zeros((2, LANES), np.float32)
    gb[0, :cout] = np.asarray(gamma, np.float32)
    gb[1, :cout] = np.asarray(beta, np.float32)

    return dict(
        w=jnp.asarray(wb),
        g=jnp.asarray(g),
        gt=jnp.asarray(np.ascontiguousarray(g.T)),
        gb=jnp.asarray(gb),
        dims=(kh_taps, oh, ow, cout),
        out_hw=(oh, ow),
    )


def prepare_stack_params(params, h0, w0):
    """Hoisted prep for all three layers. `params`: [(w, b, gamma, beta), ...]."""
    layers = []
    h, w = h0, w0
    for (wgt, _bias, gamma, beta) in params:   # bias cancels under training BN
        prep = _build_layer_prep(wgt, gamma, beta, h, w)
        layers.append(prep)
        h, w = prep["out_hw"]
    return layers


def stack_layer_forward(x_nchw, layers, *, eps=1e-5):
    """Forward pass of the 3x (Conv+BN+ReLU) stack with one fused Pallas call."""
    n, c0, h0, w0 = x_nchw.shape
    hp = ((h0 + 7) // 8) * 8          # per-sample padded height (sublane mult)
    m = n * hp                        # folded batch*height rows per slab
    max_tap = max(l["dims"][0] for l in layers) - 1
    rows_in = m + max(8, ((max_tap + 7) // 8) * 8)   # slack for kh-shifted taps

    dims = tuple(l["dims"] for l in layers)
    (_, oh3, ow3, c3) = dims[2]

    # NCHW -> lane-dense (N*HP rows, 128 lanes) slab (interface glue; if this
    # feeds other lane-dense kernels, keep the slab layout end-to-end and only
    # convert at model boundaries).
    x2d = jnp.transpose(x_nchw, (0, 2, 3, 1)).reshape(n, h0, w0 * c0)
    x2d = jnp.pad(x2d, ((0, 0), (0, hp - h0), (0, LANES - w0 * c0)))
    x_slab = jnp.pad(x2d.reshape(m, LANES), ((0, rows_in - m), (0, 0)))

    def spec2(shape):
        return pl.BlockSpec(shape, lambda i: (0, 0))

    def spec3(shape):
        return pl.BlockSpec(shape, lambda i: (0, 0, 0))

    operands = [x_slab]
    in_specs = [spec2(x_slab.shape)]
    for layer in layers:
        operands += [layer["w"], layer["g"], layer["gt"], layer["gb"]]
        in_specs += [spec3(layer["w"].shape), spec2(layer["g"].shape),
                     spec2(layer["gt"].shape), spec2(layer["gb"].shape)]

    kern = functools.partial(_fused_stack_kernel, n_batch=n, hp=hp,
                             dims=dims, eps=eps)

    out_slab = pl.pallas_call(
        kern,
        out_shape=jax.ShapeDtypeStruct((m, LANES), jnp.float32),
        grid=(1,),
        in_specs=in_specs,
        out_specs=spec2((m, LANES)),
        scratch_shapes=[
            pltpu.VMEM((rows_in, LANES), jnp.float32),   # layer-1 activations
            pltpu.VMEM((rows_in, LANES), jnp.float32),   # layer-2 activations
        ],
        compiler_params=pltpu.CompilerParams(
            dimension_semantics=("arbitrary",),
            vmem_limit_bytes=8 * 1024 * 1024),
    )(*operands)

    # (N*HP, 128) slab -> NCHW (slice off row / lane padding).
    out = out_slab.reshape(n, hp, LANES)[:, :oh3, :ow3 * c3]
    return jnp.transpose(out.reshape(n, oh3, ow3, c3), (0, 3, 1, 2))


def init_stack_layer_params(key, inchannel, outchannel, k1, k2):
    """Deterministic parameter init mirroring the module's shapes."""
    params = []
    cin = inchannel
    for _ in range(3):
        key, kw_, kb_, kg_, kbt = jax.random.split(key, 5)
        fan_in = cin * k1 * k2
        bound = 1.0 / np.sqrt(fan_in)
        w = jax.random.uniform(kw_, (outchannel, cin, k1, k2), jnp.float32,
                               -bound, bound)
        b = jax.random.uniform(kb_, (outchannel,), jnp.float32, -bound, bound)
        gamma = 1.0 + 0.1 * jax.random.normal(kg_, (outchannel,), jnp.float32)
        beta = 0.1 * jax.random.normal(kbt, (outchannel,), jnp.float32)
        params.append((w, b, gamma, beta))
        cin = outchannel
    return params


def _reference_forward(x_nchw, params, eps=1e-5):
    """Pure-JAX reference (training-mode BN) for correctness check."""
    x = x_nchw
    for (w, b, gamma, beta) in params:
        z = jax.lax.conv_general_dilated(
            x, w, window_strides=(1, 1), padding="VALID",
            dimension_numbers=("NCHW", "OIHW", "NCHW"))
        z = z + b[None, :, None, None]
        mean = jnp.mean(z, axis=(0, 2, 3), keepdims=True)
        var = jnp.mean((z - mean) ** 2, axis=(0, 2, 3), keepdims=True)
        y = (z - mean) * jax.lax.rsqrt(var + eps)
        y = y * gamma[None, :, None, None] + beta[None, :, None, None]
        x = jnp.maximum(y, 0.0)
    return x


if __name__ == "__main__":
    inchannel, outchannel, k1, k2 = 4, 8, 3, 3
    N, H, W = 2, 16, 16

    key = jax.random.PRNGKey(0)
    key, kx = jax.random.split(key)
    x = jax.random.normal(kx, (N, inchannel, H, W), jnp.float32)   # NCHW

    params = init_stack_layer_params(key, inchannel, outchannel, k1, k2)
    layers = prepare_stack_params(params, H, W)   # one-time prep (hoisted)

    out = stack_layer_forward(x, layers)
    out = jax.block_until_ready(out)

    # sanity: shape after three valid 3x3 convs: 16 -> 14 -> 12 -> 10
    assert out.shape == (N, outchannel, 10, 10), out.shape

    ref = jax.block_until_ready(_reference_forward(x, params))
    np.testing.assert_allclose(np.asarray(out), np.asarray(ref),
                               rtol=5e-3, atol=5e-3)

    print("KERNEL_OK")
</pallas_src>

<mosaic_0001>
module attributes {stable_mosaic.version = 11 : i64} {
  func.func @_fused_stack_kernel(%arg0: i32, %arg1: memref<40x128xf32, #tpu.memory_space<vmem>>, %arg2: memref<3x128x128xf32, #tpu.memory_space<vmem>>, %arg3: memref<128x128xf32, #tpu.memory_space<vmem>>, %arg4: memref<128x128xf32, #tpu.memory_space<vmem>>, %arg5: memref<2x128xf32, #tpu.memory_space<vmem>>, %arg6: memref<3x128x128xf32, #tpu.memory_space<vmem>>, %arg7: memref<128x128xf32, #tpu.memory_space<vmem>>, %arg8: memref<128x128xf32, #tpu.memory_space<vmem>>, %arg9: memref<2x128xf32, #tpu.memory_space<vmem>>, %arg10: memref<3x128x128xf32, #tpu.memory_space<vmem>>, %arg11: memref<128x128xf32, #tpu.memory_space<vmem>>, %arg12: memref<128x128xf32, #tpu.memory_space<vmem>>, %arg13: memref<2x128xf32, #tpu.memory_space<vmem>>, %arg14: memref<32x128xf32, #tpu.memory_space<vmem>>, %arg15: memref<40x128xf32, #tpu.memory_space<vmem>>, %arg16: memref<40x128xf32, #tpu.memory_space<vmem>>) attributes {dimension_semantics = [#tpu.dimension_semantics<arbitrary>], iteration_bounds = array<i64: 1>, scalar_prefetch = 0 : i64, scratch_operands = 2 : i64, tpu.core_type = #tpu.core_type<tc>, window_params = [{pipeline_mode = #tpu.pipeline_mode<synchronous>, transform_indices = @transform_0, window_bounds = array<i64: 40, 128>}, {pipeline_mode = #tpu.pipeline_mode<synchronous>, transform_indices = @transform_1, window_bounds = array<i64: 3, 128, 128>}, {pipeline_mode = #tpu.pipeline_mode<synchronous>, transform_indices = @transform_2, window_bounds = array<i64: 128, 128>}, {pipeline_mode = #tpu.pipeline_mode<synchronous>, transform_indices = @transform_3, window_bounds = array<i64: 128, 128>}, {pipeline_mode = #tpu.pipeline_mode<synchronous>, transform_indices = @transform_4, window_bounds = array<i64: 2, 128>}, {pipeline_mode = #tpu.pipeline_mode<synchronous>, transform_indices = @transform_5, window_bounds = array<i64: 3, 128, 128>}, {pipeline_mode = #tpu.pipeline_mode<synchronous>, transform_indices = @transform_6, window_bounds = array<i64: 128, 128>}, {pipeline_mode = #tpu.pipeline_mode<synchronous>, transform_indices = @transform_7, window_bounds = array<i64: 128, 128>}, {pipeline_mode = #tpu.pipeline_mode<synchronous>, transform_indices = @transform_8, window_bounds = array<i64: 2, 128>}, {pipeline_mode = #tpu.pipeline_mode<synchronous>, transform_indices = @transform_9, window_bounds = array<i64: 3, 128, 128>}, {pipeline_mode = #tpu.pipeline_mode<synchronous>, transform_indices = @transform_10, window_bounds = array<i64: 128, 128>}, {pipeline_mode = #tpu.pipeline_mode<synchronous>, transform_indices = @transform_11, window_bounds = array<i64: 128, 128>}, {pipeline_mode = #tpu.pipeline_mode<synchronous>, transform_indices = @transform_12, window_bounds = array<i64: 2, 128>}, {pipeline_mode = #tpu.pipeline_mode<synchronous>, transform_indices = @transform_13, window_bounds = array<i64: 32, 128>}]} {
    %cst = arith.constant 0.000000e+00 : f32
    %0 = vector.broadcast %cst : f32 to vector<32x128xf32>
    %c0 = arith.constant 0 : index
    %c0_0 = arith.constant 0 : index
    %1 = vector.load %arg1[%c0, %c0_0] : memref<40x128xf32, #tpu.memory_space<vmem>>, vector<32x128xf32>
    %c0_1 = arith.constant 0 : index
    %c0_2 = arith.constant 0 : index
    %c0_3 = arith.constant 0 : index
    %2 = vector.load %arg2[%c0_1, %c0_2, %c0_3] : memref<3x128x128xf32, #tpu.memory_space<vmem>>, vector<1x128x128xf32>
    %3 = vector.shape_cast %2 : vector<1x128x128xf32> to vector<128x128xf32>
    %cst_4 = arith.constant dense<0.000000e+00> : vector<32x128xf32>
    %4 = tpu.matmul %1, %3, %cst_4 {dimension_numbers = #tpu.dot_dimension_numbers<[1], [0], [0], [1], [0, 0, 1, 1], [], []>} : vector<32x128xf32>, vector<128x128xf32>, vector<32x128xf32> -> vector<32x128xf32>
    %5 = arith.addf %0, %4 : vector<32x128xf32>
    %c1 = arith.constant 1 : index
    %c0_5 = arith.constant 0 : index
    %6 = vector.load %arg1[%c1, %c0_5] : memref<40x128xf32, #tpu.memory_space<vmem>>, vector<32x128xf32>
    %c1_6 = arith.constant 1 : index
    %c0_7 = arith.constant 0 : index
    %c0_8 = arith.constant 0 : index
    %7 = vector.load %arg2[%c1_6, %c0_7, %c0_8] : memref<3x128x128xf32, #tpu.memory_space<vmem>>, vector<1x128x128xf32>
    %8 = vector.shape_cast %7 : vector<1x128x128xf32> to vector<128x128xf32>
    %cst_9 = arith.constant dense<0.000000e+00> : vector<32x128xf32>
    %9 = tpu.matmul %6, %8, %cst_9 {dimension_numbers = #tpu.dot_dimension_numbers<[1], [0], [0], [1], [0, 0, 1, 1], [], []>} : vector<32x128xf32>, vector<128x128xf32>, vector<32x128xf32> -> vector<32x128xf32>
    %10 = arith.addf %5, %9 : vector<32x128xf32>
    %c2 = arith.constant 2 : index
    %c0_10 = arith.constant 0 : index
    %11 = vector.load %arg1[%c2, %c0_10] : memref<40x128xf32, #tpu.memory_space<vmem>>, vector<32x128xf32>
    %c2_11 = arith.constant 2 : index
    %c0_12 = arith.constant 0 : index
    %c0_13 = arith.constant 0 : index
    %12 = vector.load %arg2[%c2_11, %c0_12, %c0_13] : memref<3x128x128xf32, #tpu.memory_space<vmem>>, vector<1x128x128xf32>
    %13 = vector.shape_cast %12 : vector<1x128x128xf32> to vector<128x128xf32>
    %cst_14 = arith.constant dense<0.000000e+00> : vector<32x128xf32>
    %14 = tpu.matmul %11, %13, %cst_14 {dimension_numbers = #tpu.dot_dimension_numbers<[1], [0], [0], [1], [0, 0, 1, 1], [], []>} : vector<32x128xf32>, vector<128x128xf32>, vector<32x128xf32> -> vector<32x128xf32>
    %15 = arith.addf %10, %14 : vector<32x128xf32>
    %16 = tpu.iota {dimensions = array<i32: 0>} : vector<32x128xi32>
    %c16_i32 = arith.constant 16 : i32
    %c0_i32 = arith.constant 0 : i32
    %17 = arith.cmpi eq, %c16_i32, %c0_i32 : i32
    %c1_i32 = arith.constant 1 : i32
    %18 = arith.select %17, %c1_i32, %c16_i32 : i32
    %19 = vector.broadcast %18 : i32 to vector<32x128xi32>
    %20 = arith.remsi %16, %19 : vector<32x128xi32>
    %c0_i32_15 = arith.constant 0 : i32
    %21 = vector.broadcast %c0_i32_15 : i32 to vector<32x128xi32>
    %22 = arith.cmpi ne, %20, %21 : vector<32x128xi32>
    %c0_i32_16 = arith.constant 0 : i32
    %23 = vector.broadcast %c0_i32_16 : i32 to vector<32x128xi32>
    %24 = arith.cmpi slt, %20, %23 : vector<32x128xi32>
    %c0_i32_17 = arith.constant 0 : i32
    %25 = arith.cmpi slt, %18, %c0_i32_17 : i32
    %26 = vector.broadcast %25 : i1 to vector<32x128xi1>
    %27 = vector.broadcast %26 : vector<32x128xi1> to vector<32x128xi1>
    %28 = arith.xori %24, %27 : vector<32x128xi1>
    %29 = arith.andi %28, %22 : vector<32x128xi1>
    %30 = vector.broadcast %18 : i32 to vector<32x128xi32>
    %31 = arith.addi %20, %30 : vector<32x128xi32>
    %32 = arith.select %29, %31, %20 : vector<32x128xi1>, vector<32x128xi32>
    %c14_i32 = arith.constant 14 : i32
    %33 = vector.broadcast %c14_i32 : i32 to vector<32x128xi32>
    %34 = arith.cmpi slt, %32, %33 : vector<32x128xi32>
    %cst_18 = arith.constant 0.000000e+00 : f32
    %35 = vector.broadcast %cst_18 : f32 to vector<32x128xf32>
    %36 = arith.select %34, %15, %35 : vector<32x128xi1>, vector<32x128xf32>
    %cst_19 = arith.constant dense<0.000000e+00> : vector<128xf32>
    %37 = vector.multi_reduction <add>, %36, %cst_19 [0] : vector<32x128xf32> to vector<128xf32>
    %38 = vector.shape_cast %37 : vector<128xf32> to vector<1x128xf32>
    %39 = arith.mulf %36, %36 : vector<32x128xf32>
    %cst_20 = arith.constant dense<0.000000e+00> : vector<128xf32>
    %40 = vector.multi_reduction <add>, %39, %cst_20 [0] : vector<32x128xf32> to vector<128xf32>
    %41 = vector.shape_cast %40 : vector<128xf32> to vector<1x128xf32>
    %c0_21 = arith.constant 0 : index
    %c0_22 = arith.constant 0 : index
    %42 = vector.load %arg3[%c0_21, %c0_22] : memref<128x128xf32, #tpu.memory_space<vmem>>, vector<128x128xf32>
    %cst_23 = arith.constant dense<0.000000e+00> : vector<1x128xf32>
    %43 = tpu.matmul %38, %42, %cst_23 {dimension_numbers = #tpu.dot_dimension_numbers<[1], [0], [0], [1], [0, 0, 1, 1], [], []>} : vector<1x128xf32>, vector<128x128xf32>, vector<1x128xf32> -> vector<1x128xf32>
    %c0_24 = arith.constant 0 : index
    %c0_25 = arith.constant 0 : index
    %44 = vector.load %arg3[%c0_24, %c0_25] : memref<128x128xf32, #tpu.memory_space<vmem>>, vector<128x128xf32>
    %cst_26 = arith.constant dense<0.000000e+00> : vector<1x128xf32>
    %45 = tpu.matmul %41, %44, %cst_26 {dimension_numbers = #tpu.dot_dimension_numbers<[1], [0], [0], [1], [0, 0, 1, 1], [], []>} : vector<1x128xf32>, vector<128x128xf32>, vector<1x128xf32> -> vector<1x128xf32>
    %cst_27 = arith.constant 0.00255102036 : f32
    %46 = vector.broadcast %cst_27 : f32 to vector<1x128xf32>
    %47 = arith.mulf %43, %46 : vector<1x128xf32>
    %cst_28 = arith.constant 0.00255102036 : f32
    %48 = vector.broadcast %cst_28 : f32 to vector<1x128xf32>
    %49 = arith.mulf %45, %48 : vector<1x128xf32>
    %50 = arith.mulf %47, %47 : vector<1x128xf32>
    %51 = arith.subf %49, %50 : vector<1x128xf32>
    %c0_29 = arith.constant 0 : index
    %c0_30 = arith.constant 0 : index
    %52 = vector.load %arg5[%c0_29, %c0_30] : memref<2x128xf32, #tpu.memory_space<vmem>>, vector<1x128xf32>
    %cst_31 = arith.constant 9.99999974E-6 : f32
    %53 = vector.broadcast %cst_31 : f32 to vector<1x128xf32>
    %54 = arith.addf %51, %53 : vector<1x128xf32>
    %55 = math.rsqrt %54 : vector<1x128xf32>
    %56 = arith.mulf %52, %55 : vector<1x128xf32>
    %c1_32 = arith.constant 1 : index
    %c0_33 = arith.constant 0 : index
    %57 = vector.load %arg5[%c1_32, %c0_33] : memref<2x128xf32, #tpu.memory_space<vmem>>, vector<1x128xf32>
    %58 = arith.mulf %47, %56 : vector<1x128xf32>
    %59 = arith.subf %57, %58 : vector<1x128xf32>
    %c0_34 = arith.constant 0 : index
    %c0_35 = arith.constant 0 : index
    %60 = vector.load %arg4[%c0_34, %c0_35] : memref<128x128xf32, #tpu.memory_space<vmem>>, vector<128x128xf32>
    %cst_36 = arith.constant dense<0.000000e+00> : vector<1x128xf32>
    %61 = tpu.matmul %56, %60, %cst_36 {dimension_numbers = #tpu.dot_dimension_numbers<[1], [0], [0], [1], [0, 0, 1, 1], [], []>} : vector<1x128xf32>, vector<128x128xf32>, vector<1x128xf32> -> vector<1x128xf32>
    %c0_37 = arith.constant 0 : index
    %c0_38 = arith.constant 0 : index
    %62 = vector.load %arg4[%c0_37, %c0_38] : memref<128x128xf32, #tpu.memory_space<vmem>>, vector<128x128xf32>
    %cst_39 = arith.constant dense<0.000000e+00> : vector<1x128xf32>
    %63 = tpu.matmul %59, %62, %cst_39 {dimension_numbers = #tpu.dot_dimension_numbers<[1], [0], [0], [1], [0, 0, 1, 1], [], []>} : vector<1x128xf32>, vector<128x128xf32>, vector<1x128xf32> -> vector<1x128xf32>
    %64 = vector.broadcast %61 : vector<1x128xf32> to vector<32x128xf32>
    %65 = arith.mulf %15, %64 : vector<32x128xf32>
    %66 = vector.broadcast %63 : vector<1x128xf32> to vector<32x128xf32>
    %67 = arith.addf %65, %66 : vector<32x128xf32>
    %cst_40 = arith.constant 0.000000e+00 : f32
    %68 = vector.broadcast %cst_40 : f32 to vector<32x128xf32>
    %69 = arith.maximumf %67, %68 : vector<32x128xf32>
    %c0_41 = arith.constant 0 : index
    %c0_42 = arith.constant 0 : index
    %70 = vector.load %arg15[%c0_41, %c0_42] : memref<40x128xf32, #tpu.memory_space<vmem>>, vector<32x128xf32>
    tpu.vector_store %arg15[%c0_41, %c0_42], %69 {strides = array<i32>} : memref<40x128xf32, #tpu.memory_space<vmem>>, vector<32x128xf32>,
    %cst_43 = arith.constant 0.000000e+00 : f32
    %71 = vector.broadcast %cst_43 : f32 to vector<32x128xf32>
    %c0_44 = arith.constant 0 : index
    %c0_45 = arith.constant 0 : index
    %72 = vector.load %arg15[%c0_44, %c0_45] : memref<40x128xf32, #tpu.memory_space<vmem>>, vector<32x128xf32>
    %c0_46 = arith.constant 0 : index
    %c0_47 = arith.constant 0 : index
    %c0_48 = arith.constant 0 : index
    %73 = vector.load %arg6[%c0_46, %c0_47, %c0_48] : memref<3x128x128xf32, #tpu.memory_space<vmem>>, vector<1x128x128xf32>
    %74 = vector.shape_cast %73 : vector<1x128x128xf32> to vector<128x128xf32>
    %cst_49 = arith.constant dense<0.000000e+00> : vector<32x128xf32>
    %75 = tpu.matmul %72, %74, %cst_49 {dimension_numbers = #tpu.dot_dimension_numbers<[1], [0], [0], [1], [0, 0, 1, 1], [], []>} : vector<32x128xf32>, vector<128x128xf32>, vector<32x128xf32> -> vector<32x128xf32>
    %76 = arith.addf %71, %75 : vector<32x128xf32>
    %c1_50 = arith.constant 1 : index
    %c0_51 = arith.constant 0 : index
    %77 = vector.load %arg15[%c1_50, %c0_51] : memref<40x128xf32, #tpu.memory_space<vmem>>, vector<32x128xf32>
    %c1_52 = arith.constant 1 : index
    %c0_53 = arith.constant 0 : index
    %c0_54 = arith.constant 0 : index
    %78 = vector.load %arg6[%c1_52, %c0_53, %c0_54] : memref<3x128x128xf32, #tpu.memory_space<vmem>>, vector<1x128x128xf32>
    %79 = vector.shape_cast %78 : vector<1x128x128xf32> to vector<128x128xf32>
    %cst_55 = arith.constant dense<0.000000e+00> : vector<32x128xf32>
    %80 = tpu.matmul %77, %79, %cst_55 {dimension_numbers = #tpu.dot_dimension_numbers<[1], [0], [0], [1], [0, 0, 1, 1], [], []>} : vector<32x128xf32>, vector<128x128xf32>, vector<32x128xf32> -> vector<32x128xf32>
    %81 = arith.addf %76, %80 : vector<32x128xf32>
    %c2_56 = arith.constant 2 : index
    %c0_57 = arith.constant 0 : index
    %82 = vector.load %arg15[%c2_56, %c0_57] : memref<40x128xf32, #tpu.memory_space<vmem>>, vector<32x128xf32>
    %c2_58 = arith.constant 2 : index
    %c0_59 = arith.constant 0 : index
    %c0_60 = arith.constant 0 : index
    %83 = vector.load %arg6[%c2_58, %c0_59, %c0_60] : memref<3x128x128xf32, #tpu.memory_space<vmem>>, vector<1x128x128xf32>
    %84 = vector.shape_cast %83 : vector<1x128x128xf32> to vector<128x128xf32>
    %cst_61 = arith.constant dense<0.000000e+00> : vector<32x128xf32>
    %85 = tpu.matmul %82, %84, %cst_61 {dimension_numbers = #tpu.dot_dimension_numbers<[1], [0], [0], [1], [0, 0, 1, 1], [], []>} : vector<32x128xf32>, vector<128x128xf32>, vector<32x128xf32> -> vector<32x128xf32>
    %86 = arith.addf %81, %85 : vector<32x128xf32>
    %87 = tpu.iota {dimensions = array<i32: 0>} : vector<32x128xi32>
    %c16_i32_62 = arith.constant 16 : i32
    %c0_i32_63 = arith.constant 0 : i32
    %88 = arith.cmpi eq, %c16_i32_62, %c0_i32_63 : i32
    %c1_i32_64 = arith.constant 1 : i32
    %89 = arith.select %88, %c1_i32_64, %c16_i32_62 : i32
    %90 = vector.broadcast %89 : i32 to vector<32x128xi32>
    %91 = arith.remsi %87, %90 : vector<32x128xi32>
    %c0_i32_65 = arith.constant 0 : i32
    %92 = vector.broadcast %c0_i32_65 : i32 to vector<32x128xi32>
    %93 = arith.cmpi ne, %91, %92 : vector<32x128xi32>
    %c0_i32_66 = arith.constant 0 : i32
    %94 = vector.broadcast %c0_i32_66 : i32 to vector<32x128xi32>
    %95 = arith.cmpi slt, %91, %94 : vector<32x128xi32>
    %c0_i32_67 = arith.constant 0 : i32
    %96 = arith.cmpi slt, %89, %c0_i32_67 : i32
    %97 = vector.broadcast %96 : i1 to vector<32x128xi1>
    %98 = vector.broadcast %97 : vector<32x128xi1> to vector<32x128xi1>
    %99 = arith.xori %95, %98 : vector<32x128xi1>
    %100 = arith.andi %99, %93 : vector<32x128xi1>
    %101 = vector.broadcast %89 : i32 to vector<32x128xi32>
    %102 = arith.addi %91, %101 : vector<32x128xi32>
    %103 = arith.select %100, %102, %91 : vector<32x128xi1>, vector<32x128xi32>
    %c12_i32 = arith.constant 12 : i32
    %104 = vector.broadcast %c12_i32 : i32 to vector<32x128xi32>
    %105 = arith.cmpi slt, %103, %104 : vector<32x128xi32>
    %cst_68 = arith.constant 0.000000e+00 : f32
    %106 = vector.broadcast %cst_68 : f32 to vector<32x128xf32>
    %107 = arith.select %105, %86, %106 : vector<32x128xi1>, vector<32x128xf32>
    %cst_69 = arith.constant dense<0.000000e+00> : vector<128xf32>
    %108 = vector.multi_reduction <add>, %107, %cst_69 [0] : vector<32x128xf32> to vector<128xf32>
    %109 = vector.shape_cast %108 : vector<128xf32> to vector<1x128xf32>
    %110 = arith.mulf %107, %107 : vector<32x128xf32>
    %cst_70 = arith.constant dense<0.000000e+00> : vector<128xf32>
    %111 = vector.multi_reduction <add>, %110, %cst_70 [0] : vector<32x128xf32> to vector<128xf32>
    %112 = vector.shape_cast %111 : vector<128xf32> to vector<1x128xf32>
    %c0_71 = arith.constant 0 : index
    %c0_72 = arith.constant 0 : index
    %113 = vector.load %arg7[%c0_71, %c0_72] : memref<128x128xf32, #tpu.memory_space<vmem>>, vector<128x128xf32>
    %cst_73 = arith.constant dense<0.000000e+00> : vector<1x128xf32>
    %114 = tpu.matmul %109, %113, %cst_73 {dimension_numbers = #tpu.dot_dimension_numbers<[1], [0], [0], [1], [0, 0, 1, 1], [], []>} : vector<1x128xf32>, vector<128x128xf32>, vector<1x128xf32> -> vector<1x128xf32>
    %c0_74 = arith.constant 0 : index
    %c0_75 = arith.constant 0 : index
    %115 = vector.load %arg7[%c0_74, %c0_75] : memref<128x128xf32, #tpu.memory_space<vmem>>, vector<128x128xf32>
    %cst_76 = arith.constant dense<0.000000e+00> : vector<1x128xf32>
    %116 = tpu.matmul %112, %115, %cst_76 {dimension_numbers = #tpu.dot_dimension_numbers<[1], [0], [0], [1], [0, 0, 1, 1], [], []>} : vector<1x128xf32>, vector<128x128xf32>, vector<1x128xf32> -> vector<1x128xf32>
    %cst_77 = arith.constant 0.00347222225 : f32
    %117 = vector.broadcast %cst_77 : f32 to vector<1x128xf32>
    %118 = arith.mulf %114, %117 : vector<1x128xf32>
    %cst_78 = arith.constant 0.00347222225 : f32
    %119 = vector.broadcast %cst_78 : f32 to vector<1x128xf32>
    %120 = arith.mulf %116, %119 : vector<1x128xf32>
    %121 = arith.mulf %118, %118 : vector<1x128xf32>
    %122 = arith.subf %120, %121 : vector<1x128xf32>
    %c0_79 = arith.constant 0 : index
    %c0_80 = arith.constant 0 : index
    %123 = vector.load %arg9[%c0_79, %c0_80] : memref<2x128xf32, #tpu.memory_space<vmem>>, vector<1x128xf32>
    %cst_81 = arith.constant 9.99999974E-6 : f32
    %124 = vector.broadcast %cst_81 : f32 to vector<1x128xf32>
    %125 = arith.addf %122, %124 : vector<1x128xf32>
    %126 = math.rsqrt %125 : vector<1x128xf32>
    %127 = arith.mulf %123, %126 : vector<1x128xf32>
    %c1_82 = arith.constant 1 : index
    %c0_83 = arith.constant 0 : index
    %128 = vector.load %arg9[%c1_82, %c0_83] : memref<2x128xf32, #tpu.memory_space<vmem>>, vector<1x128xf32>
    %129 = arith.mulf %118, %127 : vector<1x128xf32>
    %130 = arith.subf %128, %129 : vector<1x128xf32>
    %c0_84 = arith.constant 0 : index
    %c0_85 = arith.constant 0 : index
    %131 = vector.load %arg8[%c0_84, %c0_85] : memref<128x128xf32, #tpu.memory_space<vmem>>, vector<128x128xf32>
    %cst_86 = arith.constant dense<0.000000e+00> : vector<1x128xf32>
    %132 = tpu.matmul %127, %131, %cst_86 {dimension_numbers = #tpu.dot_dimension_numbers<[1], [0], [0], [1], [0, 0, 1, 1], [], []>} : vector<1x128xf32>, vector<128x128xf32>, vector<1x128xf32> -> vector<1x128xf32>
    %c0_87 = arith.constant 0 : index
    %c0_88 = arith.constant 0 : index
    %133 = vector.load %arg8[%c0_87, %c0_88] : memref<128x128xf32, #tpu.memory_space<vmem>>, vector<128x128xf32>
    %cst_89 = arith.constant dense<0.000000e+00> : vector<1x128xf32>
    %134 = tpu.matmul %130, %133, %cst_89 {dimension_numbers = #tpu.dot_dimension_numbers<[1], [0], [0], [1], [0, 0, 1, 1], [], []>} : vector<1x128xf32>, vector<128x128xf32>, vector<1x128xf32> -> vector<1x128xf32>
    %135 = vector.broadcast %132 : vector<1x128xf32> to vector<32x128xf32>
    %136 = arith.mulf %86, %135 : vector<32x128xf32>
    %137 = vector.broadcast %134 : vector<1x128xf32> to vector<32x128xf32>
    %138 = arith.addf %136, %137 : vector<32x128xf32>
    %cst_90 = arith.constant 0.000000e+00 : f32
    %139 = vector.broadcast %cst_90 : f32 to vector<32x128xf32>
    %140 = arith.maximumf %138, %139 : vector<32x128xf32>
    %c0_91 = arith.constant 0 : index
    %c0_92 = arith.constant 0 : index
    %141 = vector.load %arg16[%c0_91, %c0_92] : memref<40x128xf32, #tpu.memory_space<vmem>>, vector<32x128xf32>
    tpu.vector_store %arg16[%c0_91, %c0_92], %140 {strides = array<i32>} : memref<40x128xf32, #tpu.memory_space<vmem>>, vector<32x128xf32>,
    %cst_93 = arith.constant 0.000000e+00 : f32
    %142 = vector.broadcast %cst_93 : f32 to vector<32x128xf32>
    %c0_94 = arith.constant 0 : index
    %c0_95 = arith.constant 0 : index
    %143 = vector.load %arg16[%c0_94, %c0_95] : memref<40x128xf32, #tpu.memory_space<vmem>>, vector<32x128xf32>
    %c0_96 = arith.constant 0 : index
    %c0_97 = arith.constant 0 : index
    %c0_98 = arith.constant 0 : index
    %144 = vector.load %arg10[%c0_96, %c0_97, %c0_98] : memref<3x128x128xf32, #tpu.memory_space<vmem>>, vector<1x128x128xf32>
    %145 = vector.shape_cast %144 : vector<1x128x128xf32> to vector<128x128xf32>
    %cst_99 = arith.constant dense<0.000000e+00> : vector<32x128xf32>
    %146 = tpu.matmul %143, %145, %cst_99 {dimension_numbers = #tpu.dot_dimension_numbers<[1], [0], [0], [1], [0, 0, 1, 1], [], []>} : vector<32x128xf32>, vector<128x128xf32>, vector<32x128xf32> -> vector<32x128xf32>
    %147 = arith.addf %142, %146 : vector<32x128xf32>
    %c1_100 = arith.constant 1 : index
    %c0_101 = arith.constant 0 : index
    %148 = vector.load %arg16[%c1_100, %c0_101] : memref<40x128xf32, #tpu.memory_space<vmem>>, vector<32x128xf32>
    %c1_102 = arith.constant 1 : index
    %c0_103 = arith.constant 0 : index
    %c0_104 = arith.constant 0 : index
    %149 = vector.load %arg10[%c1_102, %c0_103, %c0_104] : memref<3x128x128xf32, #tpu.memory_space<vmem>>, vector<1x128x128xf32>
    %150 = vector.shape_cast %149 : vector<1x128x128xf32> to vector<128x128xf32>
    %cst_105 = arith.constant dense<0.000000e+00> : vector<32x128xf32>
    %151 = tpu.matmul %148, %150, %cst_105 {dimension_numbers = #tpu.dot_dimension_numbers<[1], [0], [0], [1], [0, 0, 1, 1], [], []>} : vector<32x128xf32>, vector<128x128xf32>, vector<32x128xf32> -> vector<32x128xf32>
    %152 = arith.addf %147, %151 : vector<32x128xf32>
    %c2_106 = arith.constant 2 : index
    %c0_107 = arith.constant 0 : index
    %153 = vector.load %arg16[%c2_106, %c0_107] : memref<40x128xf32, #tpu.memory_space<vmem>>, vector<32x128xf32>
    %c2_108 = arith.constant 2 : index
    %c0_109 = arith.constant 0 : index
    %c0_110 = arith.constant 0 : index
    %154 = vector.load %arg10[%c2_108, %c0_109, %c0_110] : memref<3x128x128xf32, #tpu.memory_space<vmem>>, vector<1x128x128xf32>
    %155 = vector.shape_cast %154 : vector<1x128x128xf32> to vector<128x128xf32>
    %cst_111 = arith.constant dense<0.000000e+00> : vector<32x128xf32>
    %156 = tpu.matmul %153, %155, %cst_111 {dimension_numbers = #tpu.dot_dimension_numbers<[1], [0], [0], [1], [0, 0, 1, 1], [], []>} : vector<32x128xf32>, vector<128x128xf32>, vector<32x128xf32> -> vector<32x128xf32>
    %157 = arith.addf %152, %156 : vector<32x128xf32>
    %158 = tpu.iota {dimensions = array<i32: 0>} : vector<32x128xi32>
    %c16_i32_112 = arith.constant 16 : i32
    %c0_i32_113 = arith.constant 0 : i32
    %159 = arith.cmpi eq, %c16_i32_112, %c0_i32_113 : i32
    %c1_i32_114 = arith.constant 1 : i32
    %160 = arith.select %159, %c1_i32_114, %c16_i32_112 : i32
    %161 = vector.broadcast %160 : i32 to vector<32x128xi32>
    %162 = arith.remsi %158, %161 : vector<32x128xi32>
    %c0_i32_115 = arith.constant 0 : i32
    %163 = vector.broadcast %c0_i32_115 : i32 to vector<32x128xi32>
    %164 = arith.cmpi ne, %162, %163 : vector<32x128xi32>
    %c0_i32_116 = arith.constant 0 : i32
    %165 = vector.broadcast %c0_i32_116 : i32 to vector<32x128xi32>
    %166 = arith.cmpi slt, %162, %165 : vector<32x128xi32>
    %c0_i32_117 = arith.constant 0 : i32
    %167 = arith.cmpi slt, %160, %c0_i32_117 : i32
    %168 = vector.broadcast %167 : i1 to vector<32x128xi1>
    %169 = vector.broadcast %168 : vector<32x128xi1> to vector<32x128xi1>
    %170 = arith.xori %166, %169 : vector<32x128xi1>
    %171 = arith.andi %170, %164 : vector<32x128xi1>
    %172 = vector.broadcast %160 : i32 to vector<32x128xi32>
    %173 = arith.addi %162, %172 : vector<32x128xi32>
    %174 = arith.select %171, %173, %162 : vector<32x128xi1>, vector<32x128xi32>
    %c10_i32 = arith.constant 10 : i32
    %175 = vector.broadcast %c10_i32 : i32 to vector<32x128xi32>
    %176 = arith.cmpi slt, %174, %175 : vector<32x128xi32>
    %cst_118 = arith.constant 0.000000e+00 : f32
    %177 = vector.broadcast %cst_118 : f32 to vector<32x128xf32>
    %178 = arith.select %176, %157, %177 : vector<32x128xi1>, vector<32x128xf32>
    %cst_119 = arith.constant dense<0.000000e+00> : vector<128xf32>
    %179 = vector.multi_reduction <add>, %178, %cst_119 [0] : vector<32x128xf32> to vector<128xf32>
    %180 = vector.shape_cast %179 : vector<128xf32> to vector<1x128xf32>
    %181 = arith.mulf %178, %178 : vector<32x128xf32>
    %cst_120 = arith.constant dense<0.000000e+00> : vector<128xf32>
    %182 = vector.multi_reduction <add>, %181, %cst_120 [0] : vector<32x128xf32> to vector<128xf32>
    %183 = vector.shape_cast %182 : vector<128xf32> to vector<1x128xf32>
    %c0_121 = arith.constant 0 : index
    %c0_122 = arith.constant 0 : index
    %184 = vector.load %arg11[%c0_121, %c0_122] : memref<128x128xf32, #tpu.memory_space<vmem>>, vector<128x128xf32>
    %cst_123 = arith.constant dense<0.000000e+00> : vector<1x128xf32>
    %185 = tpu.matmul %180, %184, %cst_123 {dimension_numbers = #tpu.dot_dimension_numbers<[1], [0], [0], [1], [0, 0, 1, 1], [], []>} : vector<1x128xf32>, vector<128x128xf32>, vector<1x128xf32> -> vector<1x128xf32>
    %c0_124 = arith.constant 0 : index
    %c0_125 = arith.constant 0 : index
    %186 = vector.load %arg11[%c0_124, %c0_125] : memref<128x128xf32, #tpu.memory_space<vmem>>, vector<128x128xf32>
    %cst_126 = arith.constant dense<0.000000e+00> : vector<1x128xf32>
    %187 = tpu.matmul %183, %186, %cst_126 {dimension_numbers = #tpu.dot_dimension_numbers<[1], [0], [0], [1], [0, 0, 1, 1], [], []>} : vector<1x128xf32>, vector<128x128xf32>, vector<1x128xf32> -> vector<1x128xf32>
    %cst_127 = arith.constant 5.000000e-03 : f32
    %188 = vector.broadcast %cst_127 : f32 to vector<1x128xf32>
    %189 = arith.mulf %185, %188 : vector<1x128xf32>
    %cst_128 = arith.constant 5.000000e-03 : f32
    %190 = vector.broadcast %cst_128 : f32 to vector<1x128xf32>
    %191 = arith.mulf %187, %190 : vector<1x128xf32>
    %192 = arith.mulf %189, %189 : vector<1x128xf32>
    %193 = arith.subf %191, %192 : vector<1x128xf32>
    %c0_129 = arith.constant 0 : index
    %c0_130 = arith.constant 0 : index
    %194 = vector.load %arg13[%c0_129, %c0_130] : memref<2x128xf32, #tpu.memory_space<vmem>>, vector<1x128xf32>
    %cst_131 = arith.constant 9.99999974E-6 : f32
    %195 = vector.broadcast %cst_131 : f32 to vector<1x128xf32>
    %196 = arith.addf %193, %195 : vector<1x128xf32>
    %197 = math.rsqrt %196 : vector<1x128xf32>
    %198 = arith.mulf %194, %197 : vector<1x128xf32>
    %c1_132 = arith.constant 1 : index
    %c0_133 = arith.constant 0 : index
    %199 = vector.load %arg13[%c1_132, %c0_133] : memref<2x128xf32, #tpu.memory_space<vmem>>, vector<1x128xf32>
    %200 = arith.mulf %189, %198 : vector<1x128xf32>
    %201 = arith.subf %199, %200 : vector<1x128xf32>
    %c0_134 = arith.constant 0 : index
    %c0_135 = arith.constant 0 : index
    %202 = vector.load %arg12[%c0_134, %c0_135] : memref<128x128xf32, #tpu.memory_space<vmem>>, vector<128x128xf32>
    %cst_136 = arith.constant dense<0.000000e+00> : vector<1x128xf32>
    %203 = tpu.matmul %198, %202, %cst_136 {dimension_numbers = #tpu.dot_dimension_numbers<[1], [0], [0], [1], [0, 0, 1, 1], [], []>} : vector<1x128xf32>, vector<128x128xf32>, vector<1x128xf32> -> vector<1x128xf32>
    %c0_137 = arith.constant 0 : index
    %c0_138 = arith.constant 0 : index
    %204 = vector.load %arg12[%c0_137, %c0_138] : memref<128x128xf32, #tpu.memory_space<vmem>>, vector<128x128xf32>
    %cst_139 = arith.constant dense<0.000000e+00> : vector<1x128xf32>
    %205 = tpu.matmul %201, %204, %cst_139 {dimension_numbers = #tpu.dot_dimension_numbers<[1], [0], [0], [1], [0, 0, 1, 1], [], []>} : vector<1x128xf32>, vector<128x128xf32>, vector<1x128xf32> -> vector<1x128xf32>
    %206 = vector.broadcast %203 : vector<1x128xf32> to vector<32x128xf32>
    %207 = arith.mulf %157, %206 : vector<32x128xf32>
    %208 = vector.broadcast %205 : vector<1x128xf32> to vector<32x128xf32>
    %209 = arith.addf %207, %208 : vector<32x128xf32>
    %cst_140 = arith.constant 0.000000e+00 : f32
    %210 = vector.broadcast %cst_140 : f32 to vector<32x128xf32>
    %211 = arith.maximumf %209, %210 : vector<32x128xf32>
    %c0_141 = arith.constant 0 : index
    %c0_142 = arith.constant 0 : index
    %212 = vector.load %arg14[%c0_141, %c0_142] : memref<32x128xf32, #tpu.memory_space<vmem>>, vector<32x128xf32>
    tpu.vector_store %arg14[%c0_141, %c0_142], %211 {strides = array<i32>} : memref<32x128xf32, #tpu.memory_space<vmem>>, vector<32x128xf32>,
    return
  }
  func.func @transform_0(%arg0: i32) -> (i32, i32) {
    %c0_i32 = arith.constant 0 : i32
    %c0_i32_0 = arith.constant 0 : i32
    %c0_i32_1 = arith.constant 0 : i32
    return %c0_i32, %c0_i32_0 : i32, i32
  }
  func.func @transform_1(%arg0: i32) -> (i32, i32, i32) {
    %c0_i32 = arith.constant 0 : i32
    %c0_i32_0 = arith.constant 0 : i32
    %c0_i32_1 = arith.constant 0 : i32
    %c0_i32_2 = arith.constant 0 : i32
    return %c0_i32, %c0_i32_0, %c0_i32_1 : i32, i32, i32
  }
  func.func @transform_2(%arg0: i32) -> (i32, i32) {
    %c0_i32 = arith.constant 0 : i32
    %c0_i32_0 = arith.constant 0 : i32
    %c0_i32_1 = arith.constant 0 : i32
    return %c0_i32, %c0_i32_0 : i32, i32
  }
  func.func @transform_3(%arg0: i32) -> (i32, i32) {
    %c0_i32 = arith.constant 0 : i32
    %c0_i32_0 = arith.constant 0 : i32
    %c0_i32_1 = arith.constant 0 : i32
    return %c0_i32, %c0_i32_0 : i32, i32
  }
  func.func @transform_4(%arg0: i32) -> (i32, i32) {
    %c0_i32 = arith.constant 0 : i32
    %c0_i32_0 = arith.constant 0 : i32
    %c0_i32_1 = arith.constant 0 : i32
    return %c0_i32, %c0_i32_0 : i32, i32
  }
  func.func @transform_5(%arg0: i32) -> (i32, i32, i32) {
    %c0_i32 = arith.constant 0 : i32
    %c0_i32_0 = arith.constant 0 : i32
    %c0_i32_1 = arith.constant 0 : i32
    %c0_i32_2 = arith.constant 0 : i32
    return %c0_i32, %c0_i32_0, %c0_i32_1 : i32, i32, i32
  }
  func.func @transform_6(%arg0: i32) -> (i32, i32) {
    %c0_i32 = arith.constant 0 : i32
    %c0_i32_0 = arith.constant 0 : i32
    %c0_i32_1 = arith.constant 0 : i32
    return %c0_i32, %c0_i32_0 : i32, i32
  }
  func.func @transform_7(%arg0: i32) -> (i32, i32) {
    %c0_i32 = arith.constant 0 : i32
    %c0_i32_0 = arith.constant 0 : i32
    %c0_i32_1 = arith.constant 0 : i32
    return %c0_i32, %c0_i32_0 : i32, i32
  }
  func.func @transform_8(%arg0: i32) -> (i32, i32) {
    %c0_i32 = arith.constant 0 : i32
    %c0_i32_0 = arith.constant 0 : i32
    %c0_i32_1 = arith.constant 0 : i32
    return %c0_i32, %c0_i32_0 : i32, i32
  }
  func.func @transform_9(%arg0: i32) -> (i32, i32, i32) {
    %c0_i32 = arith.constant 0 : i32
    %c0_i32_0 = arith.constant 0 : i32
    %c0_i32_1 = arith.constant 0 : i32
    %c0_i32_2 = arith.constant 0 : i32
    return %c0_i32, %c0_i32_0, %c0_i32_1 : i32, i32, i32
  }
  func.func @transform_10(%arg0: i32) -> (i32, i32) {
    %c0_i32 = arith.constant 0 : i32
    %c0_i32_0 = arith.constant 0 : i32
    %c0_i32_1 = arith.constant 0 : i32
    return %c0_i32, %c0_i32_0 : i32, i32
  }
  func.func @transform_11(%arg0: i32) -> (i32, i32) {
    %c0_i32 = arith.constant 0 : i32
    %c0_i32_0 = arith.constant 0 : i32
    %c0_i32_1 = arith.constant 0 : i32
    return %c0_i32, %c0_i32_0 : i32, i32
  }
  func.func @transform_12(%arg0: i32) -> (i32, i32) {
    %c0_i32 = arith.constant 0 : i32
    %c0_i32_0 = arith.constant 0 : i32
    %c0_i32_1 = arith.constant 0 : i32
    return %c0_i32, %c0_i32_0 : i32, i32
  }
  func.func @transform_13(%arg0: i32) -> (i32, i32) {
    %c0_i32 = arith.constant 0 : i32
    %c0_i32_0 = arith.constant 0 : i32
    %c0_i32_1 = arith.constant 0 : i32
    return %c0_i32, %c0_i32_0 : i32, i32
  }
}

</mosaic_0001>

<llo_original>
// kernel: tpu_custom_call.1
$region0: #{tpu_custom_call.1}
  #allocation0 [shape = 'u32[]', space=smem, size = 0x4, offset = 0x4, fixed_abs, tag = 'smem constant byte address 0x4 - core index']
  #allocation1 [shape = 'u32[144,128]{1,0:T(1,128)}', space=vmem, size = 0x12000, scoped, tag = 'internal scratch']
  #allocation2 [shape = 'f32[40,128]{1,0:T(8,128)}', space=vmem, size = 0x5000, scoped, tag = 'scratch operand']
  #allocation3 [shape = 'f32[40,128]{1,0:T(8,128)}', space=vmem, size = 0x5000, scoped, tag = 'scratch operand']
  %s0 = inlined_call_operand.hbm [shape: f32[40,128], index: 0, kind: input, shape index: {}]
  %s1 = inlined_call_operand.hbm [shape: f32[3,128,128], index: 1, kind: input, shape index: {}]
  %s2 = inlined_call_operand.hbm [shape: f32[128,128], index: 2, kind: input, shape index: {}]
  %s3 = inlined_call_operand.hbm [shape: f32[128,128], index: 3, kind: input, shape index: {}]
  %s4 = inlined_call_operand.vmem [shape: f32[2,128], index: 4, kind: input, shape index: {}]
  %s5 = inlined_call_operand.hbm [shape: f32[3,128,128], index: 5, kind: input, shape index: {}]
  %s6 = inlined_call_operand.hbm [shape: f32[128,128], index: 6, kind: input, shape index: {}]
  %s7 = inlined_call_operand.hbm [shape: f32[128,128], index: 7, kind: input, shape index: {}]
  %s8 = inlined_call_operand.vmem [shape: f32[2,128], index: 8, kind: input, shape index: {}]
  %s9 = inlined_call_operand.hbm [shape: f32[3,128,128], index: 9, kind: input, shape index: {}]
  %s10 = inlined_call_operand.hbm [shape: f32[128,128], index: 10, kind: input, shape index: {}]
  %s11 = inlined_call_operand.hbm [shape: f32[128,128], index: 11, kind: input, shape index: {}]
  %s12 = inlined_call_operand.vmem [shape: f32[2,128], index: 12, kind: input, shape index: {}]
  %s13 = inlined_call_operand.hbm [shape: f32[32,128], index: 13, kind: output, shape index: {}]
  %s14 = sld [smem:[#allocation0]]
  $region102: #{tpu_custom_call.1} parent=0
    _
  %s16 = ssub.s32 1, %s14
  %s17 = scalar_select 0, %s16, %s14
  $region1: #{tpu_custom_call.1} parent=0
    #allocation4 [shape = 'u8[20480]{0}', space=vmem, size = 0x5000, scoped, tag = 'input window, operand 0, single buffered']
    #allocation5 [shape = 's32[1]{0}', space=sflag, size = 0x4, scoped, tag = 'scoped memory for tpu_custom_call.1']
    #allocation6 [shape = 's32[1]{0}', space=sflag, size = 0x4, scoped, tag = 'scoped memory for tpu_custom_call.1']
    #allocation7 [shape = 'u8[196608]{0}', space=vmem, size = 0x30000, scoped, tag = 'input window, operand 1, single buffered']
    #allocation8 [shape = 's32[1]{0}', space=sflag, size = 0x4, scoped, tag = 'scoped memory for tpu_custom_call.1']
    #allocation9 [shape = 'u8[65536]{0}', space=vmem, size = 0x10000, scoped, tag = 'input window, operand 2, single buffered']
    #allocation10 [shape = 'u8[65536]{0}', space=vmem, size = 0x10000, scoped, tag = 'input window, operand 3, single buffered']
    #allocation11 [shape = 's32[1]{0}', space=sflag, size = 0x4, scoped, tag = 'scoped memory for tpu_custom_call.1']
    #allocation12 [shape = 'u8[196608]{0}', space=vmem, size = 0x30000, scoped, tag = 'input window, operand 5, single buffered']
    #allocation13 [shape = 'u8[65536]{0}', space=vmem, size = 0x10000, scoped, tag = 'input window, operand 6, single buffered']
    #allocation14 [shape = 's32[1]{0}', space=sflag, size = 0x4, scoped, tag = 'scoped memory for tpu_custom_call.1']
    #allocation15 [shape = 'u8[65536]{0}', space=vmem, size = 0x10000, scoped, tag = 'input window, operand 7, single buffered']
    #allocation16 [shape = 'u8[196608]{0}', space=vmem, size = 0x30000, scoped, tag = 'input window, operand 9, single buffered']
    #allocation17 [shape = 's32[1]{0}', space=sflag, size = 0x4, scoped, tag = 'scoped memory for tpu_custom_call.1']
    #allocation18 [shape = 'u8[65536]{0}', space=vmem, size = 0x10000, scoped, tag = 'input window, operand 10, single buffered']
    #allocation19 [shape = 'u8[65536]{0}', space=vmem, size = 0x10000, scoped, tag = 'input window, operand 11, single buffered']
    #allocation20 [shape = 's32[1]{0}', space=sflag, size = 0x4, scoped, tag = 'scoped memory for tpu_custom_call.1']
    #allocation21 [shape = 'u8[16384]{0}', space=vmem, size = 0x4000, scoped, tag = 'output window, operand 0, single buffered']
    %18 = vsyncpa [#allocation5], 0
    %19 = vsyncpa [#allocation8], 0
    %20 = vsyncpa [#allocation11], 0
    %21 = vsyncpa [#allocation14], 0
    %22 = vsyncpa [#allocation17], 0
    %23 = vsyncpa [#allocation20], 0
    %24 = vsyncpa [#allocation6], 0
    // Predicated region
    $region2: #{tpu_custom_call.1} parent=1 // pred_check
      _
    $region3: #{tpu_custom_call.1} parent=1 // pred_check_branch
      %26 = sbr.rel (0) target = $region5
    $region4: #{tpu_custom_call.1} parent=1 // pred_region
      %s28 = ssub.s32 640, 640
      %29 = vsyncadd [#allocation5], %s28
      %s30 = sshll.u32 [#allocation4], 4
      %s31 = int_to_ptr.vmem [resolvable:$true] %s30
      %36 = dma.hbm_to_vmem [thread:$0]  %s0, 640, %s31, [#allocation5], 128, 128, 8
    $region5: #{tpu_custom_call.1} parent=1 // pred_fallthru
      _
    // Predicated region
    $region6: #{tpu_custom_call.1} parent=1 // pred_check
      _
    $region7: #{tpu_custom_call.1} parent=1 // pred_check_branch
      %38 = sbr.rel (0) target = $region9
    $region8: #{tpu_custom_call.1} parent=1 // pred_region
      %s40 = ssub.s32 6144, 6144
      %41 = vsyncadd [#allocation8], %s40
      %s42 = sshll.u32 [#allocation7], 4
      %s43 = int_to_ptr.vmem [resolvable:$true] %s42
      %48 = dma.hbm_to_vmem [thread:$0]  %s1, 6144, %s43, [#allocation8], 128, 128, 8
    $region9: #{tpu_custom_call.1} parent=1 // pred_fallthru
      _
    // Predicated region
    $region10: #{tpu_custom_call.1} parent=1 // pred_check
      _
    $region11: #{tpu_custom_call.1} parent=1 // pred_check_branch
      %50 = sbr.rel (0) target = $region13
    $region12: #{tpu_custom_call.1} parent=1 // pred_region
      %s52 = ssub.s32 2048, 2048
      %53 = vsyncadd [#allocation8], %s52
      %s54 = sshll.u32 [#allocation9], 4
      %s55 = int_to_ptr.vmem [resolvable:$true] %s54
      %60 = dma.hbm_to_vmem [thread:$0]  %s2, 2048, %s55, [#allocation8], 128, 128, 8
    $region13: #{tpu_custom_call.1} parent=1 // pred_fallthru
      _
    // Predicated region
    $region14: #{tpu_custom_call.1} parent=1 // pred_check
      _
    $region15: #{tpu_custom_call.1} parent=1 // pred_check_branch
      %62 = sbr.rel (0) target = $region17
    $region16: #{tpu_custom_call.1} parent=1 // pred_region
      %s64 = ssub.s32 2048, 2048
      %65 = vsyncadd [#allocation11], %s64
      %s66 = sshll.u32 [#allocation10], 4
      %s67 = int_to_ptr.vmem [resolvable:$true] %s66
      %72 = dma.hbm_to_vmem [thread:$0]  %s3, 2048, %s67, [#allocation11], 128, 128, 8
    $region17: #{tpu_custom_call.1} parent=1 // pred_fallthru
      _
    // Predicated region
    $region18: #{tpu_custom_call.1} parent=1 // pred_check
      _
    $region19: #{tpu_custom_call.1} parent=1 // pred_check_branch
      %74 = sbr.rel (0) target = $region21
    $region20: #{tpu_custom_call.1} parent=1 // pred_region
      _
    $region21: #{tpu_custom_call.1} parent=1 // pred_fallthru
      _
    // Predicated region
    $region22: #{tpu_custom_call.1} parent=1 // pred_check
      _
    $region23: #{tpu_custom_call.1} parent=1 // pred_check_branch
      %76 = sbr.rel (0) target = $region25
    $region24: #{tpu_custom_call.1} parent=1 // pred_region
      %s78 = ssub.s32 6144, 6144
      %79 = vsyncadd [#allocation11], %s78
      %s80 = sshll.u32 [#allocation12], 4
      %s81 = int_to_ptr.vmem [resolvable:$true] %s80
      %86 = dma.hbm_to_vmem [thread:$0]  %s5, 6144, %s81, [#allocation11], 128, 128, 8
    $region25: #{tpu_custom_call.1} parent=1 // pred_fallthru
      _
    // Predicated region
    $region26: #{tpu_custom_call.1} parent=1 // pred_check
      _
    $region27: #{tpu_custom_call.1} parent=1 // pred_check_branch
      %88 = sbr.rel (0) target = $region29
    $region28: #{tpu_custom_call.1} parent=1 // pred_region
      %s90 = ssub.s32 2048, 2048
      %91 = vsyncadd [#allocation14], %s90
      %s92 = sshll.u32 [#allocation13], 4
      %s93 = int_to_ptr.vmem [resolvable:$true] %s92
      %98 = dma.hbm_to_vmem [thread:$0]  %s6, 2048, %s93, [#allocation14], 128, 128, 8
    $region29: #{tpu_custom_call.1} parent=1 // pred_fallthru
      _
    // Predicated region
    $region30: #{tpu_custom_call.1} parent=1 // pred_check
      _
    $region31: #{tpu_custom_call.1} parent=1 // pred_check_branch
      %100 = sbr.rel (0) target = $region33
    $region32: #{tpu_custom_call.1} parent=1 // pred_region
      %s102 = ssub.s32 2048, 2048
      %103 = vsyncadd [#allocation14], %s102
      %s104 = sshll.u32 [#allocation15], 4
      %s105 = int_to_ptr.vmem [resolvable:$true] %s104
      %110 = dma.hbm_to_vmem [thread:$0]  %s7, 2048, %s105, [#allocation14], 128, 128, 8
    $region33: #{tpu_custom_call.1} parent=1 // pred_fallthru
      _
    // Predicated region
    $region34: #{tpu_custom_call.1} parent=1 // pred_check
      _
    $region35: #{tpu_custom_call.1} parent=1 // pred_check_branch
      %112 = sbr.rel (0) target = $region37
    $region36: #{tpu_custom_call.1} parent=1 // pred_region
      _
    $region37: #{tpu_custom_call.1} parent=1 // pred_fallthru
      _
    // Predicated region
    $region38: #{tpu_custom_call.1} parent=1 // pred_check
      _
    $region39: #{tpu_custom_call.1} parent=1 // pred_check_branch
      %114 = sbr.rel (0) target = $region41
    $region40: #{tpu_custom_call.1} parent=1 // pred_region
      %s116 = ssub.s32 6144, 6144
      %117 = vsyncadd [#allocation17], %s116
      %s118 = sshll.u32 [#allocation16], 4
      %s119 = int_to_ptr.vmem [resolvable:$true] %s118
      %124 = dma.hbm_to_vmem [thread:$0]  %s9, 6144, %s119, [#allocation17], 128, 128, 8
    $region41: #{tpu_custom_call.1} parent=1 // pred_fallthru
      _
    // Predicated region
    $region42: #{tpu_custom_call.1} parent=1 // pred_check
      _
    $region43: #{tpu_custom_call.1} parent=1 // pred_check_branch
      %126 = sbr.rel (0) target = $region45
    $region44: #{tpu_custom_call.1} parent=1 // pred_region
      %s128 = ssub.s32 2048, 2048
      %129 = vsyncadd [#allocation17], %s128
      %s130 = sshll.u32 [#allocation18], 4
      %s131 = int_to_ptr.vmem [resolvable:$true] %s130
      %136 = dma.hbm_to_vmem [thread:$0]  %s10, 2048, %s131, [#allocation17], 128, 128, 8
    $region45: #{tpu_custom_call.1} parent=1 // pred_fallthru
      _
    // Predicated region
    $region46: #{tpu_custom_call.1} parent=1 // pred_check
      _
    $region47: #{tpu_custom_call.1} parent=1 // pred_check_branch
      %138 = sbr.rel (0) target = $region49
    $region48: #{tpu_custom_call.1} parent=1 // pred_region
      %s140 = ssub.s32 2048, 2048
      %141 = vsyncadd [#allocation20], %s140
      %s142 = sshll.u32 [#allocation19], 4
      %s143 = int_to_ptr.vmem [resolvable:$true] %s142
      %148 = dma.hbm_to_vmem [thread:$0]  %s11, 2048, %s143, [#allocation20], 128, 128, 8
    $region49: #{tpu_custom_call.1} parent=1 // pred_fallthru
      _
    // Predicated region
    $region50: #{tpu_custom_call.1} parent=1 // pred_check
      _
    $region51: #{tpu_custom_call.1} parent=1 // pred_check_branch
      %150 = sbr.rel (0) target = $region53
    $region52: #{tpu_custom_call.1} parent=1 // pred_region
      _
    $region53: #{tpu_custom_call.1} parent=1 // pred_fallthru
      _
    // Predicated region
    $region54: #{tpu_custom_call.1} parent=1 // pred_check
      _
    $region55: #{tpu_custom_call.1} parent=1 // pred_check_branch
      %152 = sbr.rel (0) target = $region57
    $region56: #{tpu_custom_call.1} parent=1 // pred_region
      %153 = dma.done [#allocation5], 640
    $region57: #{tpu_custom_call.1} parent=1 // pred_fallthru
      _
    // Predicated region
    $region58: #{tpu_custom_call.1} parent=1 // pred_check
      _
    $region59: #{tpu_custom_call.1} parent=1 // pred_check_branch
      %155 = sbr.rel (0) target = $region61
    $region60: #{tpu_custom_call.1} parent=1 // pred_region
      %156 = dma.done [#allocation8], 6144
    $region61: #{tpu_custom_call.1} parent=1 // pred_fallthru
      _
    // Predicated region
    $region62: #{tpu_custom_call.1} parent=1 // pred_check
      _
    $region63: #{tpu_custom_call.1} parent=1 // pred_check_branch
      %158 = sbr.rel (0) target = $region65
    $region64: #{tpu_custom_call.1} parent=1 // pred_region
      %159 = dma.done [#allocation8], 2048
    $region65: #{tpu_custom_call.1} parent=1 // pred_fallthru
      _
    // Predicated region
    $region66: #{tpu_custom_call.1} parent=1 // pred_check
      _
    $region67: #{tpu_custom_call.1} parent=1 // pred_check_branch
      %161 = sbr.rel (0) target = $region69
    $region68: #{tpu_custom_call.1} parent=1 // pred_region
      %162 = dma.done [#allocation11], 2048
    $region69: #{tpu_custom_call.1} parent=1 // pred_fallthru
      _
    // Predicated region
    $region70: #{tpu_custom_call.1} parent=1 // pred_check
      _
    $region71: #{tpu_custom_call.1} parent=1 // pred_check_branch
      %164 = sbr.rel (0) target = $region73
    $region72: #{tpu_custom_call.1} parent=1 // pred_region
      %165 = dma.done [#allocation11], 6144
    $region73: #{tpu_custom_call.1} parent=1 // pred_fallthru
      _
    // Predicated region
    $region74: #{tpu_custom_call.1} parent=1 // pred_check
      _
    $region75: #{tpu_custom_call.1} parent=1 // pred_check_branch
      %167 = sbr.rel (0) target = $region77
    $region76: #{tpu_custom_call.1} parent=1 // pred_region
      %168 = dma.done [#allocation14], 2048
    $region77: #{tpu_custom_call.1} parent=1 // pred_fallthru
      _
    // Predicated region
    $region78: #{tpu_custom_call.1} parent=1 // pred_check
      _
    $region79: #{tpu_custom_call.1} parent=1 // pred_check_branch
      %170 = sbr.rel (0) target = $region81
    $region80: #{tpu_custom_call.1} parent=1 // pred_region
      %171 = dma.done [#allocation14], 2048
    $region81: #{tpu_custom_call.1} parent=1 // pred_fallthru
      _
    // Predicated region
    $region82: #{tpu_custom_call.1} parent=1 // pred_check
      _
    $region83: #{tpu_custom_call.1} parent=1 // pred_check_branch
      %173 = sbr.rel (0) target = $region85
    $region84: #{tpu_custom_call.1} parent=1 // pred_region
      %174 = dma.done [#allocation17], 6144
    $region85: #{tpu_custom_call.1} parent=1 // pred_fallthru
      _
    // Predicated region
    $region86: #{tpu_custom_call.1} parent=1 // pred_check
      _
    $region87: #{tpu_custom_call.1} parent=1 // pred_check_branch
      %176 = sbr.rel (0) target = $region89
    $region88: #{tpu_custom_call.1} parent=1 // pred_region
      %177 = dma.done [#allocation17], 2048
    $region89: #{tpu_custom_call.1} parent=1 // pred_fallthru
      _
    // Predicated region
    $region90: #{tpu_custom_call.1} parent=1 // pred_check
      _
    $region91: #{tpu_custom_call.1} parent=1 // pred_check_branch
      %179 = sbr.rel (0) target = $region93
    $region92: #{tpu_custom_call.1} parent=1 // pred_region
      %180 = dma.done [#allocation20], 2048
    $region93: #{tpu_custom_call.1} parent=1 // pred_fallthru
      _
    %v181 = vld [vmem:[#allocation4] sm:$0xff]
    %v182 = vld [vmem:[#allocation4 + $0x8] sm:$0xff]
    %v183 = vld [vmem:[#allocation4 + $0x10] sm:$0xff]
    %v184 = vld [vmem:[#allocation4 + $0x18] sm:$0xff]
    %v185 = vld [vmem:[#allocation7] sm:$0xff]
    %v186 = vld [vmem:[#allocation7 + $0x8] sm:$0xff]
    %v187 = vld [vmem:[#allocation7 + $0x10] sm:$0xff]
    %v188 = vld [vmem:[#allocation7 + $0x18] sm:$0xff]
    %v189 = vld [vmem:[#allocation7 + $0x20] sm:$0xff]
    %v190 = vld [vmem:[#allocation7 + $0x28] sm:$0xff]
    %v191 = vld [vmem:[#allocation7 + $0x30] sm:$0xff]
    %v192 = vld [vmem:[#allocation7 + $0x38] sm:$0xff]
    %v193 = vld [vmem:[#allocation7 + $0x40] sm:$0xff]
    %v194 = vld [vmem:[#allocation7 + $0x48] sm:$0xff]
    %v195 = vld [vmem:[#allocation7 + $0x50] sm:$0xff]
    %v196 = vld [vmem:[#allocation7 + $0x58] sm:$0xff]
    %v197 = vld [vmem:[#allocation7 + $0x60] sm:$0xff]
    %v198 = vld [vmem:[#allocation7 + $0x68] sm:$0xff]
    %v199 = vld [vmem:[#allocation7 + $0x70] sm:$0xff]
    %v200 = vld [vmem:[#allocation7 + $0x78] sm:$0xff]
    %v201 = vld [vmem:[#allocation4 + $0x1] sm:$0xff]
    %v202 = vld [vmem:[#allocation4 + $0x9] sm:$0xff]
    %v203 = vld [vmem:[#allocation4 + $0x11] sm:$0xff]
    %v204 = vld [vmem:[#allocation4 + $0x19] sm:$0xff]
    %s205 = scalar_lea.vmem [#allocation7], 128
    %v206 = vld [vmem:[%s205] sm:$0xff]
    %v207 = vld [vmem:[%s205 + $0x8] sm:$0xff]
    %v208 = vld [vmem:[%s205 + $0x10] sm:$0xff]
    %v209 = vld [vmem:[%s205 + $0x18] sm:$0xff]
    %v210 = vld [vmem:[%s205 + $0x20] sm:$0xff]
    %v211 = vld [vmem:[%s205 + $0x28] sm:$0xff]
    %v212 = vld [vmem:[%s205 + $0x30] sm:$0xff]
    %v213 = vld [vmem:[%s205 + $0x38] sm:$0xff]
    %v214 = vld [vmem:[%s205 + $0x40] sm:$0xff]
    %v215 = vld [vmem:[%s205 + $0x48] sm:$0xff]
    %v216 = vld [vmem:[%s205 + $0x50] sm:$0xff]
    %v217 = vld [vmem:[%s205 + $0x58] sm:$0xff]
    %v218 = vld [vmem:[%s205 + $0x60] sm:$0xff]
    %v219 = vld [vmem:[%s205 + $0x68] sm:$0xff]
    %v220 = vld [vmem:[%s205 + $0x70] sm:$0xff]
    %v221 = vld [vmem:[%s205 + $0x78] sm:$0xff]
    %222 = vmatprep.subr.mxu0 0.0
    %223 = vmatpush1.msra.mxu0 %v221
    %224 = vmatprep.subr.mxu0 0.0
    %225 = vmatpush1.msra.mxu0 %v220
    %226 = vmatprep.subr.mxu0 0.0
    %227 = vmatpush1.msra.mxu0 %v219
    %228 = vmatprep.subr.mxu0 0.0
    %229 = vmatpush1.msra.mxu0 %v218
    %230 = vmatprep.subr.mxu0 0.0
    %231 = vmatpush1.msra.mxu0 %v217
    %232 = vmatprep.subr.mxu0 0.0
    %233 = vmatpush1.msra.mxu0 %v216
    %234 = vmatprep.subr.mxu0 0.0
    %235 = vmatpush1.msra.mxu0 %v215
    %236 = vmatprep.subr.mxu0 0.0
    %237 = vmatpush1.msra.mxu0 %v214
    %238 = vmatprep.subr.mxu0 0.0
    %239 = vmatpush1.msra.mxu0 %v213
    %240 = vmatprep.subr.mxu0 0.0
    %241 = vmatpush1.msra.mxu0 %v212
    %242 = vmatprep.subr.mxu0 0.0
    %243 = vmatpush1.msra.mxu0 %v211
    %244 = vmatprep.subr.mxu0 0.0
    %245 = vmatpush1.msra.mxu0 %v210
    %246 = vmatprep.subr.mxu0 0.0
    %247 = vmatpush1.msra.mxu0 %v209
    %248 = vmatprep.subr.mxu0 0.0
    %249 = vmatpush1.msra.mxu0 %v208
    %250 = vmatprep.subr.mxu0 0.0
    %251 = vmatpush1.msra.mxu0 %v207
    %252 = vmatprep.subr.mxu0 0.0
    %253 = vmatpush1.msra.mxu0 %v206
    %254 = vmatprep.subr.mxu0 0.0
    %255 = vmatpush2.msra.mxu0 0.0
    %256 = vmatprep.subr.mxu0 0.0
    %257 = vmatpush2.msra.mxu0 0.0
    %258 = vmatprep.subr.mxu0 0.0
    %259 = vmatpush2.msra.mxu0 0.0
    %260 = vmatprep.subr.mxu0 0.0
    %261 = vmatpush2.msra.mxu0 0.0
    %262 = vmatprep.subr.mxu0 0.0
    %263 = vmatpush2.msra.mxu0 0.0
    %264 = vmatprep.subr.mxu0 0.0
    %265 = vmatpush2.msra.mxu0 0.0
    %266 = vmatprep.subr.mxu0 0.0
    %267 = vmatpush2.msra.mxu0 0.0
    %268 = vmatprep.subr.mxu0 0.0
    %269 = vmatpush2.msra.mxu0 0.0
    %270 = vmatprep.subr.mxu0 0.0
    %271 = vmatpush2.msra.mxu0 0.0
    %272 = vmatprep.subr.mxu0 0.0
    %273 = vmatpush2.msra.mxu0 0.0
    %274 = vmatprep.subr.mxu0 0.0
    %275 = vmatpush2.msra.mxu0 0.0
    %276 = vmatprep.subr.mxu0 0.0
    %277 = vmatpush2.msra.mxu0 0.0
    %278 = vmatprep.subr.mxu0 0.0
    %279 = vmatpush2.msra.mxu0 0.0
    %280 = vmatprep.subr.mxu0 0.0
    %281 = vmatpush2.msra.mxu0 0.0
    %282 = vmatprep.subr.mxu0 0.0
    %283 = vmatpush2.msra.mxu0 0.0
    %284 = vmatprep.subr.mxu0 0.0
    %285 = vmatpush2.msra.mxu0 0.0
    %286 = vmatprep.mubr.f32.mxu0 0.0
    %287 = vmatmul.mubr.f32.gmra.mxu0 %v201
    %v288 = vpop.f32.mrf.mxu0
    %v289 = vadd.f32 0.0, %v288
    %v290 = vpop.f32.mrf.mxu0
    %291 = vmatprep.mubr.f32.mxu0 0.0
    %292 = vmatmul.mubr.f32.gmra.mxu0 %v202
    %v293 = vpop.f32.mrf.mxu0
    %v294 = vadd.f32 0.0, %v293
    %v295 = vpop.f32.mrf.mxu0
    %296 = vmatprep.mubr.f32.mxu0 0.0
    %297 = vmatmul.mubr.f32.gmra.mxu0 %v203
    %v298 = vpop.f32.mrf.mxu0
    %v299 = vadd.f32 0.0, %v298
    %v300 = vpop.f32.mrf.mxu0
    %301 = vmatprep.mubr.f32.mxu0 0.0
    %302 = vmatmul.mubr.f32.gmra.mxu0 %v204
    %v303 = vpop.f32.mrf.mxu0
    %v304 = vadd.f32 0.0, %v303
    %v305 = vpop.f32.mrf.mxu0
    %306 = vdwg.mxu0
    %307 = vmatprep.subr.mxu0 0.0
    %308 = vmatpush1.msra.mxu0 %v200
    %309 = vmatprep.subr.mxu0 0.0
    %310 = vmatpush1.msra.mxu0 %v199
    %311 = vmatprep.subr.mxu0 0.0
    %312 = vmatpush1.msra.mxu0 %v198
    %313 = vmatprep.subr.mxu0 0.0
    %314 = vmatpush1.msra.mxu0 %v197
    %315 = vmatprep.subr.mxu0 0.0
    %316 = vmatpush1.msra.mxu0 %v196
    %317 = vmatprep.subr.mxu0 0.0
    %318 = vmatpush1.msra.mxu0 %v195
    %319 = vmatprep.subr.mxu0 0.0
    %320 = vmatpush1.msra.mxu0 %v194
    %321 = vmatprep.subr.mxu0 0.0
    %322 = vmatpush1.msra.mxu0 %v193
    %323 = vmatprep.subr.mxu0 0.0
    %324 = vmatpush1.msra.mxu0 %v192
    %325 = vmatprep.subr.mxu0 0.0
    %326 = vmatpush1.msra.mxu0 %v191
    %327 = vmatprep.subr.mxu0 0.0
    %328 = vmatpush1.msra.mxu0 %v190
    %329 = vmatprep.subr.mxu0 0.0
    %330 = vmatpush1.msra.mxu0 %v189
    %331 = vmatprep.subr.mxu0 0.0
    %332 = vmatpush1.msra.mxu0 %v188
    %333 = vmatprep.subr.mxu0 0.0
    %334 = vmatpush1.msra.mxu0 %v187
    %335 = vmatprep.subr.mxu0 0.0
    %336 = vmatpush1.msra.mxu0 %v186
    %337 = vmatprep.subr.mxu0 0.0
    %338 = vmatpush1.msra.mxu0 %v185
    %339 = vmatprep.subr.mxu0 0.0
    %340 = vmatpush2.msra.mxu0 0.0
    %341 = vmatprep.subr.mxu0 0.0
    %342 = vmatpush2.msra.mxu0 0.0
    %343 = vmatprep.subr.mxu0 0.0
    %344 = vmatpush2.msra.mxu0 0.0
    %345 = vmatprep.subr.mxu0 0.0
    %346 = vmatpush2.msra.mxu0 0.0
    %347 = vmatprep.subr.mxu0 0.0
    %348 = vmatpush2.msra.mxu0 0.0
    %349 = vmatprep.subr.mxu0 0.0
    %350 = vmatpush2.msra.mxu0 0.0
    %351 = vmatprep.subr.mxu0 0.0
    %352 = vmatpush2.msra.mxu0 0.0
    %353 = vmatprep.subr.mxu0 0.0
    %354 = vmatpush2.msra.mxu0 0.0
    %355 = vmatprep.subr.mxu0 0.0
    %356 = vmatpush2.msra.mxu0 0.0
    %357 = vmatprep.subr.mxu0 0.0
    %358 = vmatpush2.msra.mxu0 0.0
    %359 = vmatprep.subr.mxu0 0.0
    %360 = vmatpush2.msra.mxu0 0.0
    %361 = vmatprep.subr.mxu0 0.0
    %362 = vmatpush2.msra.mxu0 0.0
    %363 = vmatprep.subr.mxu0 0.0
    %364 = vmatpush2.msra.mxu0 0.0
    %365 = vmatprep.subr.mxu0 0.0
    %366 = vmatpush2.msra.mxu0 0.0
    %367 = vmatprep.subr.mxu0 0.0
    %368 = vmatpush2.msra.mxu0 0.0
    %369 = vmatprep.subr.mxu0 0.0
    %370 = vmatpush2.msra.mxu0 0.0
    %371 = vmatprep.mubr.f32.mxu0 0.0
    %372 = vmatmul.mubr.f32.gmra.mxu0 %v181
    %v373 = vpop.f32.mrf.mxu0
    %v374 = vadd.f32 %v289, %v373
    %v375 = vpop.f32.mrf.mxu0
    %376 = vmatprep.mubr.f32.mxu0 0.0
    %377 = vmatmul.mubr.f32.gmra.mxu0 %v182
    %v378 = vpop.f32.mrf.mxu0
    %v379 = vadd.f32 %v294, %v378
    %v380 = vpop.f32.mrf.mxu0
    %381 = vmatprep.mubr.f32.mxu0 0.0
    %382 = vmatmul.mubr.f32.gmra.mxu0 %v183
    %v383 = vpop.f32.mrf.mxu0
    %v384 = vadd.f32 %v299, %v383
    %v385 = vpop.f32.mrf.mxu0
    %386 = vmatprep.mubr.f32.mxu0 0.0
    %387 = vmatmul.mubr.f32.gmra.mxu0 %v184
    %v388 = vpop.f32.mrf.mxu0
    %v389 = vadd.f32 %v304, %v388
    %v390 = vpop.f32.mrf.mxu0
    %391 = vdwg.mxu0
    %v392 = vld [vmem:[#allocation4 + $0x2] sm:$0xff]
    %v393 = vld [vmem:[#allocation4 + $0xa] sm:$0xff]
    %v394 = vld [vmem:[#allocation4 + $0x12] sm:$0xff]
    %v395 = vld [vmem:[#allocation4 + $0x1a] sm:$0xff]
    %s396 = scalar_lea.vmem [#allocation7], 256
    %v397 = vld [vmem:[%s396] sm:$0xff]
    %v398 = vld [vmem:[%s396 + $0x8] sm:$0xff]
    %v399 = vld [vmem:[%s396 + $0x10] sm:$0xff]
    %v400 = vld [vmem:[%s396 + $0x18] sm:$0xff]
    %v401 = vld [vmem:[%s396 + $0x20] sm:$0xff]
    %v402 = vld [vmem:[%s396 + $0x28] sm:$0xff]
    %v403 = vld [vmem:[%s396 + $0x30] sm:$0xff]
    %v404 = vld [vmem:[%s396 + $0x38] sm:$0xff]
    %v405 = vld [vmem:[%s396 + $0x40] sm:$0xff]
    %v406 = vld [vmem:[%s396 + $0x48] sm:$0xff]
    %v407 = vld [vmem:[%s396 + $0x50] sm:$0xff]
    %v408 = vld [vmem:[%s396 + $0x58] sm:$0xff]
    %v409 = vld [vmem:[%s396 + $0x60] sm:$0xff]
    %v410 = vld [vmem:[%s396 + $0x68] sm:$0xff]
    %v411 = vld [vmem:[%s396 + $0x70] sm:$0xff]
    %v412 = vld [vmem:[%s396 + $0x78] sm:$0xff]
    %413 = vmatprep.subr.mxu0 0.0
    %414 = vmatpush1.msra.mxu0 %v412
    %415 = vmatprep.subr.mxu0 0.0
    %416 = vmatpush1.msra.mxu0 %v411
    %417 = vmatprep.subr.mxu0 0.0
    %418 = vmatpush1.msra.mxu0 %v410
    %419 = vmatprep.subr.mxu0 0.0
    %420 = vmatpush1.msra.mxu0 %v409
    %421 = vmatprep.subr.mxu0 0.0
    %422 = vmatpush1.msra.mxu0 %v408
    %423 = vmatprep.subr.mxu0 0.0
    %424 = vmatpush1.msra.mxu0 %v407
    %425 = vmatprep.subr.mxu0 0.0
    %426 = vmatpush1.msra.mxu0 %v406
    %427 = vmatprep.subr.mxu0 0.0
    %428 = vmatpush1.msra.mxu0 %v405
    %429 = vmatprep.subr.mxu0 0.0
    %430 = vmatpush1.msra.mxu0 %v404
    %431 = vmatprep.subr.mxu0 0.0
    %432 = vmatpush1.msra.mxu0 %v403
    %433 = vmatprep.subr.mxu0 0.0
    %434 = vmatpush1.msra.mxu0 %v402
    %435 = vmatprep.subr.mxu0 0.0
    %436 = vmatpush1.msra.mxu0 %v401
    %437 = vmatprep.subr.mxu0 0.0
    %438 = vmatpush1.msra.mxu0 %v400
    %439 = vmatprep.subr.mxu0 0.0
    %440 = vmatpush1.msra.mxu0 %v399
    %441 = vmatprep.subr.mxu0 0.0
    %442 = vmatpush1.msra.mxu0 %v398
    %443 = vmatprep.subr.mxu0 0.0
    %444 = vmatpush1.msra.mxu0 %v397
    %445 = vmatprep.subr.mxu0 0.0
    %446 = vmatpush2.msra.mxu0 0.0
    %447 = vmatprep.subr.mxu0 0.0
    %448 = vmatpush2.msra.mxu0 0.0
    %449 = vmatprep.subr.mxu0 0.0
    %450 = vmatpush2.msra.mxu0 0.0
    %451 = vmatprep.subr.mxu0 0.0
    %452 = vmatpush2.msra.mxu0 0.0
    %453 = vmatprep.subr.mxu0 0.0
    %454 = vmatpush2.msra.mxu0 0.0
    %455 = vmatprep.subr.mxu0 0.0
    %456 = vmatpush2.msra.mxu0 0.0
    %457 = vmatprep.subr.mxu0 0.0
    %458 = vmatpush2.msra.mxu0 0.0
    %459 = vmatprep.subr.mxu0 0.0
    %460 = vmatpush2.msra.mxu0 0.0
    %461 = vmatprep.subr.mxu0 0.0
    %462 = vmatpush2.msra.mxu0 0.0
    %463 = vmatprep.subr.mxu0 0.0
    %464 = vmatpush2.msra.mxu0 0.0
    %465 = vmatprep.subr.mxu0 0.0
    %466 = vmatpush2.msra.mxu0 0.0
    %467 = vmatprep.subr.mxu0 0.0
    %468 = vmatpush2.msra.mxu0 0.0
    %469 = vmatprep.subr.mxu0 0.0
    %470 = vmatpush2.msra.mxu0 0.0
    %471 = vmatprep.subr.mxu0 0.0
    %472 = vmatpush2.msra.mxu0 0.0
    %473 = vmatprep.subr.mxu0 0.0
    %474 = vmatpush2.msra.mxu0 0.0
    %475 = vmatprep.subr.mxu0 0.0
    %476 = vmatpush2.msra.mxu0 0.0
    %477 = vmatprep.mubr.f32.mxu0 0.0
    %478 = vmatmul.mubr.f32.gmra.mxu0 %v392
    %v479 = vpop.f32.mrf.mxu0
    %v480 = vadd.f32 0.0, %v479
    %v481 = vpop.f32.mrf.mxu0
    %482 = vmatprep.mubr.f32.mxu0 0.0
    %483 = vmatmul.mubr.f32.gmra.mxu0 %v393
    %v484 = vpop.f32.mrf.mxu0
    %v485 = vadd.f32 0.0, %v484
    %v486 = vpop.f32.mrf.mxu0
    %487 = vmatprep.mubr.f32.mxu0 0.0
    %488 = vmatmul.mubr.f32.gmra.mxu0 %v394
    %v489 = vpop.f32.mrf.mxu0
    %v490 = vadd.f32 0.0, %v489
    %v491 = vpop.f32.mrf.mxu0
    %492 = vmatprep.mubr.f32.mxu0 0.0
    %493 = vmatmul.mubr.f32.gmra.mxu0 %v395
    %v494 = vpop.f32.mrf.mxu0
    %v495 = vadd.f32 0.0, %v494
    %v496 = vpop.f32.mrf.mxu0
    %497 = vdwg.mxu0
    %v498 = vadd.f32 %v374, %v480
    %v499 = vadd.f32 %v379, %v485
    %v500 = vadd.f32 %v384, %v490
    %v501 = vadd.f32 %v389, %v495
    %v502 = vlaneseq
    %v503 = vshrl.u32 %v502, 7
    %v504 = vadd.s32 %v503, 8
    %v505 = vadd.s32 %v503, 16
    %v506 = vadd.s32 %v503, 24
    %vm507 = vcmp.lt.s32.totalorder %v503, 0
    %v508 = vsub.s32 0, %v503
    %v509 = vsel %vm507, %v508, %v503
    %v510 = vshrl.u32 %v509, 4
    %v511 = vand.u32 %v509, 15
    %v512 = vsub.s32 0, %v511
    %v513 = vsel %vm507, %v512, %v511
    %vm514 = vcmp.lt.s32.totalorder %v504, 0
    %v515 = vsub.s32 0, %v504
    %v516 = vsel %vm514, %v515, %v504
    %v517 = vshrl.u32 %v516, 4
    %v518 = vand.u32 %v516, 15
    %v519 = vsub.s32 0, %v518
    %v520 = vsel %vm514, %v519, %v518
    %vm521 = vcmp.lt.s32.totalorder %v505, 0
    %v522 = vsub.s32 0, %v505
    %v523 = vsel %vm521, %v522, %v505
    %v524 = vshrl.u32 %v523, 4
    %v525 = vand.u32 %v523, 15
    %v526 = vsub.s32 0, %v525
    %v527 = vsel %vm521, %v526, %v525
    %vm528 = vcmp.lt.s32.totalorder %v506, 0
    %v529 = vsub.s32 0, %v506
    %v530 = vsel %vm528, %v529, %v506
    %v531 = vshrl.u32 %v530, 4
    %v532 = vand.u32 %v530, 15
    %v533 = vsub.s32 0, %v532
    %v534 = vsel %vm528, %v533, %v532
    %vm535 = vcmp.ne.s32.totalorder %v513, 0
    %vm536 = vcmp.ne.s32.totalorder %v520, 0
    %vm537 = vcmp.ne.s32.totalorder %v527, 0
    %vm538 = vcmp.ne.s32.totalorder %v534, 0
    %vm539 = vcmp.lt.s32.totalorder %v513, 0
    %vm540 = vcmp.lt.s32.totalorder %v520, 0
    %vm541 = vcmp.lt.s32.totalorder %v527, 0
    %vm542 = vcmp.lt.s32.totalorder %v534, 0
    %vm543 = vmand %vm539, %vm535
    %vm544 = vmand %vm540, %vm536
    %vm545 = vmand %vm541, %vm537
    %vm546 = vmand %vm542, %vm538
    %v547 = vadd.s32 %v513, 16
    %v548 = vadd.s32 %v520, 16
    %v549 = vadd.s32 %v527, 16
    %v550 = vadd.s32 %v534, 16
    %v551 = vsel %vm543, %v547, %v513
    %v552 = vsel %vm544, %v548, %v520
    %v553 = vsel %vm545, %v549, %v527
    %v554 = vsel %vm546, %v550, %v534
    %vm555 = vcmp.lt.s32.totalorder %v551, 14
    %vm556 = vcmp.lt.s32.totalorder %v552, 14
    %vm557 = vcmp.lt.s32.totalorder %v553, 14
    %vm558 = vcmp.lt.s32.totalorder %v554, 14
    %v559 = vsel %vm555, %v498, 0.0
    %v560 = vsel %vm556, %v499, 0.0
    %v561 = vsel %vm557, %v500, 0.0
    %v562 = vsel %vm558, %v501, 0.0
    %v563 = vadd.f32 %v559, %v560
    %v564 = vadd.f32 %v563, %v561
    %v565 = vadd.f32 %v564, %v562
    %v566 = vrot.slane %v565, 4
    %v567 = vadd.f32 %v565, %v566
    %v568 = vrot.slane %v567, 2
    %v569 = vadd.f32 %v567, %v568
    %v570 = vrot.slane %v569, 1
    %v571 = vadd.f32 %v569, %v570
    %v572 = vmul.f32 %v559, %v559
    %v573 = vmul.f32 %v560, %v560
    %v574 = vmul.f32 %v561, %v561
    %v575 = vmul.f32 %v562, %v562
    %v576 = vadd.f32 %v572, %v573
    %v577 = vadd.f32 %v576, %v574
    %v578 = vadd.f32 %v577, %v575
    %v579 = vrot.slane %v578, 4
    %v580 = vadd.f32 %v578, %v579
    %v581 = vrot.slane %v580, 2
    %v582 = vadd.f32 %v580, %v581
    %v583 = vrot.slane %v582, 1
    %v584 = vadd.f32 %v582, %v583
    %v585 = vld [vmem:[#allocation9] sm:$0xff]
    %v586 = vld [vmem:[#allocation9 + $0x8] sm:$0xff]
    %v587 = vld [vmem:[#allocation9 + $0x10] sm:$0xff]
    %v588 = vld [vmem:[#allocation9 + $0x18] sm:$0xff]
    %v589 = vld [vmem:[#allocation9 + $0x20] sm:$0xff]
    %v590 = vld [vmem:[#allocation9 + $0x28] sm:$0xff]
    %v591 = vld [vmem:[#allocation9 + $0x30] sm:$0xff]
    %v592 = vld [vmem:[#allocation9 + $0x38] sm:$0xff]
    %v593 = vld [vmem:[#allocation9 + $0x40] sm:$0xff]
    %v594 = vld [vmem:[#allocation9 + $0x48] sm:$0xff]
    %v595 = vld [vmem:[#allocation9 + $0x50] sm:$0xff]
    %v596 = vld [vmem:[#allocation9 + $0x58] sm:$0xff]
    %v597 = vld [vmem:[#allocation9 + $0x60] sm:$0xff]
    %v598 = vld [vmem:[#allocation9 + $0x68] sm:$0xff]
    %v599 = vld [vmem:[#allocation9 + $0x70] sm:$0xff]
    %v600 = vld [vmem:[#allocation9 + $0x78] sm:$0xff]
    %601 = vmatprep.subr.mxu0 0.0
    %602 = vmatpush1.msra.mxu0 %v600
    %603 = vmatprep.subr.mxu0 0.0
    %604 = vmatpush1.msra.mxu0 %v599
    %605 = vmatprep.subr.mxu0 0.0
    %606 = vmatpush1.msra.mxu0 %v598
    %607 = vmatprep.subr.mxu0 0.0
    %608 = vmatpush1.msra.mxu0 %v597
    %609 = vmatprep.subr.mxu0 0.0
    %610 = vmatpush1.msra.mxu0 %v596
    %611 = vmatprep.subr.mxu0 0.0
    %612 = vmatpush1.msra.mxu0 %v595
    %613 = vmatprep.subr.mxu0 0.0
    %614 = vmatpush1.msra.mxu0 %v594
    %615 = vmatprep.subr.mxu0 0.0
    %616 = vmatpush1.msra.mxu0 %v593
    %617 = vmatprep.subr.mxu0 0.0
    %618 = vmatpush1.msra.mxu0 %v592
    %619 = vmatprep.subr.mxu0 0.0
    %620 = vmatpush1.msra.mxu0 %v591
    %621 = vmatprep.subr.mxu0 0.0
    %622 = vmatpush1.msra.mxu0 %v590
    %623 = vmatprep.subr.mxu0 0.0
    %624 = vmatpush1.msra.mxu0 %v589
    %625 = vmatprep.subr.mxu0 0.0
    %626 = vmatpush1.msra.mxu0 %v588
    %627 = vmatprep.subr.mxu0 0.0
    %628 = vmatpush1.msra.mxu0 %v587
    %629 = vmatprep.subr.mxu0 0.0
    %630 = vmatpush1.msra.mxu0 %v586
    %631 = vmatprep.subr.mxu0 0.0
    %632 = vmatpush1.msra.mxu0 %v585
    %633 = vmatprep.subr.mxu0 0.0
    %634 = vmatpush2.msra.mxu0 0.0
    %635 = vmatprep.subr.mxu0 0.0
    %636 = vmatpush2.msra.mxu0 0.0
    %637 = vmatprep.subr.mxu0 0.0
    %638 = vmatpush2.msra.mxu0 0.0
    %639 = vmatprep.subr.mxu0 0.0
    %640 = vmatpush2.msra.mxu0 0.0
    %641 = vmatprep.subr.mxu0 0.0
    %642 = vmatpush2.msra.mxu0 0.0
    %643 = vmatprep.subr.mxu0 0.0
    %644 = vmatpush2.msra.mxu0 0.0
    %645 = vmatprep.subr.mxu0 0.0
    %646 = vmatpush2.msra.mxu0 0.0
    %647 = vmatprep.subr.mxu0 0.0
    %648 = vmatpush2.msra.mxu0 0.0
    %649 = vmatprep.subr.mxu0 0.0
    %650 = vmatpush2.msra.mxu0 0.0
    %651 = vmatprep.subr.mxu0 0.0
    %652 = vmatpush2.msra.mxu0 0.0
    %653 = vmatprep.subr.mxu0 0.0
    %654 = vmatpush2.msra.mxu0 0.0
    %655 = vmatprep.subr.mxu0 0.0
    %656 = vmatpush2.msra.mxu0 0.0
    %657 = vmatprep.subr.mxu0 0.0
    %658 = vmatpush2.msra.mxu0 0.0
    %659 = vmatprep.subr.mxu0 0.0
    %660 = vmatpush2.msra.mxu0 0.0
    %661 = vmatprep.subr.mxu0 0.0
    %662 = vmatpush2.msra.mxu0 0.0
    %663 = vmatprep.subr.mxu0 0.0
    %664 = vmatpush2.msra.mxu0 0.0
    %665 = vmatprep.mubr.f32.mxu0 0.0
    %666 = vmatmul.mubr.f32.gmra.mxu0 %v571
    %v667 = vpop.f32.mrf.mxu0
    %v668 = vadd.f32 0.0, %v667
    %v669 = vpop.f32.mrf.mxu0
    %670 = vdwg.mxu0
    %671 = vmatprep.subr.mxu0 0.0
    %672 = vmatpush1.msra.mxu0 %v600
    %673 = vmatprep.subr.mxu0 0.0
    %674 = vmatpush1.msra.mxu0 %v599
    %675 = vmatprep.subr.mxu0 0.0
    %676 = vmatpush1.msra.mxu0 %v598
    %677 = vmatprep.subr.mxu0 0.0
    %678 = vmatpush1.msra.mxu0 %v597
    %679 = vmatprep.subr.mxu0 0.0
    %680 = vmatpush1.msra.mxu0 %v596
    %681 = vmatprep.subr.mxu0 0.0
    %682 = vmatpush1.msra.mxu0 %v595
    %683 = vmatprep.subr.mxu0 0.0
    %684 = vmatpush1.msra.mxu0 %v594
    %685 = vmatprep.subr.mxu0 0.0
    %686 = vmatpush1.msra.mxu0 %v593
    %687 = vmatprep.subr.mxu0 0.0
    %688 = vmatpush1.msra.mxu0 %v592
    %689 = vmatprep.subr.mxu0 0.0
    %690 = vmatpush1.msra.mxu0 %v591
    %691 = vmatprep.subr.mxu0 0.0
    %692 = vmatpush1.msra.mxu0 %v590
    %693 = vmatprep.subr.mxu0 0.0
    %694 = vmatpush1.msra.mxu0 %v589
    %695 = vmatprep.subr.mxu0 0.0
    %696 = vmatpush1.msra.mxu0 %v588
    %697 = vmatprep.subr.mxu0 0.0
    %698 = vmatpush1.msra.mxu0 %v587
    %699 = vmatprep.subr.mxu0 0.0
    %700 = vmatpush1.msra.mxu0 %v586
    %701 = vmatprep.subr.mxu0 0.0
    %702 = vmatpush1.msra.mxu0 %v585
    %703 = vmatprep.subr.mxu0 0.0
    %704 = vmatpush2.msra.mxu0 0.0
    %705 = vmatprep.subr.mxu0 0.0
    %706 = vmatpush2.msra.mxu0 0.0
    %707 = vmatprep.subr.mxu0 0.0
    %708 = vmatpush2.msra.mxu0 0.0
    %709 = vmatprep.subr.mxu0 0.0
    %710 = vmatpush2.msra.mxu0 0.0
    %711 = vmatprep.subr.mxu0 0.0
    %712 = vmatpush2.msra.mxu0 0.0
    %713 = vmatprep.subr.mxu0 0.0
    %714 = vmatpush2.msra.mxu0 0.0
    %715 = vmatprep.subr.mxu0 0.0
    %716 = vmatpush2.msra.mxu0 0.0
    %717 = vmatprep.subr.mxu0 0.0
    %718 = vmatpush2.msra.mxu0 0.0
    %719 = vmatprep.subr.mxu0 0.0
    %720 = vmatpush2.msra.mxu0 0.0
    %721 = vmatprep.subr.mxu0 0.0
    %722 = vmatpush2.msra.mxu0 0.0
    %723 = vmatprep.subr.mxu0 0.0
    %724 = vmatpush2.msra.mxu0 0.0
    %725 = vmatprep.subr.mxu0 0.0
    %726 = vmatpush2.msra.mxu0 0.0
    %727 = vmatprep.subr.mxu0 0.0
    %728 = vmatpush2.msra.mxu0 0.0
    %729 = vmatprep.subr.mxu0 0.0
    %730 = vmatpush2.msra.mxu0 0.0
    %731 = vmatprep.subr.mxu0 0.0
    %732 = vmatpush2.msra.mxu0 0.0
    %733 = vmatprep.subr.mxu0 0.0
    %734 = vmatpush2.msra.mxu0 0.0
    %735 = vmatprep.mubr.f32.mxu0 0.0
    %736 = vmatmul.mubr.f32.gmra.mxu0 %v584
    %v737 = vpop.f32.mrf.mxu0
    %v738 = vadd.f32 0.0, %v737
    %v739 = vpop.f32.mrf.mxu0
    %740 = vdwg.mxu0
    %v741 = vmul.f32 %v668, 0.0025510204
    %v742 = vmul.f32 %v738, 0.0025510204
    %v743 = vmul.f32 %v741, %v741
    %v744 = vsub.f32 %v742, %v743
    %v745 = vld [vmem:[%s4] sm:$0x1]
    %v746 = vadd.f32 %v744, 1e-05
    %v747 = vrsqrt.pop %v746
    %v748 = vmul.f32 %v745, %v747
    %v749 = vld [vmem:[%s4 + $0x1] sm:$0x1]
    %v750 = vmul.f32 %v741, %v748
    %v751 = vsub.f32 %v749, %v750
    %v752 = vld [vmem:[#allocation10] sm:$0xff]
    %v753 = vld [vmem:[#allocation10 + $0x8] sm:$0xff]
    %v754 = vld [vmem:[#allocation10 + $0x10] sm:$0xff]
    %v755 = vld [vmem:[#allocation10 + $0x18] sm:$0xff]
    %v756 = vld [vmem:[#allocation10 + $0x20] sm:$0xff]
    %v757 = vld [vmem:[#allocation10 + $0x28] sm:$0xff]
    %v758 = vld [vmem:[#allocation10 + $0x30] sm:$0xff]
    %v759 = vld [vmem:[#allocation10 + $0x38] sm:$0xff]
    %v760 = vld [vmem:[#allocation10 + $0x40] sm:$0xff]
    %v761 = vld [vmem:[#allocation10 + $0x48] sm:$0xff]
    %v762 = vld [vmem:[#allocation10 + $0x50] sm:$0xff]
    %v763 = vld [vmem:[#allocation10 + $0x58] sm:$0xff]
    %v764 = vld [vmem:[#allocation10 + $0x60] sm:$0xff]
    %v765 = vld [vmem:[#allocation10 + $0x68] sm:$0xff]
    %v766 = vld [vmem:[#allocation10 + $0x70] sm:$0xff]
    %v767 = vld [vmem:[#allocation10 + $0x78] sm:$0xff]
    %768 = vmatprep.subr.mxu0 0.0
    %769 = vmatpush1.msra.mxu0 %v767
    %770 = vmatprep.subr.mxu0 0.0
    %771 = vmatpush1.msra.mxu0 %v766
    %772 = vmatprep.subr.mxu0 0.0
    %773 = vmatpush1.msra.mxu0 %v765
    %774 = vmatprep.subr.mxu0 0.0
    %775 = vmatpush1.msra.mxu0 %v764
    %776 = vmatprep.subr.mxu0 0.0
    %777 = vmatpush1.msra.mxu0 %v763
    %778 = vmatprep.subr.mxu0 0.0
    %779 = vmatpush1.msra.mxu0 %v762
    %780 = vmatprep.subr.mxu0 0.0
    %781 = vmatpush1.msra.mxu0 %v761
    %782 = vmatprep.subr.mxu0 0.0
    %783 = vmatpush1.msra.mxu0 %v760
    %784 = vmatprep.subr.mxu0 0.0
    %785 = vmatpush1.msra.mxu0 %v759
    %786 = vmatprep.subr.mxu0 0.0
    %787 = vmatpush1.msra.mxu0 %v758
    %788 = vmatprep.subr.mxu0 0.0
    %789 = vmatpush1.msra.mxu0 %v757
    %790 = vmatprep.subr.mxu0 0.0
    %791 = vmatpush1.msra.mxu0 %v756
    %792 = vmatprep.subr.mxu0 0.0
    %793 = vmatpush1.msra.mxu0 %v755
    %794 = vmatprep.subr.mxu0 0.0
    %795 = vmatpush1.msra.mxu0 %v754
    %796 = vmatprep.subr.mxu0 0.0
    %797 = vmatpush1.msra.mxu0 %v753
    %798 = vmatprep.subr.mxu0 0.0
    %799 = vmatpush1.msra.mxu0 %v752
    %800 = vmatprep.subr.mxu0 0.0
    %801 = vmatpush2.msra.mxu0 0.0
    %802 = vmatprep.subr.mxu0 0.0
    %803 = vmatpush2.msra.mxu0 0.0
    %804 = vmatprep.subr.mxu0 0.0
    %805 = vmatpush2.msra.mxu0 0.0
    %806 = vmatprep.subr.mxu0 0.0
    %807 = vmatpush2.msra.mxu0 0.0
    %808 = vmatprep.subr.mxu0 0.0
    %809 = vmatpush2.msra.mxu0 0.0
    %810 = vmatprep.subr.mxu0 0.0
    %811 = vmatpush2.msra.mxu0 0.0
    %812 = vmatprep.subr.mxu0 0.0
    %813 = vmatpush2.msra.mxu0 0.0
    %814 = vmatprep.subr.mxu0 0.0
    %815 = vmatpush2.msra.mxu0 0.0
    %816 = vmatprep.subr.mxu0 0.0
    %817 = vmatpush2.msra.mxu0 0.0
    %818 = vmatprep.subr.mxu0 0.0
    %819 = vmatpush2.msra.mxu0 0.0
    %820 = vmatprep.subr.mxu0 0.0
    %821 = vmatpush2.msra.mxu0 0.0
    %822 = vmatprep.subr.mxu0 0.0
    %823 = vmatpush2.msra.mxu0 0.0
    %824 = vmatprep.subr.mxu0 0.0
    %825 = vmatpush2.msra.mxu0 0.0
    %826 = vmatprep.subr.mxu0 0.0
    %827 = vmatpush2.msra.mxu0 0.0
    %828 = vmatprep.subr.mxu0 0.0
    %829 = vmatpush2.msra.mxu0 0.0
    %830 = vmatprep.subr.mxu0 0.0
    %831 = vmatpush2.msra.mxu0 0.0
    %832 = vmatprep.mubr.f32.mxu0 0.0
    %833 = vmatmul.mubr.f32.gmra.mxu0 %v748
    %v834 = vpop.f32.mrf.mxu0
    %v835 = vadd.f32 0.0, %v834
    %v836 = vpop.f32.mrf.mxu0
    %837 = vdwg.mxu0
    %838 = vmatprep.subr.mxu0 0.0
    %839 = vmatpush1.msra.mxu0 %v767
    %840 = vmatprep.subr.mxu0 0.0
    %841 = vmatpush1.msra.mxu0 %v766
    %842 = vmatprep.subr.mxu0 0.0
    %843 = vmatpush1.msra.mxu0 %v765
    %844 = vmatprep.subr.mxu0 0.0
    %845 = vmatpush1.msra.mxu0 %v764
    %846 = vmatprep.subr.mxu0 0.0
    %847 = vmatpush1.msra.mxu0 %v763
    %848 = vmatprep.subr.mxu0 0.0
    %849 = vmatpush1.msra.mxu0 %v762
    %850 = vmatprep.subr.mxu0 0.0
    %851 = vmatpush1.msra.mxu0 %v761
    %852 = vmatprep.subr.mxu0 0.0
    %853 = vmatpush1.msra.mxu0 %v760
    %854 = vmatprep.subr.mxu0 0.0
    %855 = vmatpush1.msra.mxu0 %v759
    %856 = vmatprep.subr.mxu0 0.0
    %857 = vmatpush1.msra.mxu0 %v758
    %858 = vmatprep.subr.mxu0 0.0
    %859 = vmatpush1.msra.mxu0 %v757
    %860 = vmatprep.subr.mxu0 0.0
    %861 = vmatpush1.msra.mxu0 %v756
    %862 = vmatprep.subr.mxu0 0.0
    %863 = vmatpush1.msra.mxu0 %v755
    %864 = vmatprep.subr.mxu0 0.0
    %865 = vmatpush1.msra.mxu0 %v754
    %866 = vmatprep.subr.mxu0 0.0
    %867 = vmatpush1.msra.mxu0 %v753
    %868 = vmatprep.subr.mxu0 0.0
    %869 = vmatpush1.msra.mxu0 %v752
    %870 = vmatprep.subr.mxu0 0.0
    %871 = vmatpush2.msra.mxu0 0.0
    %872 = vmatprep.subr.mxu0 0.0
    %873 = vmatpush2.msra.mxu0 0.0
    %874 = vmatprep.subr.mxu0 0.0
    %875 = vmatpush2.msra.mxu0 0.0
    %876 = vmatprep.subr.mxu0 0.0
    %877 = vmatpush2.msra.mxu0 0.0
    %878 = vmatprep.subr.mxu0 0.0
    %879 = vmatpush2.msra.mxu0 0.0
    %880 = vmatprep.subr.mxu0 0.0
    %881 = vmatpush2.msra.mxu0 0.0
    %882 = vmatprep.subr.mxu0 0.0
    %883 = vmatpush2.msra.mxu0 0.0
    %884 = vmatprep.subr.mxu0 0.0
    %885 = vmatpush2.msra.mxu0 0.0
    %886 = vmatprep.subr.mxu0 0.0
    %887 = vmatpush2.msra.mxu0 0.0
    %888 = vmatprep.subr.mxu0 0.0
    %889 = vmatpush2.msra.mxu0 0.0
    %890 = vmatprep.subr.mxu0 0.0
    %891 = vmatpush2.msra.mxu0 0.0
    %892 = vmatprep.subr.mxu0 0.0
    %893 = vmatpush2.msra.mxu0 0.0
    %894 = vmatprep.subr.mxu0 0.0
    %895 = vmatpush2.msra.mxu0 0.0
    %896 = vmatprep.subr.mxu0 0.0
    %897 = vmatpush2.msra.mxu0 0.0
    %898 = vmatprep.subr.mxu0 0.0
    %899 = vmatpush2.msra.mxu0 0.0
    %900 = vmatprep.subr.mxu0 0.0
    %901 = vmatpush2.msra.mxu0 0.0
    %902 = vmatprep.mubr.f32.mxu0 0.0
    %903 = vmatmul.mubr.f32.gmra.mxu0 %v751
    %v904 = vpop.f32.mrf.mxu0
    %v905 = vadd.f32 0.0, %v904
    %v906 = vpop.f32.mrf.mxu0
    %907 = vdwg.mxu0
    %v908 = vlaneseq
    %v909 = vshrl.u32 %v908, 7
    %v910 = vsub.s32 0, %v909
    %v911 = vrot.slane %v835, %v910
    %v912 = vmul.f32 %v498, %v911
    %v913 = vmul.f32 %v499, %v911
    %v914 = vmul.f32 %v500, %v911
    %v915 = vmul.f32 %v501, %v911
    %v916 = vlaneseq
    %v917 = vshrl.u32 %v916, 7
    %v918 = vsub.s32 0, %v917
    %v919 = vrot.slane %v905, %v918
    %v920 = vadd.f32 %v912, %v919
    %v921 = vadd.f32 %v913, %v919
    %v922 = vadd.f32 %v914, %v919
    %v923 = vadd.f32 %v915, %v919
    %v924 = vmax.f32 %v920, 0.0
    %v925 = vmax.f32 %v921, 0.0
    %v926 = vmax.f32 %v922, 0.0
    %v927 = vmax.f32 %v923, 0.0
    %928 = vst [vmem:[#allocation2] sm:$0xff] %v924
    %929 = vst [vmem:[#allocation2 + $0x8] sm:$0xff] %v925
    %930 = vst [vmem:[#allocation2 + $0x10] sm:$0xff] %v926
    %931 = vst [vmem:[#allocation2 + $0x18] sm:$0xff] %v927
    %v932 = vld [vmem:[#allocation2] sm:$0xff]
    %v933 = vld [vmem:[#allocation2 + $0x8] sm:$0xff]
    %v934 = vld [vmem:[#allocation2 + $0x10] sm:$0xff]
    %v935 = vld [vmem:[#allocation2 + $0x18] sm:$0xff]
    %v936 = vld [vmem:[#allocation12] sm:$0xff]
    %v937 = vld [vmem:[#allocation12 + $0x8] sm:$0xff]
    %v938 = vld [vmem:[#allocation12 + $0x10] sm:$0xff]
    %v939 = vld [vmem:[#allocation12 + $0x18] sm:$0xff]
    %v940 = vld [vmem:[#allocation12 + $0x20] sm:$0xff]
    %v941 = vld [vmem:[#allocation12 + $0x28] sm:$0xff]
    %v942 = vld [vmem:[#allocation12 + $0x30] sm:$0xff]
    %v943 = vld [vmem:[#allocation12 + $0x38] sm:$0xff]
    %v944 = vld [vmem:[#allocation12 + $0x40] sm:$0xff]
    %v945 = vld [vmem:[#allocation12 + $0x48] sm:$0xff]
    %v946 = vld [vmem:[#allocation12 + $0x50] sm:$0xff]
    %v947 = vld [vmem:[#allocation12 + $0x58] sm:$0xff]
    %v948 = vld [vmem:[#allocation12 + $0x60] sm:$0xff]
    %v949 = vld [vmem:[#allocation12 + $0x68] sm:$0xff]
    %v950 = vld [vmem:[#allocation12 + $0x70] sm:$0xff]
    %v951 = vld [vmem:[#allocation12 + $0x78] sm:$0xff]
    %v952 = vld [vmem:[#allocation2 + $0x1] sm:$0xff]
    %v953 = vld [vmem:[#allocation2 + $0x9] sm:$0xff]
    %v954 = vld [vmem:[#allocation2 + $0x11] sm:$0xff]
    %v955 = vld [vmem:[#allocation2 + $0x19] sm:$0xff]
    %s956 = scalar_lea.vmem [#allocation12], 128
    %v957 = vld [vmem:[%s956] sm:$0xff]
    %v958 = vld [vmem:[%s956 + $0x8] sm:$0xff]
    %v959 = vld [vmem:[%s956 + $0x10] sm:$0xff]
    %v960 = vld [vmem:[%s956 + $0x18] sm:$0xff]
    %v961 = vld [vmem:[%s956 + $0x20] sm:$0xff]
    %v962 = vld [vmem:[%s956 + $0x28] sm:$0xff]
    %v963 = vld [vmem:[%s956 + $0x30] sm:$0xff]
    %v964 = vld [vmem:[%s956 + $0x38] sm:$0xff]
    %v965 = vld [vmem:[%s956 + $0x40] sm:$0xff]
    %v966 = vld [vmem:[%s956 + $0x48] sm:$0xff]
    %v967 = vld [vmem:[%s956 + $0x50] sm:$0xff]
    %v968 = vld [vmem:[%s956 + $0x58] sm:$0xff]
    %v969 = vld [vmem:[%s956 + $0x60] sm:$0xff]
    %v970 = vld [vmem:[%s956 + $0x68] sm:$0xff]
    %v971 = vld [vmem:[%s956 + $0x70] sm:$0xff]
    %v972 = vld [vmem:[%s956 + $0x78] sm:$0xff]
    %973 = vmatprep.subr.mxu0 0.0
    %974 = vmatpush1.msra.mxu0 %v972
    %975 = vmatprep.subr.mxu0 0.0
    %976 = vmatpush1.msra.mxu0 %v971
    %977 = vmatprep.subr.mxu0 0.0
    %978 = vmatpush1.msra.mxu0 %v970
    %979 = vmatprep.subr.mxu0 0.0
    %980 = vmatpush1.msra.mxu0 %v969
    %981 = vmatprep.subr.mxu0 0.0
    %982 = vmatpush1.msra.mxu0 %v968
    %983 = vmatprep.subr.mxu0 0.0
    %984 = vmatpush1.msra.mxu0 %v967
    %985 = vmatprep.subr.mxu0 0.0
    %986 = vmatpush1.msra.mxu0 %v966
    %987 = vmatprep.subr.mxu0 0.0
    %988 = vmatpush1.msra.mxu0 %v965
    %989 = vmatprep.subr.mxu0 0.0
    %990 = vmatpush1.msra.mxu0 %v964
    %991 = vmatprep.subr.mxu0 0.0
    %992 = vmatpush1.msra.mxu0 %v963
    %993 = vmatprep.subr.mxu0 0.0
    %994 = vmatpush1.msra.mxu0 %v962
    %995 = vmatprep.subr.mxu0 0.0
    %996 = vmatpush1.msra.mxu0 %v961
    %997 = vmatprep.subr.mxu0 0.0
    %998 = vmatpush1.msra.mxu0 %v960
    %999 = vmatprep.subr.mxu0 0.0
    %1000 = vmatpush1.msra.mxu0 %v959
    %1001 = vmatprep.subr.mxu0 0.0
    %1002 = vmatpush1.msra.mxu0 %v958
    %1003 = vmatprep.subr.mxu0 0.0
    %1004 = vmatpush1.msra.mxu0 %v957
    %1005 = vmatprep.subr.mxu0 0.0
    %1006 = vmatpush2.msra.mxu0 0.0
    %1007 = vmatprep.subr.mxu0 0.0
    %1008 = vmatpush2.msra.mxu0 0.0
    %1009 = vmatprep.subr.mxu0 0.0
    %1010 = vmatpush2.msra.mxu0 0.0
    %1011 = vmatprep.subr.mxu0 0.0
    %1012 = vmatpush2.msra.mxu0 0.0
    %1013 = vmatprep.subr.mxu0 0.0
    %1014 = vmatpush2.msra.mxu0 0.0
    %1015 = vmatprep.subr.mxu0 0.0
    %1016 = vmatpush2.msra.mxu0 0.0
    %1017 = vmatprep.subr.mxu0 0.0
    %1018 = vmatpush2.msra.mxu0 0.0
    %1019 = vmatprep.subr.mxu0 0.0
    %1020 = vmatpush2.msra.mxu0 0.0
    %1021 = vmatprep.subr.mxu0 0.0
    %1022 = vmatpush2.msra.mxu0 0.0
    %1023 = vmatprep.subr.mxu0 0.0
    %1024 = vmatpush2.msra.mxu0 0.0
    %1025 = vmatprep.subr.mxu0 0.0
    %1026 = vmatpush2.msra.mxu0 0.0
    %1027 = vmatprep.subr.mxu0 0.0
    %1028 = vmatpush2.msra.mxu0 0.0
    %1029 = vmatprep.subr.mxu0 0.0
    %1030 = vmatpush2.msra.mxu0 0.0
    %1031 = vmatprep.subr.mxu0 0.0
    %1032 = vmatpush2.msra.mxu0 0.0
    %1033 = vmatprep.subr.mxu0 0.0
    %1034 = vmatpush2.msra.mxu0 0.0
    %1035 = vmatprep.subr.mxu0 0.0
    %1036 = vmatpush2.msra.mxu0 0.0
    %1037 = vmatprep.mubr.f32.mxu0 0.0
    %1038 = vmatmul.mubr.f32.gmra.mxu0 %v952
    %v1039 = vpop.f32.mrf.mxu0
    %v1040 = vadd.f32 0.0, %v1039
    %v1041 = vpop.f32.mrf.mxu0
    %1042 = vmatprep.mubr.f32.mxu0 0.0
    %1043 = vmatmul.mubr.f32.gmra.mxu0 %v953
    %v1044 = vpop.f32.mrf.mxu0
    %v1045 = vadd.f32 0.0, %v1044
    %v1046 = vpop.f32.mrf.mxu0
    %1047 = vmatprep.mubr.f32.mxu0 0.0
    %1048 = vmatmul.mubr.f32.gmra.mxu0 %v954
    %v1049 = vpop.f32.mrf.mxu0
    %v1050 = vadd.f32 0.0, %v1049
    %v1051 = vpop.f32.mrf.mxu0
    %1052 = vmatprep.mubr.f32.mxu0 0.0
    %1053 = vmatmul.mubr.f32.gmra.mxu0 %v955
    %v1054 = vpop.f32.mrf.mxu0
    %v1055 = vadd.f32 0.0, %v1054
    %v1056 = vpop.f32.mrf.mxu0
    %1057 = vdwg.mxu0
    %1058 = vmatprep.subr.mxu0 0.0
    %1059 = vmatpush1.msra.mxu0 %v951
    %1060 = vmatprep.subr.mxu0 0.0
    %1061 = vmatpush1.msra.mxu0 %v950
    %1062 = vmatprep.subr.mxu0 0.0
    %1063 = vmatpush1.msra.mxu0 %v949
    %1064 = vmatprep.subr.mxu0 0.0
    %1065 = vmatpush1.msra.mxu0 %v948
    %1066 = vmatprep.subr.mxu0 0.0
    %1067 = vmatpush1.msra.mxu0 %v947
    %1068 = vmatprep.subr.mxu0 0.0
    %1069 = vmatpush1.msra.mxu0 %v946
    %1070 = vmatprep.subr.mxu0 0.0
    %1071 = vmatpush1.msra.mxu0 %v945
    %1072 = vmatprep.subr.mxu0 0.0
    %1073 = vmatpush1.msra.mxu0 %v944
    %1074 = vmatprep.subr.mxu0 0.0
    %1075 = vmatpush1.msra.mxu0 %v943
    %1076 = vmatprep.subr.mxu0 0.0
    %1077 = vmatpush1.msra.mxu0 %v942
    %1078 = vmatprep.subr.mxu0 0.0
    %1079 = vmatpush1.msra.mxu0 %v941
    %1080 = vmatprep.subr.mxu0 0.0
    %1081 = vmatpush1.msra.mxu0 %v940
    %1082 = vmatprep.subr.mxu0 0.0
    %1083 = vmatpush1.msra.mxu0 %v939
    %1084 = vmatprep.subr.mxu0 0.0
    %1085 = vmatpush1.msra.mxu0 %v938
    %1086 = vmatprep.subr.mxu0 0.0
    %1087 = vmatpush1.msra.mxu0 %v937
    %1088 = vmatprep.subr.mxu0 0.0
    %1089 = vmatpush1.msra.mxu0 %v936
    %1090 = vmatprep.subr.mxu0 0.0
    %1091 = vmatpush2.msra.mxu0 0.0
    %1092 = vmatprep.subr.mxu0 0.0
    %1093 = vmatpush2.msra.mxu0 0.0
    %1094 = vmatprep.subr.mxu0 0.0
    %1095 = vmatpush2.msra.mxu0 0.0
    %1096 = vmatprep.subr.mxu0 0.0
    %1097 = vmatpush2.msra.mxu0 0.0
    %1098 = vmatprep.subr.mxu0 0.0
    %1099 = vmatpush2.msra.mxu0 0.0
    %1100 = vmatprep.subr.mxu0 0.0
    %1101 = vmatpush2.msra.mxu0 0.0
    %1102 = vmatprep.subr.mxu0 0.0
    %1103 = vmatpush2.msra.mxu0 0.0
    %1104 = vmatprep.subr.mxu0 0.0
    %1105 = vmatpush2.msra.mxu0 0.0
    %1106 = vmatprep.subr.mxu0 0.0
    %1107 = vmatpush2.msra.mxu0 0.0
    %1108 = vmatprep.subr.mxu0 0.0
    %1109 = vmatpush2.msra.mxu0 0.0
    %1110 = vmatprep.subr.mxu0 0.0
    %1111 = vmatpush2.msra.mxu0 0.0
    %1112 = vmatprep.subr.mxu0 0.0
    %1113 = vmatpush2.msra.mxu0 0.0
    %1114 = vmatprep.subr.mxu0 0.0
    %1115 = vmatpush2.msra.mxu0 0.0
    %1116 = vmatprep.subr.mxu0 0.0
    %1117 = vmatpush2.msra.mxu0 0.0
    %1118 = vmatprep.subr.mxu0 0.0
    %1119 = vmatpush2.msra.mxu0 0.0
    %1120 = vmatprep.subr.mxu0 0.0
    %1121 = vmatpush2.msra.mxu0 0.0
    %1122 = vmatprep.mubr.f32.mxu0 0.0
    %1123 = vmatmul.mubr.f32.gmra.mxu0 %v932
    %v1124 = vpop.f32.mrf.mxu0
    %v1125 = vadd.f32 %v1040, %v1124
    %v1126 = vpop.f32.mrf.mxu0
    %1127 = vmatprep.mubr.f32.mxu0 0.0
    %1128 = vmatmul.mubr.f32.gmra.mxu0 %v933
    %v1129 = vpop.f32.mrf.mxu0
    %v1130 = vadd.f32 %v1045, %v1129
    %v1131 = vpop.f32.mrf.mxu0
    %1132 = vmatprep.mubr.f32.mxu0 0.0
    %1133 = vmatmul.mubr.f32.gmra.mxu0 %v934
    %v1134 = vpop.f32.mrf.mxu0
    %v1135 = vadd.f32 %v1050, %v1134
    %v1136 = vpop.f32.mrf.mxu0
    %1137 = vmatprep.mubr.f32.mxu0 0.0
    %1138 = vmatmul.mubr.f32.gmra.mxu0 %v935
    %v1139 = vpop.f32.mrf.mxu0
    %v1140 = vadd.f32 %v1055, %v1139
    %v1141 = vpop.f32.mrf.mxu0
    %1142 = vdwg.mxu0
    %v1143 = vld [vmem:[#allocation2 + $0x2] sm:$0xff]
    %v1144 = vld [vmem:[#allocation2 + $0xa] sm:$0xff]
    %v1145 = vld [vmem:[#allocation2 + $0x12] sm:$0xff]
    %v1146 = vld [vmem:[#allocation2 + $0x1a] sm:$0xff]
    %s1147 = scalar_lea.vmem [#allocation12], 256
    %v1148 = vld [vmem:[%s1147] sm:$0xff]
    %v1149 = vld [vmem:[%s1147 + $0x8] sm:$0xff]
    %v1150 = vld [vmem:[%s1147 + $0x10] sm:$0xff]
    %v1151 = vld [vmem:[%s1147 + $0x18] sm:$0xff]
    %v1152 = vld [vmem:[%s1147 + $0x20] sm:$0xff]
    %v1153 = vld [vmem:[%s1147 + $0x28] sm:$0xff]
    %v1154 = vld [vmem:[%s1147 + $0x30] sm:$0xff]
    %v1155 = vld [vmem:[%s1147 + $0x38] sm:$0xff]
    %v1156 = vld [vmem:[%s1147 + $0x40] sm:$0xff]
    %v1157 = vld [vmem:[%s1147 + $0x48] sm:$0xff]
    %v1158 = vld [vmem:[%s1147 + $0x50] sm:$0xff]
    %v1159 = vld [vmem:[%s1147 + $0x58] sm:$0xff]
    %v1160 = vld [vmem:[%s1147 + $0x60] sm:$0xff]
    %v1161 = vld [vmem:[%s1147 + $0x68] sm:$0xff]
    %v1162 = vld [vmem:[%s1147 + $0x70] sm:$0xff]
    %v1163 = vld [vmem:[%s1147 + $0x78] sm:$0xff]
    %1164 = vmatprep.subr.mxu0 0.0
    %1165 = vmatpush1.msra.mxu0 %v1163
    %1166 = vmatprep.subr.mxu0 0.0
    %1167 = vmatpush1.msra.mxu0 %v1162
    %1168 = vmatprep.subr.mxu0 0.0
    %1169 = vmatpush1.msra.mxu0 %v1161
    %1170 = vmatprep.subr.mxu0 0.0
    %1171 = vmatpush1.msra.mxu0 %v1160
    %1172 = vmatprep.subr.mxu0 0.0
    %1173 = vmatpush1.msra.mxu0 %v1159
    %1174 = vmatprep.subr.mxu0 0.0
    %1175 = vmatpush1.msra.mxu0 %v1158
    %1176 = vmatprep.subr.mxu0 0.0
    %1177 = vmatpush1.msra.mxu0 %v1157
    %1178 = vmatprep.subr.mxu0 0.0
    %1179 = vmatpush1.msra.mxu0 %v1156
    %1180 = vmatprep.subr.mxu0 0.0
    %1181 = vmatpush1.msra.mxu0 %v1155
    %1182 = vmatprep.subr.mxu0 0.0
    %1183 = vmatpush1.msra.mxu0 %v1154
    %1184 = vmatprep.subr.mxu0 0.0
    %1185 = vmatpush1.msra.mxu0 %v1153
    %1186 = vmatprep.subr.mxu0 0.0
    %1187 = vmatpush1.msra.mxu0 %v1152
    %1188 = vmatprep.subr.mxu0 0.0
    %1189 = vmatpush1.msra.mxu0 %v1151
    %1190 = vmatprep.subr.mxu0 0.0
    %1191 = vmatpush1.msra.mxu0 %v1150
    %1192 = vmatprep.subr.mxu0 0.0
    %1193 = vmatpush1.msra.mxu0 %v1149
    %1194 = vmatprep.subr.mxu0 0.0
    %1195 = vmatpush1.msra.mxu0 %v1148
    %1196 = vmatprep.subr.mxu0 0.0
    %1197 = vmatpush2.msra.mxu0 0.0
    %1198 = vmatprep.subr.mxu0 0.0
    %1199 = vmatpush2.msra.mxu0 0.0
    %1200 = vmatprep.subr.mxu0 0.0
    %1201 = vmatpush2.msra.mxu0 0.0
    %1202 = vmatprep.subr.mxu0 0.0
    %1203 = vmatpush2.msra.mxu0 0.0
    %1204 = vmatprep.subr.mxu0 0.0
    %1205 = vmatpush2.msra.mxu0 0.0
    %1206 = vmatprep.subr.mxu0 0.0
    %1207 = vmatpush2.msra.mxu0 0.0
    %1208 = vmatprep.subr.mxu0 0.0
    %1209 = vmatpush2.msra.mxu0 0.0
    %1210 = vmatprep.subr.mxu0 0.0
    %1211 = vmatpush2.msra.mxu0 0.0
    %1212 = vmatprep.subr.mxu0 0.0
    %1213 = vmatpush2.msra.mxu0 0.0
    %1214 = vmatprep.subr.mxu0 0.0
    %1215 = vmatpush2.msra.mxu0 0.0
    %1216 = vmatprep.subr.mxu0 0.0
    %1217 = vmatpush2.msra.mxu0 0.0
    %1218 = vmatprep.subr.mxu0 0.0
    %1219 = vmatpush2.msra.mxu0 0.0
    %1220 = vmatprep.subr.mxu0 0.0
    %1221 = vmatpush2.msra.mxu0 0.0
    %1222 = vmatprep.subr.mxu0 0.0
    %1223 = vmatpush2.msra.mxu0 0.0
    %1224 = vmatprep.subr.mxu0 0.0
    %1225 = vmatpush2.msra.mxu0 0.0
    %1226 = vmatprep.subr.mxu0 0.0
    %1227 = vmatpush2.msra.mxu0 0.0
    %1228 = vmatprep.mubr.f32.mxu0 0.0
    %1229 = vmatmul.mubr.f32.gmra.mxu0 %v1143
    %v1230 = vpop.f32.mrf.mxu0
    %v1231 = vadd.f32 0.0, %v1230
    %v1232 = vpop.f32.mrf.mxu0
    %1233 = vmatprep.mubr.f32.mxu0 0.0
    %1234 = vmatmul.mubr.f32.gmra.mxu0 %v1144
    %v1235 = vpop.f32.mrf.mxu0
    %v1236 = vadd.f32 0.0, %v1235
    %v1237 = vpop.f32.mrf.mxu0
    %1238 = vmatprep.mubr.f32.mxu0 0.0
    %1239 = vmatmul.mubr.f32.gmra.mxu0 %v1145
    %v1240 = vpop.f32.mrf.mxu0
    %v1241 = vadd.f32 0.0, %v1240
    %v1242 = vpop.f32.mrf.mxu0
    %1243 = vmatprep.mubr.f32.mxu0 0.0
    %1244 = vmatmul.mubr.f32.gmra.mxu0 %v1146
    %v1245 = vpop.f32.mrf.mxu0
    %v1246 = vadd.f32 0.0, %v1245
    %v1247 = vpop.f32.mrf.mxu0
    %1248 = vdwg.mxu0
    %v1249 = vadd.f32 %v1125, %v1231
    %v1250 = vadd.f32 %v1130, %v1236
    %v1251 = vadd.f32 %v1135, %v1241
    %v1252 = vadd.f32 %v1140, %v1246
    %vm1253 = vcmp.lt.s32.totalorder %v551, 12
    %vm1254 = vcmp.lt.s32.totalorder %v552, 12
    %vm1255 = vcmp.lt.s32.totalorder %v553, 12
    %vm1256 = vcmp.lt.s32.totalorder %v554, 12
    %v1257 = vsel %vm1253, %v1249, 0.0
    %v1258 = vsel %vm1254, %v1250, 0.0
    %v1259 = vsel %vm1255, %v1251, 0.0
    %v1260 = vsel %vm1256, %v1252, 0.0
    %v1261 = vadd.f32 %v1257, %v1258
    %v1262 = vadd.f32 %v1261, %v1259
    %v1263 = vadd.f32 %v1262, %v1260
    %v1264 = vrot.slane %v1263, 4
    %v1265 = vadd.f32 %v1263, %v1264
    %v1266 = vrot.slane %v1265, 2
    %v1267 = vadd.f32 %v1265, %v1266
    %v1268 = vrot.slane %v1267, 1
    %v1269 = vadd.f32 %v1267, %v1268
    %v1270 = vmul.f32 %v1257, %v1257
    %v1271 = vmul.f32 %v1258, %v1258
    %v1272 = vmul.f32 %v1259, %v1259
    %v1273 = vmul.f32 %v1260, %v1260
    %v1274 = vadd.f32 %v1270, %v1271
    %v1275 = vadd.f32 %v1274, %v1272
    %v1276 = vadd.f32 %v1275, %v1273
    %v1277 = vrot.slane %v1276, 4
    %v1278 = vadd.f32 %v1276, %v1277
    %v1279 = vrot.slane %v1278, 2
    %v1280 = vadd.f32 %v1278, %v1279
    %v1281 = vrot.slane %v1280, 1
    %v1282 = vadd.f32 %v1280, %v1281
    %v1283 = vld [vmem:[#allocation13] sm:$0xff]
    %v1284 = vld [vmem:[#allocation13 + $0x8] sm:$0xff]
    %v1285 = vld [vmem:[#allocation13 + $0x10] sm:$0xff]
    %v1286 = vld [vmem:[#allocation13 + $0x18] sm:$0xff]
    %v1287 = vld [vmem:[#allocation13 + $0x20] sm:$0xff]
    %v1288 = vld [vmem:[#allocation13 + $0x28] sm:$0xff]
    %v1289 = vld [vmem:[#allocation13 + $0x30] sm:$0xff]
    %v1290 = vld [vmem:[#allocation13 + $0x38] sm:$0xff]
    %v1291 = vld [vmem:[#allocation13 + $0x40] sm:$0xff]
    %v1292 = vld [vmem:[#allocation13 + $0x48] sm:$0xff]
    %v1293 = vld [vmem:[#allocation13 + $0x50] sm:$0xff]
    %v1294 = vld [vmem:[#allocation13 + $0x58] sm:$0xff]
    %v1295 = vld [vmem:[#allocation13 + $0x60] sm:$0xff]
    %v1296 = vld [vmem:[#allocation13 + $0x68] sm:$0xff]
    %v1297 = vld [vmem:[#allocation13 + $0x70] sm:$0xff]
    %v1298 = vld [vmem:[#allocation13 + $0x78] sm:$0xff]
    %1299 = vmatprep.subr.mxu0 0.0
    %1300 = vmatpush1.msra.mxu0 %v1298
    %1301 = vmatprep.subr.mxu0 0.0
    %1302 = vmatpush1.msra.mxu0 %v1297
    %1303 = vmatprep.subr.mxu0 0.0
    %1304 = vmatpush1.msra.mxu0 %v1296
    %1305 = vmatprep.subr.mxu0 0.0
    %1306 = vmatpush1.msra.mxu0 %v1295
    %1307 = vmatprep.subr.mxu0 0.0
    %1308 = vmatpush1.msra.mxu0 %v1294
    %1309 = vmatprep.subr.mxu0 0.0
    %1310 = vmatpush1.msra.mxu0 %v1293
    %1311 = vmatprep.subr.mxu0 0.0
    %1312 = vmatpush1.msra.mxu0 %v1292
    %1313 = vmatprep.subr.mxu0 0.0
    %1314 = vmatpush1.msra.mxu0 %v1291
    %1315 = vmatprep.subr.mxu0 0.0
    %1316 = vmatpush1.msra.mxu0 %v1290
    %1317 = vmatprep.subr.mxu0 0.0
    %1318 = vmatpush1.msra.mxu0 %v1289
    %1319 = vmatprep.subr.mxu0 0.0
    %1320 = vmatpush1.msra.mxu0 %v1288
    %1321 = vmatprep.subr.mxu0 0.0
    %1322 = vmatpush1.msra.mxu0 %v1287
    %1323 = vmatprep.subr.mxu0 0.0
    %1324 = vmatpush1.msra.mxu0 %v1286
    %1325 = vmatprep.subr.mxu0 0.0
    %1326 = vmatpush1.msra.mxu0 %v1285
    %1327 = vmatprep.subr.mxu0 0.0
    %1328 = vmatpush1.msra.mxu0 %v1284
    %1329 = vmatprep.subr.mxu0 0.0
    %1330 = vmatpush1.msra.mxu0 %v1283
    %1331 = vmatprep.subr.mxu0 0.0
    %1332 = vmatpush2.msra.mxu0 0.0
    %1333 = vmatprep.subr.mxu0 0.0
    %1334 = vmatpush2.msra.mxu0 0.0
    %1335 = vmatprep.subr.mxu0 0.0
    %1336 = vmatpush2.msra.mxu0 0.0
    %1337 = vmatprep.subr.mxu0 0.0
    %1338 = vmatpush2.msra.mxu0 0.0
    %1339 = vmatprep.subr.mxu0 0.0
    %1340 = vmatpush2.msra.mxu0 0.0
    %1341 = vmatprep.subr.mxu0 0.0
    %1342 = vmatpush2.msra.mxu0 0.0
    %1343 = vmatprep.subr.mxu0 0.0
    %1344 = vmatpush2.msra.mxu0 0.0
    %1345 = vmatprep.subr.mxu0 0.0
    %1346 = vmatpush2.msra.mxu0 0.0
    %1347 = vmatprep.subr.mxu0 0.0
    %1348 = vmatpush2.msra.mxu0 0.0
    %1349 = vmatprep.subr.mxu0 0.0
    %1350 = vmatpush2.msra.mxu0 0.0
    %1351 = vmatprep.subr.mxu0 0.0
    %1352 = vmatpush2.msra.mxu0 0.0
    %1353 = vmatprep.subr.mxu0 0.0
    %1354 = vmatpush2.msra.mxu0 0.0
    %1355 = vmatprep.subr.mxu0 0.0
    %1356 = vmatpush2.msra.mxu0 0.0
    %1357 = vmatprep.subr.mxu0 0.0
    %1358 = vmatpush2.msra.mxu0 0.0
    %1359 = vmatprep.subr.mxu0 0.0
    %1360 = vmatpush2.msra.mxu0 0.0
    %1361 = vmatprep.subr.mxu0 0.0
    %1362 = vmatpush2.msra.mxu0 0.0
    %1363 = vmatprep.mubr.f32.mxu0 0.0
    %1364 = vmatmul.mubr.f32.gmra.mxu0 %v1269
    %v1365 = vpop.f32.mrf.mxu0
    %v1366 = vadd.f32 0.0, %v1365
    %v1367 = vpop.f32.mrf.mxu0
    %1368 = vdwg.mxu0
    %1369 = vmatprep.subr.mxu0 0.0
    %1370 = vmatpush1.msra.mxu0 %v1298
    %1371 = vmatprep.subr.mxu0 0.0
    %1372 = vmatpush1.msra.mxu0 %v1297
    %1373 = vmatprep.subr.mxu0 0.0
    %1374 = vmatpush1.msra.mxu0 %v1296
    %1375 = vmatprep.subr.mxu0 0.0
    %1376 = vmatpush1.msra.mxu0 %v1295
    %1377 = vmatprep.subr.mxu0 0.0
    %1378 = vmatpush1.msra.mxu0 %v1294
    %1379 = vmatprep.subr.mxu0 0.0
    %1380 = vmatpush1.msra.mxu0 %v1293
    %1381 = vmatprep.subr.mxu0 0.0
    %1382 = vmatpush1.msra.mxu0 %v1292
    %1383 = vmatprep.subr.mxu0 0.0
    %1384 = vmatpush1.msra.mxu0 %v1291
    %1385 = vmatprep.subr.mxu0 0.0
    %1386 = vmatpush1.msra.mxu0 %v1290
    %1387 = vmatprep.subr.mxu0 0.0
    %1388 = vmatpush1.msra.mxu0 %v1289
    %1389 = vmatprep.subr.mxu0 0.0
    %1390 = vmatpush1.msra.mxu0 %v1288
    %1391 = vmatprep.subr.mxu0 0.0
    %1392 = vmatpush1.msra.mxu0 %v1287
    %1393 = vmatprep.subr.mxu0 0.0
    %1394 = vmatpush1.msra.mxu0 %v1286
    %1395 = vmatprep.subr.mxu0 0.0
    %1396 = vmatpush1.msra.mxu0 %v1285
    %1397 = vmatprep.subr.mxu0 0.0
    %1398 = vmatpush1.msra.mxu0 %v1284
    %1399 = vmatprep.subr.mxu0 0.0
    %1400 = vmatpush1.msra.mxu0 %v1283
    %1401 = vmatprep.subr.mxu0 0.0
    %1402 = vmatpush2.msra.mxu0 0.0
    %1403 = vmatprep.subr.mxu0 0.0
    %1404 = vmatpush2.msra.mxu0 0.0
    %1405 = vmatprep.subr.mxu0 0.0
    %1406 = vmatpush2.msra.mxu0 0.0
    %1407 = vmatprep.subr.mxu0 0.0
    %1408 = vmatpush2.msra.mxu0 0.0
    %1409 = vmatprep.subr.mxu0 0.0
    %1410 = vmatpush2.msra.mxu0 0.0
    %1411 = vmatprep.subr.mxu0 0.0
    %1412 = vmatpush2.msra.mxu0 0.0
    %1413 = vmatprep.subr.mxu0 0.0
    %1414 = vmatpush2.msra.mxu0 0.0
    %1415 = vmatprep.subr.mxu0 0.0
    %1416 = vmatpush2.msra.mxu0 0.0
    %1417 = vmatprep.subr.mxu0 0.0
    %1418 = vmatpush2.msra.mxu0 0.0
    %1419 = vmatprep.subr.mxu0 0.0
    %1420 = vmatpush2.msra.mxu0 0.0
    %1421 = vmatprep.subr.mxu0 0.0
    %1422 = vmatpush2.msra.mxu0 0.0
    %1423 = vmatprep.subr.mxu0 0.0
    %1424 = vmatpush2.msra.mxu0 0.0
    %1425 = vmatprep.subr.mxu0 0.0
    %1426 = vmatpush2.msra.mxu0 0.0
    %1427 = vmatprep.subr.mxu0 0.0
    %1428 = vmatpush2.msra.mxu0 0.0
    %1429 = vmatprep.subr.mxu0 0.0
    %1430 = vmatpush2.msra.mxu0 0.0
    %1431 = vmatprep.subr.mxu0 0.0
    %1432 = vmatpush2.msra.mxu0 0.0
    %1433 = vmatprep.mubr.f32.mxu0 0.0
    %1434 = vmatmul.mubr.f32.gmra.mxu0 %v1282
    %v1435 = vpop.f32.mrf.mxu0
    %v1436 = vadd.f32 0.0, %v1435
    %v1437 = vpop.f32.mrf.mxu0
    %1438 = vdwg.mxu0
    %v1439 = vmul.f32 %v1366, 0.0034722222
    %v1440 = vmul.f32 %v1436, 0.0034722222
    %v1441 = vmul.f32 %v1439, %v1439
    %v1442 = vsub.f32 %v1440, %v1441
    %v1443 = vld [vmem:[%s8] sm:$0x1]
    %v1444 = vadd.f32 %v1442, 1e-05
    %v1445 = vrsqrt.pop %v1444
    %v1446 = vmul.f32 %v1443, %v1445
    %v1447 = vld [vmem:[%s8 + $0x1] sm:$0x1]
    %v1448 = vmul.f32 %v1439, %v1446
    %v1449 = vsub.f32 %v1447, %v1448
    %v1450 = vld [vmem:[#allocation15] sm:$0xff]
    %v1451 = vld [vmem:[#allocation15 + $0x8] sm:$0xff]
    %v1452 = vld [vmem:[#allocation15 + $0x10] sm:$0xff]
    %v1453 = vld [vmem:[#allocation15 + $0x18] sm:$0xff]
    %v1454 = vld [vmem:[#allocation15 + $0x20] sm:$0xff]
    %v1455 = vld [vmem:[#allocation15 + $0x28] sm:$0xff]
    %v1456 = vld [vmem:[#allocation15 + $0x30] sm:$0xff]
    %v1457 = vld [vmem:[#allocation15 + $0x38] sm:$0xff]
    %v1458 = vld [vmem:[#allocation15 + $0x40] sm:$0xff]
    %v1459 = vld [vmem:[#allocation15 + $0x48] sm:$0xff]
    %v1460 = vld [vmem:[#allocation15 + $0x50] sm:$0xff]
    %v1461 = vld [vmem:[#allocation15 + $0x58] sm:$0xff]
    %v1462 = vld [vmem:[#allocation15 + $0x60] sm:$0xff]
    %v1463 = vld [vmem:[#allocation15 + $0x68] sm:$0xff]
    %v1464 = vld [vmem:[#allocation15 + $0x70] sm:$0xff]
    %v1465 = vld [vmem:[#allocation15 + $0x78] sm:$0xff]
    %1466 = vmatprep.subr.mxu0 0.0
    %1467 = vmatpush1.msra.mxu0 %v1465
    %1468 = vmatprep.subr.mxu0 0.0
    %1469 = vmatpush1.msra.mxu0 %v1464
    %1470 = vmatprep.subr.mxu0 0.0
    %1471 = vmatpush1.msra.mxu0 %v1463
    %1472 = vmatprep.subr.mxu0 0.0
    %1473 = vmatpush1.msra.mxu0 %v1462
    %1474 = vmatprep.subr.mxu0 0.0
    %1475 = vmatpush1.msra.mxu0 %v1461
    %1476 = vmatprep.subr.mxu0 0.0
    %1477 = vmatpush1.msra.mxu0 %v1460
    %1478 = vmatprep.subr.mxu0 0.0
    %1479 = vmatpush1.msra.mxu0 %v1459
    %1480 = vmatprep.subr.mxu0 0.0
    %1481 = vmatpush1.msra.mxu0 %v1458
    %1482 = vmatprep.subr.mxu0 0.0
    %1483 = vmatpush1.msra.mxu0 %v1457
    %1484 = vmatprep.subr.mxu0 0.0
    %1485 = vmatpush1.msra.mxu0 %v1456
    %1486 = vmatprep.subr.mxu0 0.0
    %1487 = vmatpush1.msra.mxu0 %v1455
    %1488 = vmatprep.subr.mxu0 0.0
    %1489 = vmatpush1.msra.mxu0 %v1454
    %1490 = vmatprep.subr.mxu0 0.0
    %1491 = vmatpush1.msra.mxu0 %v1453
    %1492 = vmatprep.subr.mxu0 0.0
    %1493 = vmatpush1.msra.mxu0 %v1452
    %1494 = vmatprep.subr.mxu0 0.0
    %1495 = vmatpush1.msra.mxu0 %v1451
    %1496 = vmatprep.subr.mxu0 0.0
    %1497 = vmatpush1.msra.mxu0 %v1450
    %1498 = vmatprep.subr.mxu0 0.0
    %1499 = vmatpush2.msra.mxu0 0.0
    %1500 = vmatprep.subr.mxu0 0.0
    %1501 = vmatpush2.msra.mxu0 0.0
    %1502 = vmatprep.subr.mxu0 0.0
    %1503 = vmatpush2.msra.mxu0 0.0
    %1504 = vmatprep.subr.mxu0 0.0
    %1505 = vmatpush2.msra.mxu0 0.0
    %1506 = vmatprep.subr.mxu0 0.0
    %1507 = vmatpush2.msra.mxu0 0.0
    %1508 = vmatprep.subr.mxu0 0.0
    %1509 = vmatpush2.msra.mxu0 0.0
    %1510 = vmatprep.subr.mxu0 0.0
    %1511 = vmatpush2.msra.mxu0 0.0
    %1512 = vmatprep.subr.mxu0 0.0
    %1513 = vmatpush2.msra.mxu0 0.0
    %1514 = vmatprep.subr.mxu0 0.0
    %1515 = vmatpush2.msra.mxu0 0.0
    %1516 = vmatprep.subr.mxu0 0.0
    %1517 = vmatpush2.msra.mxu0 0.0
    %1518 = vmatprep.subr.mxu0 0.0
    %1519 = vmatpush2.msra.mxu0 0.0
    %1520 = vmatprep.subr.mxu0 0.0
    %1521 = vmatpush2.msra.mxu0 0.0
    %1522 = vmatprep.subr.mxu0 0.0
    %1523 = vmatpush2.msra.mxu0 0.0
    %1524 = vmatprep.subr.mxu0 0.0
    %1525 = vmatpush2.msra.mxu0 0.0
    %1526 = vmatprep.subr.mxu0 0.0
    %1527 = vmatpush2.msra.mxu0 0.0
    %1528 = vmatprep.subr.mxu0 0.0
    %1529 = vmatpush2.msra.mxu0 0.0
    %1530 = vmatprep.mubr.f32.mxu0 0.0
    %1531 = vmatmul.mubr.f32.gmra.mxu0 %v1446
    %v1532 = vpop.f32.mrf.mxu0
    %v1533 = vadd.f32 0.0, %v1532
    %v1534 = vpop.f32.mrf.mxu0
    %1535 = vdwg.mxu0
    %1536 = vmatprep.subr.mxu0 0.0
    %1537 = vmatpush1.msra.mxu0 %v1465
    %1538 = vmatprep.subr.mxu0 0.0
    %1539 = vmatpush1.msra.mxu0 %v1464
    %1540 = vmatprep.subr.mxu0 0.0
    %1541 = vmatpush1.msra.mxu0 %v1463
    %1542 = vmatprep.subr.mxu0 0.0
    %1543 = vmatpush1.msra.mxu0 %v1462
    %1544 = vmatprep.subr.mxu0 0.0
    %1545 = vmatpush1.msra.mxu0 %v1461
    %1546 = vmatprep.subr.mxu0 0.0
    %1547 = vmatpush1.msra.mxu0 %v1460
    %1548 = vmatprep.subr.mxu0 0.0
    %1549 = vmatpush1.msra.mxu0 %v1459
    %1550 = vmatprep.subr.mxu0 0.0
    %1551 = vmatpush1.msra.mxu0 %v1458
    %1552 = vmatprep.subr.mxu0 0.0
    %1553 = vmatpush1.msra.mxu0 %v1457
    %1554 = vmatprep.subr.mxu0 0.0
    %1555 = vmatpush1.msra.mxu0 %v1456
    %1556 = vmatprep.subr.mxu0 0.0
    %1557 = vmatpush1.msra.mxu0 %v1455
    %1558 = vmatprep.subr.mxu0 0.0
    %1559 = vmatpush1.msra.mxu0 %v1454
    %1560 = vmatprep.subr.mxu0 0.0
    %1561 = vmatpush1.msra.mxu0 %v1453
    %1562 = vmatprep.subr.mxu0 0.0
    %1563 = vmatpush1.msra.mxu0 %v1452
    %1564 = vmatprep.subr.mxu0 0.0
    %1565 = vmatpush1.msra.mxu0 %v1451
    %1566 = vmatprep.subr.mxu0 0.0
    %1567 = vmatpush1.msra.mxu0 %v1450
    %1568 = vmatprep.subr.mxu0 0.0
    %1569 = vmatpush2.msra.mxu0 0.0
    %1570 = vmatprep.subr.mxu0 0.0
    %1571 = vmatpush2.msra.mxu0 0.0
    %1572 = vmatprep.subr.mxu0 0.0
    %1573 = vmatpush2.msra.mxu0 0.0
    %1574 = vmatprep.subr.mxu0 0.0
    %1575 = vmatpush2.msra.mxu0 0.0
    %1576 = vmatprep.subr.mxu0 0.0
    %1577 = vmatpush2.msra.mxu0 0.0
    %1578 = vmatprep.subr.mxu0 0.0
    %1579 = vmatpush2.msra.mxu0 0.0
    %1580 = vmatprep.subr.mxu0 0.0
    %1581 = vmatpush2.msra.mxu0 0.0
    %1582 = vmatprep.subr.mxu0 0.0
    %1583 = vmatpush2.msra.mxu0 0.0
    %1584 = vmatprep.subr.mxu0 0.0
    %1585 = vmatpush2.msra.mxu0 0.0
    %1586 = vmatprep.subr.mxu0 0.0
    %1587 = vmatpush2.msra.mxu0 0.0
    %1588 = vmatprep.subr.mxu0 0.0
    %1589 = vmatpush2.msra.mxu0 0.0
    %1590 = vmatprep.subr.mxu0 0.0
    %1591 = vmatpush2.msra.mxu0 0.0
    %1592 = vmatprep.subr.mxu0 0.0
    %1593 = vmatpush2.msra.mxu0 0.0
    %1594 = vmatprep.subr.mxu0 0.0
    %1595 = vmatpush2.msra.mxu0 0.0
    %1596 = vmatprep.subr.mxu0 0.0
    %1597 = vmatpush2.msra.mxu0 0.0
    %1598 = vmatprep.subr.mxu0 0.0
    %1599 = vmatpush2.msra.mxu0 0.0
    %1600 = vmatprep.mubr.f32.mxu0 0.0
    %1601 = vmatmul.mubr.f32.gmra.mxu0 %v1449
    %v1602 = vpop.f32.mrf.mxu0
    %v1603 = vadd.f32 0.0, %v1602
    %v1604 = vpop.f32.mrf.mxu0
    %1605 = vdwg.mxu0
    %v1606 = vlaneseq
    %v1607 = vshrl.u32 %v1606, 7
    %v1608 = vsub.s32 0, %v1607
    %v1609 = vrot.slane %v1533, %v1608
    %v1610 = vmul.f32 %v1249, %v1609
    %v1611 = vmul.f32 %v1250, %v1609
    %v1612 = vmul.f32 %v1251, %v1609
    %v1613 = vmul.f32 %v1252, %v1609
    %v1614 = vlaneseq
    %v1615 = vshrl.u32 %v1614, 7
    %v1616 = vsub.s32 0, %v1615
    %v1617 = vrot.slane %v1603, %v1616
    %v1618 = vadd.f32 %v1610, %v1617
    %v1619 = vadd.f32 %v1611, %v1617
    %v1620 = vadd.f32 %v1612, %v1617
    %v1621 = vadd.f32 %v1613, %v1617
    %v1622 = vmax.f32 %v1618, 0.0
    %v1623 = vmax.f32 %v1619, 0.0
    %v1624 = vmax.f32 %v1620, 0.0
    %v1625 = vmax.f32 %v1621, 0.0
    %1626 = vst [vmem:[#allocation3] sm:$0xff] %v1622
    %1627 = vst [vmem:[#allocation3 + $0x8] sm:$0xff] %v1623
    %1628 = vst [vmem:[#allocation3 + $0x10] sm:$0xff] %v1624
    %1629 = vst [vmem:[#allocation3 + $0x18] sm:$0xff] %v1625
    %v1630 = vld [vmem:[#allocation3] sm:$0xff]
    %v1631 = vld [vmem:[#allocation3 + $0x8] sm:$0xff]
    %v1632 = vld [vmem:[#allocation3 + $0x10] sm:$0xff]
    %v1633 = vld [vmem:[#allocation3 + $0x18] sm:$0xff]
    %v1634 = vld [vmem:[#allocation16] sm:$0xff]
    %v1635 = vld [vmem:[#allocation16 + $0x8] sm:$0xff]
    %v1636 = vld [vmem:[#allocation16 + $0x10] sm:$0xff]
    %v1637 = vld [vmem:[#allocation16 + $0x18] sm:$0xff]
    %v1638 = vld [vmem:[#allocation16 + $0x20] sm:$0xff]
    %v1639 = vld [vmem:[#allocation16 + $0x28] sm:$0xff]
    %v1640 = vld [vmem:[#allocation16 + $0x30] sm:$0xff]
    %v1641 = vld [vmem:[#allocation16 + $0x38] sm:$0xff]
    %v1642 = vld [vmem:[#allocation16 + $0x40] sm:$0xff]
    %v1643 = vld [vmem:[#allocation16 + $0x48] sm:$0xff]
    %v1644 = vld [vmem:[#allocation16 + $0x50] sm:$0xff]
    %v1645 = vld [vmem:[#allocation16 + $0x58] sm:$0xff]
    %v1646 = vld [vmem:[#allocation16 + $0x60] sm:$0xff]
    %v1647 = vld [vmem:[#allocation16 + $0x68] sm:$0xff]
    %v1648 = vld [vmem:[#allocation16 + $0x70] sm:$0xff]
    %v1649 = vld [vmem:[#allocation16 + $0x78] sm:$0xff]
    %v1650 = vld [vmem:[#allocation3 + $0x1] sm:$0xff]
    %v1651 = vld [vmem:[#allocation3 + $0x9] sm:$0xff]
    %v1652 = vld [vmem:[#allocation3 + $0x11] sm:$0xff]
    %v1653 = vld [vmem:[#allocation3 + $0x19] sm:$0xff]
    %s1654 = scalar_lea.vmem [#allocation16], 128
    %v1655 = vld [vmem:[%s1654] sm:$0xff]
    %v1656 = vld [vmem:[%s1654 + $0x8] sm:$0xff]
    %v1657 = vld [vmem:[%s1654 + $0x10] sm:$0xff]
    %v1658 = vld [vmem:[%s1654 + $0x18] sm:$0xff]
    %v1659 = vld [vmem:[%s1654 + $0x20] sm:$0xff]
    %v1660 = vld [vmem:[%s1654 + $0x28] sm:$0xff]
    %v1661 = vld [vmem:[%s1654 + $0x30] sm:$0xff]
    %v1662 = vld [vmem:[%s1654 + $0x38] sm:$0xff]
    %v1663 = vld [vmem:[%s1654 + $0x40] sm:$0xff]
    %v1664 = vld [vmem:[%s1654 + $0x48] sm:$0xff]
    %v1665 = vld [vmem:[%s1654 + $0x50] sm:$0xff]
    %v1666 = vld [vmem:[%s1654 + $0x58] sm:$0xff]
    %v1667 = vld [vmem:[%s1654 + $0x60] sm:$0xff]
    %v1668 = vld [vmem:[%s1654 + $0x68] sm:$0xff]
    %v1669 = vld [vmem:[%s1654 + $0x70] sm:$0xff]
    %v1670 = vld [vmem:[%s1654 + $0x78] sm:$0xff]
    %1671 = vmatprep.subr.mxu0 0.0
    %1672 = vmatpush1.msra.mxu0 %v1670
    %1673 = vmatprep.subr.mxu0 0.0
    %1674 = vmatpush1.msra.mxu0 %v1669
    %1675 = vmatprep.subr.mxu0 0.0
    %1676 = vmatpush1.msra.mxu0 %v1668
    %1677 = vmatprep.subr.mxu0 0.0
    %1678 = vmatpush1.msra.mxu0 %v1667
    %1679 = vmatprep.subr.mxu0 0.0
    %1680 = vmatpush1.msra.mxu0 %v1666
    %1681 = vmatprep.subr.mxu0 0.0
    %1682 = vmatpush1.msra.mxu0 %v1665
    %1683 = vmatprep.subr.mxu0 0.0
    %1684 = vmatpush1.msra.mxu0 %v1664
    %1685 = vmatprep.subr.mxu0 0.0
    %1686 = vmatpush1.msra.mxu0 %v1663
    %1687 = vmatprep.subr.mxu0 0.0
    %1688 = vmatpush1.msra.mxu0 %v1662
    %1689 = vmatprep.subr.mxu0 0.0
    %1690 = vmatpush1.msra.mxu0 %v1661
    %1691 = vmatprep.subr.mxu0 0.0
    %1692 = vmatpush1.msra.mxu0 %v1660
    %1693 = vmatprep.subr.mxu0 0.0
    %1694 = vmatpush1.msra.mxu0 %v1659
    %1695 = vmatprep.subr.mxu0 0.0
    %1696 = vmatpush1.msra.mxu0 %v1658
    %1697 = vmatprep.subr.mxu0 0.0
    %1698 = vmatpush1.msra.mxu0 %v1657
    %1699 = vmatprep.subr.mxu0 0.0
    %1700 = vmatpush1.msra.mxu0 %v1656
    %1701 = vmatprep.subr.mxu0 0.0
    %1702 = vmatpush1.msra.mxu0 %v1655
    %1703 = vmatprep.subr.mxu0 0.0
    %1704 = vmatpush2.msra.mxu0 0.0
    %1705 = vmatprep.subr.mxu0 0.0
    %1706 = vmatpush2.msra.mxu0 0.0
    %1707 = vmatprep.subr.mxu0 0.0
    %1708 = vmatpush2.msra.mxu0 0.0
    %1709 = vmatprep.subr.mxu0 0.0
    %1710 = vmatpush2.msra.mxu0 0.0
    %1711 = vmatprep.subr.mxu0 0.0
    %1712 = vmatpush2.msra.mxu0 0.0
    %1713 = vmatprep.subr.mxu0 0.0
    %1714 = vmatpush2.msra.mxu0 0.0
    %1715 = vmatprep.subr.mxu0 0.0
    %1716 = vmatpush2.msra.mxu0 0.0
    %1717 = vmatprep.subr.mxu0 0.0
    %1718 = vmatpush2.msra.mxu0 0.0
    %1719 = vmatprep.subr.mxu0 0.0
    %1720 = vmatpush2.msra.mxu0 0.0
    %1721 = vmatprep.subr.mxu0 0.0
    %1722 = vmatpush2.msra.mxu0 0.0
    %1723 = vmatprep.subr.mxu0 0.0
    %1724 = vmatpush2.msra.mxu0 0.0
    %1725 = vmatprep.subr.mxu0 0.0
    %1726 = vmatpush2.msra.mxu0 0.0
    %1727 = vmatprep.subr.mxu0 0.0
    %1728 = vmatpush2.msra.mxu0 0.0
    %1729 = vmatprep.subr.mxu0 0.0
    %1730 = vmatpush2.msra.mxu0 0.0
    %1731 = vmatprep.subr.mxu0 0.0
    %1732 = vmatpush2.msra.mxu0 0.0
    %1733 = vmatprep.subr.mxu0 0.0
    %1734 = vmatpush2.msra.mxu0 0.0
    %1735 = vmatprep.mubr.f32.mxu0 0.0
    %1736 = vmatmul.mubr.f32.gmra.mxu0 %v1650
    %v1737 = vpop.f32.mrf.mxu0
    %v1738 = vadd.f32 0.0, %v1737
    %v1739 = vpop.f32.mrf.mxu0
    %1740 = vmatprep.mubr.f32.mxu0 0.0
    %1741 = vmatmul.mubr.f32.gmra.mxu0 %v1651
    %v1742 = vpop.f32.mrf.mxu0
    %v1743 = vadd.f32 0.0, %v1742
    %v1744 = vpop.f32.mrf.mxu0
    %1745 = vmatprep.mubr.f32.mxu0 0.0
    %1746 = vmatmul.mubr.f32.gmra.mxu0 %v1652
    %v1747 = vpop.f32.mrf.mxu0
    %v1748 = vadd.f32 0.0, %v1747
    %v1749 = vpop.f32.mrf.mxu0
    %1750 = vmatprep.mubr.f32.mxu0 0.0
    %1751 = vmatmul.mubr.f32.gmra.mxu0 %v1653
    %v1752 = vpop.f32.mrf.mxu0
    %v1753 = vadd.f32 0.0, %v1752
    %v1754 = vpop.f32.mrf.mxu0
    %1755 = vdwg.mxu0
    %1756 = vmatprep.subr.mxu0 0.0
    %1757 = vmatpush1.msra.mxu0 %v1649
    %1758 = vmatprep.subr.mxu0 0.0
    %1759 = vmatpush1.msra.mxu0 %v1648
    %1760 = vmatprep.subr.mxu0 0.0
    %1761 = vmatpush1.msra.mxu0 %v1647
    %1762 = vmatprep.subr.mxu0 0.0
    %1763 = vmatpush1.msra.mxu0 %v1646
    %1764 = vmatprep.subr.mxu0 0.0
    %1765 = vmatpush1.msra.mxu0 %v1645
    %1766 = vmatprep.subr.mxu0 0.0
    %1767 = vmatpush1.msra.mxu0 %v1644
    %1768 = vmatprep.subr.mxu0 0.0
    %1769 = vmatpush1.msra.mxu0 %v1643
    %1770 = vmatprep.subr.mxu0 0.0
    %1771 = vmatpush1.msra.mxu0 %v1642
    %1772 = vmatprep.subr.mxu0 0.0
    %1773 = vmatpush1.msra.mxu0 %v1641
    %1774 = vmatprep.subr.mxu0 0.0
    %1775 = vmatpush1.msra.mxu0 %v1640
    %1776 = vmatprep.subr.mxu0 0.0
    %1777 = vmatpush1.msra.mxu0 %v1639
    %1778 = vmatprep.subr.mxu0 0.0
    %1779 = vmatpush1.msra.mxu0 %v1638
    %1780 = vmatprep.subr.mxu0 0.0
    %1781 = vmatpush1.msra.mxu0 %v1637
    %1782 = vmatprep.subr.mxu0 0.0
    %1783 = vmatpush1.msra.mxu0 %v1636
    %1784 = vmatprep.subr.mxu0 0.0
    %1785 = vmatpush1.msra.mxu0 %v1635
    %1786 = vmatprep.subr.mxu0 0.0
    %1787 = vmatpush1.msra.mxu0 %v1634
    %1788 = vmatprep.subr.mxu0 0.0
    %1789 = vmatpush2.msra.mxu0 0.0
    %1790 = vmatprep.subr.mxu0 0.0
    %1791 = vmatpush2.msra.mxu0 0.0
    %1792 = vmatprep.subr.mxu0 0.0
    %1793 = vmatpush2.msra.mxu0 0.0
    %1794 = vmatprep.subr.mxu0 0.0
    %1795 = vmatpush2.msra.mxu0 0.0
    %1796 = vmatprep.subr.mxu0 0.0
    %1797 = vmatpush2.msra.mxu0 0.0
    %1798 = vmatprep.subr.mxu0 0.0
    %1799 = vmatpush2.msra.mxu0 0.0
    %1800 = vmatprep.subr.mxu0 0.0
    %1801 = vmatpush2.msra.mxu0 0.0
    %1802 = vmatprep.subr.mxu0 0.0
    %1803 = vmatpush2.msra.mxu0 0.0
    %1804 = vmatprep.subr.mxu0 0.0
    %1805 = vmatpush2.msra.mxu0 0.0
    %1806 = vmatprep.subr.mxu0 0.0
    %1807 = vmatpush2.msra.mxu0 0.0
    %1808 = vmatprep.subr.mxu0 0.0
    %1809 = vmatpush2.msra.mxu0 0.0
    %1810 = vmatprep.subr.mxu0 0.0
    %1811 = vmatpush2.msra.mxu0 0.0
    %1812 = vmatprep.subr.mxu0 0.0
    %1813 = vmatpush2.msra.mxu0 0.0
    %1814 = vmatprep.subr.mxu0 0.0
    %1815 = vmatpush2.msra.mxu0 0.0
    %1816 = vmatprep.subr.mxu0 0.0
    %1817 = vmatpush2.msra.mxu0 0.0
    %1818 = vmatprep.subr.mxu0 0.0
    %1819 = vmatpush2.msra.mxu0 0.0
    %1820 = vmatprep.mubr.f32.mxu0 0.0
    %1821 = vmatmul.mubr.f32.gmra.mxu0 %v1630
    %v1822 = vpop.f32.mrf.mxu0
    %v1823 = vadd.f32 %v1738, %v1822
    %v1824 = vpop.f32.mrf.mxu0
    %1825 = vmatprep.mubr.f32.mxu0 0.0
    %1826 = vmatmul.mubr.f32.gmra.mxu0 %v1631
    %v1827 = vpop.f32.mrf.mxu0
    %v1828 = vadd.f32 %v1743, %v1827
    %v1829 = vpop.f32.mrf.mxu0
    %1830 = vmatprep.mubr.f32.mxu0 0.0
    %1831 = vmatmul.mubr.f32.gmra.mxu0 %v1632
    %v1832 = vpop.f32.mrf.mxu0
    %v1833 = vadd.f32 %v1748, %v1832
    %v1834 = vpop.f32.mrf.mxu0
    %1835 = vmatprep.mubr.f32.mxu0 0.0
    %1836 = vmatmul.mubr.f32.gmra.mxu0 %v1633
    %v1837 = vpop.f32.mrf.mxu0
    %v1838 = vadd.f32 %v1753, %v1837
    %v1839 = vpop.f32.mrf.mxu0
    %1840 = vdwg.mxu0
    %v1841 = vld [vmem:[#allocation3 + $0x2] sm:$0xff]
    %v1842 = vld [vmem:[#allocation3 + $0xa] sm:$0xff]
    %v1843 = vld [vmem:[#allocation3 + $0x12] sm:$0xff]
    %v1844 = vld [vmem:[#allocation3 + $0x1a] sm:$0xff]
    %s1845 = scalar_lea.vmem [#allocation16], 256
    %v1846 = vld [vmem:[%s1845] sm:$0xff]
    %v1847 = vld [vmem:[%s1845 + $0x8] sm:$0xff]
    %v1848 = vld [vmem:[%s1845 + $0x10] sm:$0xff]
    %v1849 = vld [vmem:[%s1845 + $0x18] sm:$0xff]
    %v1850 = vld [vmem:[%s1845 + $0x20] sm:$0xff]
    %v1851 = vld [vmem:[%s1845 + $0x28] sm:$0xff]
    %v1852 = vld [vmem:[%s1845 + $0x30] sm:$0xff]
    %v1853 = vld [vmem:[%s1845 + $0x38] sm:$0xff]
    %v1854 = vld [vmem:[%s1845 + $0x40] sm:$0xff]
    %v1855 = vld [vmem:[%s1845 + $0x48] sm:$0xff]
    %v1856 = vld [vmem:[%s1845 + $0x50] sm:$0xff]
    %v1857 = vld [vmem:[%s1845 + $0x58] sm:$0xff]
    %v1858 = vld [vmem:[%s1845 + $0x60] sm:$0xff]
    %v1859 = vld [vmem:[%s1845 + $0x68] sm:$0xff]
    %v1860 = vld [vmem:[%s1845 + $0x70] sm:$0xff]
    %v1861 = vld [vmem:[%s1845 + $0x78] sm:$0xff]
    %1862 = vmatprep.subr.mxu0 0.0
    %1863 = vmatpush1.msra.mxu0 %v1861
    %1864 = vmatprep.subr.mxu0 0.0
    %1865 = vmatpush1.msra.mxu0 %v1860
    %1866 = vmatprep.subr.mxu0 0.0
    %1867 = vmatpush1.msra.mxu0 %v1859
    %1868 = vmatprep.subr.mxu0 0.0
    %1869 = vmatpush1.msra.mxu0 %v1858
    %1870 = vmatprep.subr.mxu0 0.0
    %1871 = vmatpush1.msra.mxu0 %v1857
    %1872 = vmatprep.subr.mxu0 0.0
    %1873 = vmatpush1.msra.mxu0 %v1856
    %1874 = vmatprep.subr.mxu0 0.0
    %1875 = vmatpush1.msra.mxu0 %v1855
    %1876 = vmatprep.subr.mxu0 0.0
    %1877 = vmatpush1.msra.mxu0 %v1854
    %1878 = vmatprep.subr.mxu0 0.0
    %1879 = vmatpush1.msra.mxu0 %v1853
    %1880 = vmatprep.subr.mxu0 0.0
    %1881 = vmatpush1.msra.mxu0 %v1852
    %1882 = vmatprep.subr.mxu0 0.0
    %1883 = vmatpush1.msra.mxu0 %v1851
    %1884 = vmatprep.subr.mxu0 0.0
    %1885 = vmatpush1.msra.mxu0 %v1850
    %1886 = vmatprep.subr.mxu0 0.0
    %1887 = vmatpush1.msra.mxu0 %v1849
    %1888 = vmatprep.subr.mxu0 0.0
    %1889 = vmatpush1.msra.mxu0 %v1848
    %1890 = vmatprep.subr.mxu0 0.0
    %1891 = vmatpush1.msra.mxu0 %v1847
    %1892 = vmatprep.subr.mxu0 0.0
    %1893 = vmatpush1.msra.mxu0 %v1846
    %1894 = vmatprep.subr.mxu0 0.0
    %1895 = vmatpush2.msra.mxu0 0.0
    %1896 = vmatprep.subr.mxu0 0.0
    %1897 = vmatpush2.msra.mxu0 0.0
    %1898 = vmatprep.subr.mxu0 0.0
    %1899 = vmatpush2.msra.mxu0 0.0
    %1900 = vmatprep.subr.mxu0 0.0
    %1901 = vmatpush2.msra.mxu0 0.0
    %1902 = vmatprep.subr.mxu0 0.0
    %1903 = vmatpush2.msra.mxu0 0.0
    %1904 = vmatprep.subr.mxu0 0.0
    %1905 = vmatpush2.msra.mxu0 0.0
    %1906 = vmatprep.subr.mxu0 0.0
    %1907 = vmatpush2.msra.mxu0 0.0
    %1908 = vmatprep.subr.mxu0 0.0
    %1909 = vmatpush2.msra.mxu0 0.0
    %1910 = vmatprep.subr.mxu0 0.0
    %1911 = vmatpush2.msra.mxu0 0.0
    %1912 = vmatprep.subr.mxu0 0.0
    %1913 = vmatpush2.msra.mxu0 0.0
    %1914 = vmatprep.subr.mxu0 0.0
    %1915 = vmatpush2.msra.mxu0 0.0
    %1916 = vmatprep.subr.mxu0 0.0
    %1917 = vmatpush2.msra.mxu0 0.0
    %1918 = vmatprep.subr.mxu0 0.0
    %1919 = vmatpush2.msra.mxu0 0.0
    %1920 = vmatprep.subr.mxu0 0.0
    %1921 = vmatpush2.msra.mxu0 0.0
    %1922 = vmatprep.subr.mxu0 0.0
    %1923 = vmatpush2.msra.mxu0 0.0
    %1924 = vmatprep.subr.mxu0 0.0
    %1925 = vmatpush2.msra.mxu0 0.0
    %1926 = vmatprep.mubr.f32.mxu0 0.0
    %1927 = vmatmul.mubr.f32.gmra.mxu0 %v1841
    %v1928 = vpop.f32.mrf.mxu0
    %v1929 = vadd.f32 0.0, %v1928
    %v1930 = vpop.f32.mrf.mxu0
    %1931 = vmatprep.mubr.f32.mxu0 0.0
    %1932 = vmatmul.mubr.f32.gmra.mxu0 %v1842
    %v1933 = vpop.f32.mrf.mxu0
    %v1934 = vadd.f32 0.0, %v1933
    %v1935 = vpop.f32.mrf.mxu0
    %1936 = vmatprep.mubr.f32.mxu0 0.0
    %1937 = vmatmul.mubr.f32.gmra.mxu0 %v1843
    %v1938 = vpop.f32.mrf.mxu0
    %v1939 = vadd.f32 0.0, %v1938
    %v1940 = vpop.f32.mrf.mxu0
    %1941 = vmatprep.mubr.f32.mxu0 0.0
    %1942 = vmatmul.mubr.f32.gmra.mxu0 %v1844
    %v1943 = vpop.f32.mrf.mxu0
    %v1944 = vadd.f32 0.0, %v1943
    %v1945 = vpop.f32.mrf.mxu0
    %1946 = vdwg.mxu0
    %v1947 = vadd.f32 %v1823, %v1929
    %v1948 = vadd.f32 %v1828, %v1934
    %v1949 = vadd.f32 %v1833, %v1939
    %v1950 = vadd.f32 %v1838, %v1944
    %vm1951 = vcmp.lt.s32.totalorder %v551, 10
    %vm1952 = vcmp.lt.s32.totalorder %v552, 10
    %vm1953 = vcmp.lt.s32.totalorder %v553, 10
    %vm1954 = vcmp.lt.s32.totalorder %v554, 10
    %v1955 = vsel %vm1951, %v1947, 0.0
    %v1956 = vsel %vm1952, %v1948, 0.0
    %v1957 = vsel %vm1953, %v1949, 0.0
    %v1958 = vsel %vm1954, %v1950, 0.0
    %v1959 = vadd.f32 %v1955, %v1956
    %v1960 = vadd.f32 %v1959, %v1957
    %v1961 = vadd.f32 %v1960, %v1958
    %v1962 = vrot.slane %v1961, 4
    %v1963 = vadd.f32 %v1961, %v1962
    %v1964 = vrot.slane %v1963, 2
    %v1965 = vadd.f32 %v1963, %v1964
    %v1966 = vrot.slane %v1965, 1
    %v1967 = vadd.f32 %v1965, %v1966
    %v1968 = vmul.f32 %v1955, %v1955
    %v1969 = vmul.f32 %v1956, %v1956
    %v1970 = vmul.f32 %v1957, %v1957
    %v1971 = vmul.f32 %v1958, %v1958
    %v1972 = vadd.f32 %v1968, %v1969
    %v1973 = vadd.f32 %v1972, %v1970
    %v1974 = vadd.f32 %v1973, %v1971
    %v1975 = vrot.slane %v1974, 4
    %v1976 = vadd.f32 %v1974, %v1975
    %v1977 = vrot.slane %v1976, 2
    %v1978 = vadd.f32 %v1976, %v1977
    %v1979 = vrot.slane %v1978, 1
    %v1980 = vadd.f32 %v1978, %v1979
    %v1981 = vld [vmem:[#allocation18] sm:$0xff]
    %v1982 = vld [vmem:[#allocation18 + $0x8] sm:$0xff]
    %v1983 = vld [vmem:[#allocation18 + $0x10] sm:$0xff]
    %v1984 = vld [vmem:[#allocation18 + $0x18] sm:$0xff]
    %v1985 = vld [vmem:[#allocation18 + $0x20] sm:$0xff]
    %v1986 = vld [vmem:[#allocation18 + $0x28] sm:$0xff]
    %v1987 = vld [vmem:[#allocation18 + $0x30] sm:$0xff]
    %v1988 = vld [vmem:[#allocation18 + $0x38] sm:$0xff]
    %v1989 = vld [vmem:[#allocation18 + $0x40] sm:$0xff]
    %v1990 = vld [vmem:[#allocation18 + $0x48] sm:$0xff]
    %v1991 = vld [vmem:[#allocation18 + $0x50] sm:$0xff]
    %v1992 = vld [vmem:[#allocation18 + $0x58] sm:$0xff]
    %v1993 = vld [vmem:[#allocation18 + $0x60] sm:$0xff]
    %v1994 = vld [vmem:[#allocation18 + $0x68] sm:$0xff]
    %v1995 = vld [vmem:[#allocation18 + $0x70] sm:$0xff]
    %v1996 = vld [vmem:[#allocation18 + $0x78] sm:$0xff]
    %1997 = vmatprep.subr.mxu0 0.0
    %1998 = vmatpush1.msra.mxu0 %v1996
    %1999 = vmatprep.subr.mxu0 0.0
    %2000 = vmatpush1.msra.mxu0 %v1995
    %2001 = vmatprep.subr.mxu0 0.0
    %2002 = vmatpush1.msra.mxu0 %v1994
    %2003 = vmatprep.subr.mxu0 0.0
    %2004 = vmatpush1.msra.mxu0 %v1993
    %2005 = vmatprep.subr.mxu0 0.0
    %2006 = vmatpush1.msra.mxu0 %v1992
    %2007 = vmatprep.subr.mxu0 0.0
    %2008 = vmatpush1.msra.mxu0 %v1991
    %2009 = vmatprep.subr.mxu0 0.0
    %2010 = vmatpush1.msra.mxu0 %v1990
    %2011 = vmatprep.subr.mxu0 0.0
    %2012 = vmatpush1.msra.mxu0 %v1989
    %2013 = vmatprep.subr.mxu0 0.0
    %2014 = vmatpush1.msra.mxu0 %v1988
    %2015 = vmatprep.subr.mxu0 0.0
    %2016 = vmatpush1.msra.mxu0 %v1987
    %2017 = vmatprep.subr.mxu0 0.0
    %2018 = vmatpush1.msra.mxu0 %v1986
    %2019 = vmatprep.subr.mxu0 0.0
    %2020 = vmatpush1.msra.mxu0 %v1985
    %2021 = vmatprep.subr.mxu0 0.0
    %2022 = vmatpush1.msra.mxu0 %v1984
    %2023 = vmatprep.subr.mxu0 0.0
    %2024 = vmatpush1.msra.mxu0 %v1983
    %2025 = vmatprep.subr.mxu0 0.0
    %2026 = vmatpush1.msra.mxu0 %v1982
    %2027 = vmatprep.subr.mxu0 0.0
    %2028 = vmatpush1.msra.mxu0 %v1981
    %2029 = vmatprep.subr.mxu0 0.0
    %2030 = vmatpush2.msra.mxu0 0.0
    %2031 = vmatprep.subr.mxu0 0.0
    %2032 = vmatpush2.msra.mxu0 0.0
    %2033 = vmatprep.subr.mxu0 0.0
    %2034 = vmatpush2.msra.mxu0 0.0
    %2035 = vmatprep.subr.mxu0 0.0
    %2036 = vmatpush2.msra.mxu0 0.0
    %2037 = vmatprep.subr.mxu0 0.0
    %2038 = vmatpush2.msra.mxu0 0.0
    %2039 = vmatprep.subr.mxu0 0.0
    %2040 = vmatpush2.msra.mxu0 0.0
    %2041 = vmatprep.subr.mxu0 0.0
    %2042 = vmatpush2.msra.mxu0 0.0
    %2043 = vmatprep.subr.mxu0 0.0
    %2044 = vmatpush2.msra.mxu0 0.0
    %2045 = vmatprep.subr.mxu0 0.0
    %2046 = vmatpush2.msra.mxu0 0.0
    %2047 = vmatprep.subr.mxu0 0.0
    %2048 = vmatpush2.msra.mxu0 0.0
    %2049 = vmatprep.subr.mxu0 0.0
    %2050 = vmatpush2.msra.mxu0 0.0
    %2051 = vmatprep.subr.mxu0 0.0
    %2052 = vmatpush2.msra.mxu0 0.0
    %2053 = vmatprep.subr.mxu0 0.0
    %2054 = vmatpush2.msra.mxu0 0.0
    %2055 = vmatprep.subr.mxu0 0.0
    %2056 = vmatpush2.msra.mxu0 0.0
    %2057 = vmatprep.subr.mxu0 0.0
    %2058 = vmatpush2.msra.mxu0 0.0
    %2059 = vmatprep.subr.mxu0 0.0
    %2060 = vmatpush2.msra.mxu0 0.0
    %2061 = vmatprep.mubr.f32.mxu0 0.0
    %2062 = vmatmul.mubr.f32.gmra.mxu0 %v1967
    %v2063 = vpop.f32.mrf.mxu0
    %v2064 = vadd.f32 0.0, %v2063
    %v2065 = vpop.f32.mrf.mxu0
    %2066 = vdwg.mxu0
    %2067 = vmatprep.subr.mxu0 0.0
    %2068 = vmatpush1.msra.mxu0 %v1996
    %2069 = vmatprep.subr.mxu0 0.0
    %2070 = vmatpush1.msra.mxu0 %v1995
    %2071 = vmatprep.subr.mxu0 0.0
    %2072 = vmatpush1.msra.mxu0 %v1994
    %2073 = vmatprep.subr.mxu0 0.0
    %2074 = vmatpush1.msra.mxu0 %v1993
    %2075 = vmatprep.subr.mxu0 0.0
    %2076 = vmatpush1.msra.mxu0 %v1992
    %2077 = vmatprep.subr.mxu0 0.0
    %2078 = vmatpush1.msra.mxu0 %v1991
    %2079 = vmatprep.subr.mxu0 0.0
    %2080 = vmatpush1.msra.mxu0 %v1990
    %2081 = vmatprep.subr.mxu0 0.0
    %2082 = vmatpush1.msra.mxu0 %v1989
    %2083 = vmatprep.subr.mxu0 0.0
    %2084 = vmatpush1.msra.mxu0 %v1988
    %2085 = vmatprep.subr.mxu0 0.0
    %2086 = vmatpush1.msra.mxu0 %v1987
    %2087 = vmatprep.subr.mxu0 0.0
    %2088 = vmatpush1.msra.mxu0 %v1986
    %2089 = vmatprep.subr.mxu0 0.0
    %2090 = vmatpush1.msra.mxu0 %v1985
    %2091 = vmatprep.subr.mxu0 0.0
    %2092 = vmatpush1.msra.mxu0 %v1984
    %2093 = vmatprep.subr.mxu0 0.0
    %2094 = vmatpush1.msra.mxu0 %v1983
    %2095 = vmatprep.subr.mxu0 0.0
    %2096 = vmatpush1.msra.mxu0 %v1982
    %2097 = vmatprep.subr.mxu0 0.0
    %2098 = vmatpush1.msra.mxu0 %v1981
    %2099 = vmatprep.subr.mxu0 0.0
    %2100 = vmatpush2.msra.mxu0 0.0
    %2101 = vmatprep.subr.mxu0 0.0
    %2102 = vmatpush2.msra.mxu0 0.0
    %2103 = vmatprep.subr.mxu0 0.0
    %2104 = vmatpush2.msra.mxu0 0.0
    %2105 = vmatprep.subr.mxu0 0.0
    %2106 = vmatpush2.msra.mxu0 0.0
    %2107 = vmatprep.subr.mxu0 0.0
    %2108 = vmatpush2.msra.mxu0 0.0
    %2109 = vmatprep.subr.mxu0 0.0
    %2110 = vmatpush2.msra.mxu0 0.0
    %2111 = vmatprep.subr.mxu0 0.0
    %2112 = vmatpush2.msra.mxu0 0.0
    %2113 = vmatprep.subr.mxu0 0.0
    %2114 = vmatpush2.msra.mxu0 0.0
    %2115 = vmatprep.subr.mxu0 0.0
    %2116 = vmatpush2.msra.mxu0 0.0
    %2117 = vmatprep.subr.mxu0 0.0
    %2118 = vmatpush2.msra.mxu0 0.0
    %2119 = vmatprep.subr.mxu0 0.0
    %2120 = vmatpush2.msra.mxu0 0.0
    %2121 = vmatprep.subr.mxu0 0.0
    %2122 = vmatpush2.msra.mxu0 0.0
    %2123 = vmatprep.subr.mxu0 0.0
    %2124 = vmatpush2.msra.mxu0 0.0
    %2125 = vmatprep.subr.mxu0 0.0
    %2126 = vmatpush2.msra.mxu0 0.0
    %2127 = vmatprep.subr.mxu0 0.0
    %2128 = vmatpush2.msra.mxu0 0.0
    %2129 = vmatprep.subr.mxu0 0.0
    %2130 = vmatpush2.msra.mxu0 0.0
    %2131 = vmatprep.mubr.f32.mxu0 0.0
    %2132 = vmatmul.mubr.f32.gmra.mxu0 %v1980
    %v2133 = vpop.f32.mrf.mxu0
    %v2134 = vadd.f32 0.0, %v2133
    %v2135 = vpop.f32.mrf.mxu0
    %2136 = vdwg.mxu0
    %v2137 = vmul.f32 %v2064, 0.005
    %v2138 = vmul.f32 %v2134, 0.005
    %v2139 = vmul.f32 %v2137, %v2137
    %v2140 = vsub.f32 %v2138, %v2139
    %v2141 = vld [vmem:[%s12] sm:$0x1]
    %v2142 = vadd.f32 %v2140, 1e-05
    %v2143 = vrsqrt.pop %v2142
    %v2144 = vmul.f32 %v2141, %v2143
    %v2145 = vld [vmem:[%s12 + $0x1] sm:$0x1]
    %v2146 = vmul.f32 %v2137, %v2144
    %v2147 = vsub.f32 %v2145, %v2146
    %v2148 = vld [vmem:[#allocation19] sm:$0xff]
    %v2149 = vld [vmem:[#allocation19 + $0x8] sm:$0xff]
    %v2150 = vld [vmem:[#allocation19 + $0x10] sm:$0xff]
    %v2151 = vld [vmem:[#allocation19 + $0x18] sm:$0xff]
    %v2152 = vld [vmem:[#allocation19 + $0x20] sm:$0xff]
    %v2153 = vld [vmem:[#allocation19 + $0x28] sm:$0xff]
    %v2154 = vld [vmem:[#allocation19 + $0x30] sm:$0xff]
    %v2155 = vld [vmem:[#allocation19 + $0x38] sm:$0xff]
    %v2156 = vld [vmem:[#allocation19 + $0x40] sm:$0xff]
    %v2157 = vld [vmem:[#allocation19 + $0x48] sm:$0xff]
    %v2158 = vld [vmem:[#allocation19 + $0x50] sm:$0xff]
    %v2159 = vld [vmem:[#allocation19 + $0x58] sm:$0xff]
    %v2160 = vld [vmem:[#allocation19 + $0x60] sm:$0xff]
    %v2161 = vld [vmem:[#allocation19 + $0x68] sm:$0xff]
    %v2162 = vld [vmem:[#allocation19 + $0x70] sm:$0xff]
    %v2163 = vld [vmem:[#allocation19 + $0x78] sm:$0xff]
    %2164 = vmatprep.subr.mxu0 0.0
    %2165 = vmatpush1.msra.mxu0 %v2163
    %2166 = vmatprep.subr.mxu0 0.0
    %2167 = vmatpush1.msra.mxu0 %v2162
    %2168 = vmatprep.subr.mxu0 0.0
    %2169 = vmatpush1.msra.mxu0 %v2161
    %2170 = vmatprep.subr.mxu0 0.0
    %2171 = vmatpush1.msra.mxu0 %v2160
    %2172 = vmatprep.subr.mxu0 0.0
    %2173 = vmatpush1.msra.mxu0 %v2159
    %2174 = vmatprep.subr.mxu0 0.0
    %2175 = vmatpush1.msra.mxu0 %v2158
    %2176 = vmatprep.subr.mxu0 0.0
    %2177 = vmatpush1.msra.mxu0 %v2157
    %2178 = vmatprep.subr.mxu0 0.0
    %2179 = vmatpush1.msra.mxu0 %v2156
    %2180 = vmatprep.subr.mxu0 0.0
    %2181 = vmatpush1.msra.mxu0 %v2155
    %2182 = vmatprep.subr.mxu0 0.0
    %2183 = vmatpush1.msra.mxu0 %v2154
    %2184 = vmatprep.subr.mxu0 0.0
    %2185 = vmatpush1.msra.mxu0 %v2153
    %2186 = vmatprep.subr.mxu0 0.0
    %2187 = vmatpush1.msra.mxu0 %v2152
    %2188 = vmatprep.subr.mxu0 0.0
    %2189 = vmatpush1.msra.mxu0 %v2151
    %2190 = vmatprep.subr.mxu0 0.0
    %2191 = vmatpush1.msra.mxu0 %v2150
    %2192 = vmatprep.subr.mxu0 0.0
    %2193 = vmatpush1.msra.mxu0 %v2149
    %2194 = vmatprep.subr.mxu0 0.0
    %2195 = vmatpush1.msra.mxu0 %v2148
    %2196 = vmatprep.subr.mxu0 0.0
    %2197 = vmatpush2.msra.mxu0 0.0
    %2198 = vmatprep.subr.mxu0 0.0
    %2199 = vmatpush2.msra.mxu0 0.0
    %2200 = vmatprep.subr.mxu0 0.0
    %2201 = vmatpush2.msra.mxu0 0.0
    %2202 = vmatprep.subr.mxu0 0.0
    %2203 = vmatpush2.msra.mxu0 0.0
    %2204 = vmatprep.subr.mxu0 0.0
    %2205 = vmatpush2.msra.mxu0 0.0
    %2206 = vmatprep.subr.mxu0 0.0
    %2207 = vmatpush2.msra.mxu0 0.0
    %2208 = vmatprep.subr.mxu0 0.0
    %2209 = vmatpush2.msra.mxu0 0.0
    %2210 = vmatprep.subr.mxu0 0.0
    %2211 = vmatpush2.msra.mxu0 0.0
    %2212 = vmatprep.subr.mxu0 0.0
    %2213 = vmatpush2.msra.mxu0 0.0
    %2214 = vmatprep.subr.mxu0 0.0
    %2215 = vmatpush2.msra.mxu0 0.0
    %2216 = vmatprep.subr.mxu0 0.0
    %2217 = vmatpush2.msra.mxu0 0.0
    %2218 = vmatprep.subr.mxu0 0.0
    %2219 = vmatpush2.msra.mxu0 0.0
    %2220 = vmatprep.subr.mxu0 0.0
    %2221 = vmatpush2.msra.mxu0 0.0
    %2222 = vmatprep.subr.mxu0 0.0
    %2223 = vmatpush2.msra.mxu0 0.0
    %2224 = vmatprep.subr.mxu0 0.0
    %2225 = vmatpush2.msra.mxu0 0.0
    %2226 = vmatprep.subr.mxu0 0.0
    %2227 = vmatpush2.msra.mxu0 0.0
    %2228 = vmatprep.mubr.f32.mxu0 0.0
    %2229 = vmatmul.mubr.f32.gmra.mxu0 %v2144
    %v2230 = vpop.f32.mrf.mxu0
    %v2231 = vadd.f32 0.0, %v2230
    %v2232 = vpop.f32.mrf.mxu0
    %2233 = vdwg.mxu0
    %2234 = vmatprep.subr.mxu0 0.0
    %2235 = vmatpush1.msra.mxu0 %v2163
    %2236 = vmatprep.subr.mxu0 0.0
    %2237 = vmatpush1.msra.mxu0 %v2162
    %2238 = vmatprep.subr.mxu0 0.0
    %2239 = vmatpush1.msra.mxu0 %v2161
    %2240 = vmatprep.subr.mxu0 0.0
    %2241 = vmatpush1.msra.mxu0 %v2160
    %2242 = vmatprep.subr.mxu0 0.0
    %2243 = vmatpush1.msra.mxu0 %v2159
    %2244 = vmatprep.subr.mxu0 0.0
    %2245 = vmatpush1.msra.mxu0 %v2158
    %2246 = vmatprep.subr.mxu0 0.0
    %2247 = vmatpush1.msra.mxu0 %v2157
    %2248 = vmatprep.subr.mxu0 0.0
    %2249 = vmatpush1.msra.mxu0 %v2156
    %2250 = vmatprep.subr.mxu0 0.0
    %2251 = vmatpush1.msra.mxu0 %v2155
    %2252 = vmatprep.subr.mxu0 0.0
    %2253 = vmatpush1.msra.mxu0 %v2154
    %2254 = vmatprep.subr.mxu0 0.0
    %2255 = vmatpush1.msra.mxu0 %v2153
    %2256 = vmatprep.subr.mxu0 0.0
    %2257 = vmatpush1.msra.mxu0 %v2152
    %2258 = vmatprep.subr.mxu0 0.0
    %2259 = vmatpush1.msra.mxu0 %v2151
    %2260 = vmatprep.subr.mxu0 0.0
    %2261 = vmatpush1.msra.mxu0 %v2150
    %2262 = vmatprep.subr.mxu0 0.0
    %2263 = vmatpush1.msra.mxu0 %v2149
    %2264 = vmatprep.subr.mxu0 0.0
    %2265 = vmatpush1.msra.mxu0 %v2148
    %2266 = vmatprep.subr.mxu0 0.0
    %2267 = vmatpush2.msra.mxu0 0.0
    %2268 = vmatprep.subr.mxu0 0.0
    %2269 = vmatpush2.msra.mxu0 0.0
    %2270 = vmatprep.subr.mxu0 0.0
    %2271 = vmatpush2.msra.mxu0 0.0
    %2272 = vmatprep.subr.mxu0 0.0
    %2273 = vmatpush2.msra.mxu0 0.0
    %2274 = vmatprep.subr.mxu0 0.0
    %2275 = vmatpush2.msra.mxu0 0.0
    %2276 = vmatprep.subr.mxu0 0.0
    %2277 = vmatpush2.msra.mxu0 0.0
    %2278 = vmatprep.subr.mxu0 0.0
    %2279 = vmatpush2.msra.mxu0 0.0
    %2280 = vmatprep.subr.mxu0 0.0
    %2281 = vmatpush2.msra.mxu0 0.0
    %2282 = vmatprep.subr.mxu0 0.0
    %2283 = vmatpush2.msra.mxu0 0.0
    %2284 = vmatprep.subr.mxu0 0.0
    %2285 = vmatpush2.msra.mxu0 0.0
    %2286 = vmatprep.subr.mxu0 0.0
    %2287 = vmatpush2.msra.mxu0 0.0
    %2288 = vmatprep.subr.mxu0 0.0
    %2289 = vmatpush2.msra.mxu0 0.0
    %2290 = vmatprep.subr.mxu0 0.0
    %2291 = vmatpush2.msra.mxu0 0.0
    %2292 = vmatprep.subr.mxu0 0.0
    %2293 = vmatpush2.msra.mxu0 0.0
    %2294 = vmatprep.subr.mxu0 0.0
    %2295 = vmatpush2.msra.mxu0 0.0
    %2296 = vmatprep.subr.mxu0 0.0
    %2297 = vmatpush2.msra.mxu0 0.0
    %2298 = vmatprep.mubr.f32.mxu0 0.0
    %2299 = vmatmul.mubr.f32.gmra.mxu0 %v2147
    %v2300 = vpop.f32.mrf.mxu0
    %v2301 = vadd.f32 0.0, %v2300
    %v2302 = vpop.f32.mrf.mxu0
    %2303 = vdwg.mxu0
    %v2304 = vlaneseq
    %v2305 = vshrl.u32 %v2304, 7
    %v2306 = vsub.s32 0, %v2305
    %v2307 = vrot.slane %v2231, %v2306
    %v2308 = vmul.f32 %v1947, %v2307
    %v2309 = vmul.f32 %v1948, %v2307
    %v2310 = vmul.f32 %v1949, %v2307
    %v2311 = vmul.f32 %v1950, %v2307
    %v2312 = vlaneseq
    %v2313 = vshrl.u32 %v2312, 7
    %v2314 = vsub.s32 0, %v2313
    %v2315 = vrot.slane %v2301, %v2314
    %v2316 = vadd.f32 %v2308, %v2315
    %v2317 = vadd.f32 %v2309, %v2315
    %v2318 = vadd.f32 %v2310, %v2315
    %v2319 = vadd.f32 %v2311, %v2315
    %v2320 = vmax.f32 %v2316, 0.0
    %v2321 = vmax.f32 %v2317, 0.0
    %v2322 = vmax.f32 %v2318, 0.0
    %v2323 = vmax.f32 %v2319, 0.0
    %2324 = vst [vmem:[#allocation21] sm:$0xff] %v2320
    %2325 = vst [vmem:[#allocation21 + $0x8] sm:$0xff] %v2321
    %2326 = vst [vmem:[#allocation21 + $0x10] sm:$0xff] %v2322
    %2327 = vst [vmem:[#allocation21 + $0x18] sm:$0xff] %v2323
    // Predicated region
    $region94: #{tpu_custom_call.1} parent=1 // pred_check
      _
    $region95: #{tpu_custom_call.1} parent=1 // pred_check_branch
      %2329 = sbr.rel (0) target = $region97
    $region96: #{tpu_custom_call.1} parent=1 // pred_region
      %s2331 = ssub.s32 512, 512
      %2332 = vsyncadd [#allocation6], %s2331
      %s2333 = sshll.u32 [#allocation21], 4
      %s2334 = int_to_ptr.vmem [resolvable:$true] %s2333
      %2339 = dma.vmem_to_hbm [thread:$0]  %s2334, 512, %s13, [#allocation6], 128, 128, 8
    $region97: #{tpu_custom_call.1} parent=1 // pred_fallthru
      _
    // Predicated region
    $region98: #{tpu_custom_call.1} parent=1 // pred_check
      _
    $region99: #{tpu_custom_call.1} parent=1 // pred_check_branch
      %2341 = sbr.rel (0) target = $region101
    $region100: #{tpu_custom_call.1} parent=1 // pred_region
      %2342 = dma.done [#allocation6], 512
    $region101: #{tpu_custom_call.1} parent=1 // pred_fallthru
      _
    %2343 = vsyncpa [#allocation5], 1
    %2344 = vsyncpa [#allocation8], 1
    %2345 = vsyncpa [#allocation11], 1
    %2346 = vsyncpa [#allocation14], 1
    %2347 = vsyncpa [#allocation17], 1
    %2348 = vsyncpa [#allocation20], 1
    %2349 = vsyncpa [#allocation6], 1

</llo_original>
